<compile_context>
chip_gen: v6e
topology: v6e:2x2x1
jax: 0.10.0
libtpu: 0.0.40
codegen_flags: <defaults>
</compile_context>

<pallas_src>
import math
from functools import partial

import jax
import jax.numpy as jnp
from jax.experimental import pallas as pl
from jax.experimental.pallas import tpu as pltpu

EPS = 1e-6
NEG_INF = -1e9
D_FF = 2048                      # FeedForward default d_ff in the reference module
VMEM_LIMIT = 32 * 1024 * 1024    # explicit scoped-VMEM budget (toy tiles fit easily)


# ------------------------------ in-kernel helpers -----------------------------------
def _norm_f32(x, alpha, bias):
    """Torch-style Norm: unbiased std (ddof=1), EPS added to std. Exact reciprocal for parity."""
    d = x.shape[-1]
    mean = jnp.mean(x, axis=-1, keepdims=True)
    var = jnp.sum((x - mean) ** 2, axis=-1, keepdims=True) / (d - 1)
    inv = 1.0 / (jnp.sqrt(var) + EPS)
    return alpha * (x - mean) * inv + bias


def _mha_into(attn_ref, q, k, v, mask_bias, heads):
    """q: (Sq,D) f32, k/v: (Sk,D) f32, mask_bias: (Sq,Sk) f32 additive (-1e9 on masked, 0 else).

    Scale is already folded into the Q projection. Every head writes its PV result into a
    static lane slice of the VMEM scratch `attn_ref` (no concatenate, bounded live ranges).
    NOTE: additive masking matches masked_fill for any row with >=1 unmasked key; fully-masked
    rows would differ (reference degrades to uniform attention) - not exercised here.
    """
    D = q.shape[-1]
    dk = D // heads
    q_b = q.astype(jnp.bfloat16)
    k_b = k.astype(jnp.bfloat16)
    v_b = v.astype(jnp.bfloat16)
    # TODO(synk): for heads >= 8 switch this static unroll to lax.fori_loop(unroll=True), and
    # for long Sq/Sk switch to Sk-tiled online-softmax (flash-style) with m/l/acc scratch.
    for h in range(heads):                      # static loop; heads is compile-time constant
        sl = slice(h * dk, (h + 1) * dk)
        s = jax.lax.dot_general(
            q_b[:, sl], k_b[:, sl], (((1,), (1,)), ((), ())),
            preferred_element_type=jnp.float32)                     # (Sq, Sk) f32
        s = s + mask_bias
        s = s - jnp.max(s, axis=-1, keepdims=True)
        p = jnp.exp(s)
        p = p * pl.reciprocal(jnp.sum(p, axis=-1, keepdims=True), approx=True)
        # (attention-score dropout is identity in eval mode)
        attn_ref[:, sl] = jnp.dot(p.astype(jnp.bfloat16), v_b[:, sl],
                                  preferred_element_type=jnp.float32)


# ------------------------- fused kernel 1: norm + self-attention ---------------------
def _self_attn_kernel(x_ref, alpha_ref, bias_ref, mask_ref,
                      wqkv_ref, bqkv_ref, wo_ref, bo_ref, o_ref, attn_ref, *, heads):
    x = x_ref[0]                                                    # (Sq, D) f32 (residual)
    D = x.shape[-1]
    xn = _norm_f32(x, alpha_ref[...], bias_ref[...]).astype(jnp.bfloat16)
    qkv = jnp.dot(xn, wqkv_ref[...],
                  preferred_element_type=jnp.float32) + bqkv_ref[...]   # (Sq, 3D) f32
    q, k, v = qkv[:, :D], qkv[:, D:2 * D], qkv[:, 2 * D:]
    mask_bias = jnp.where(mask_ref[0].astype(jnp.float32) == 0.0, NEG_INF, 0.0)
    _mha_into(attn_ref, q, k, v, mask_bias, heads)
    out = jnp.dot(attn_ref[...].astype(jnp.bfloat16), wo_ref[...],
                  preferred_element_type=jnp.float32) + bo_ref[...]
    o_ref[0] = (x + out).astype(o_ref.dtype)                        # residual add fused


# ------------------------ fused kernel 2: norm + cross-attention ---------------------
def _cross_attn_kernel(x_ref, e_ref, alpha_ref, bias_ref, mask_ref,
                       wq_ref, bq_ref, wkv_ref, bkv_ref, wo_ref, bo_ref,
                       o_ref, attn_ref, *, heads):
    x = x_ref[0]                                                    # (Sq, D) f32 (residual)
    e = e_ref[0]                                                    # (Sk, D) f32
    D = x.shape[-1]
    xn = _norm_f32(x, alpha_ref[...], bias_ref[...]).astype(jnp.bfloat16)
    q = jnp.dot(xn, wq_ref[...],
                preferred_element_type=jnp.float32) + bq_ref[...]       # (Sq, D)
    kv = jnp.dot(e.astype(jnp.bfloat16), wkv_ref[...],
                 preferred_element_type=jnp.float32) + bkv_ref[...]     # (Sk, 2D)
    k, v = kv[:, :D], kv[:, D:]
    mask_bias = jnp.where(mask_ref[0].astype(jnp.float32) == 0.0, NEG_INF, 0.0)
    _mha_into(attn_ref, q, k, v, mask_bias, heads)
    out = jnp.dot(attn_ref[...].astype(jnp.bfloat16), wo_ref[...],
                  preferred_element_type=jnp.float32) + bo_ref[...]
    o_ref[0] = (x + out).astype(o_ref.dtype)


# ------------------- fused kernel 3: norm + FFN, d_ff-tiled accumulator --------------
def _ffn_kernel(x_ref, alpha_ref, bias_ref, w1_ref, b1_ref, w2_ref, b2_ref,
                o_ref, acc_ref, xn_ref):
    fi = pl.program_id(2)

    @pl.when(fi == 0)
    def _():
        acc_ref[...] = jnp.zeros_like(acc_ref)
        # normed input cached (bf16) across the sequential d_ff axis
        xn_ref[...] = _norm_f32(x_ref[0], alpha_ref[...], bias_ref[...]).astype(jnp.bfloat16)

    h = jnp.dot(xn_ref[...], w1_ref[...],
                preferred_element_type=jnp.float32) + b1_ref[...]       # (TQ, TFF) f32
    h = jnp.maximum(h, 0.0).astype(jnp.bfloat16)                        # f32 hidden dies here
    # TODO(synk): inter-linear dropout is stochastic; treated as identity (eval mode).
    acc_ref[...] += jnp.dot(h, w2_ref[...], preferred_element_type=jnp.float32)

    @pl.when(fi == pl.num_programs(2) - 1)
    def _():
        o_ref[0] = (x_ref[0] + acc_ref[...] + b2_ref[...]).astype(o_ref.dtype)


# ------------------------------- one-time weight prep --------------------------------
def prepare_params(params, *, heads):
    """Merge QKV/KV projections, fold 1/sqrt(dk) into Q, cast MXU operands to bf16.

    Called ONCE (outside the jitted forward) so none of this traffic recurs per call.
    """
    D = params["norm1_alpha"].shape[0]
    scale = 1.0 / math.sqrt(D // heads)
    a1, a2, ff = params["attn1"], params["attn2"], params["ff"]
    d_ff = ff["w1"].shape[1]
    return dict(
        norm1_alpha=params["norm1_alpha"].reshape(1, D),
        norm1_bias=params["norm1_bias"].reshape(1, D),
        norm2_alpha=params["norm2_alpha"].reshape(1, D),
        norm2_bias=params["norm2_bias"].reshape(1, D),
        norm3_alpha=params["norm3_alpha"].reshape(1, D),
        norm3_bias=params["norm3_bias"].reshape(1, D),
        # self-attention: merged [Wq*scale | Wk | Wv]
        wqkv=jnp.concatenate([a1["wq"] * scale, a1["wk"], a1["wv"]], axis=1).astype(jnp.bfloat16),
        bqkv=jnp.concatenate([a1["bq"] * scale, a1["bk"], a1["bv"]]).reshape(1, 3 * D),
        wo1=a1["wo"].astype(jnp.bfloat16), bo1=a1["bo"].reshape(1, D),
        # cross-attention: Q scaled, merged [Wk | Wv]
        wq2=(a2["wq"] * scale).astype(jnp.bfloat16), bq2=(a2["bq"] * scale).reshape(1, D),
        wkv2=jnp.concatenate([a2["wk"], a2["wv"]], axis=1).astype(jnp.bfloat16),
        bkv2=jnp.concatenate([a2["bk"], a2["bv"]]).reshape(1, 2 * D),
        wo2=a2["wo"].astype(jnp.bfloat16), bo2=a2["bo"].reshape(1, D),
        # FFN
        w1=ff["w1"].astype(jnp.bfloat16), b1=ff["b1"].reshape(1, d_ff),
        w2=ff["w2"].astype(jnp.bfloat16), b2=ff["b2"].reshape(1, D),
    )


def _const(shape):
    """Constant-index block (weights / biases): fetched once, single-buffered."""
    return pl.BlockSpec(shape, lambda *_: (0,) * len(shape), pipeline_mode=pl.Buffered(1))


def _pick_tile(dim, preferred, floor):
    t = preferred
    while t > floor and dim % t != 0:
        t //= 2
    return t if (dim % t == 0 and t >= floor) else dim


# ---------------------------------- DecoderLayer -------------------------------------
def decoder_layer(pp, x, e_outputs, src_mask, trg_mask, *, heads):
    """pp: output of prepare_params(). Masks may be any numeric dtype; int8 avoids re-cast."""
    B, Sq, D = x.shape
    Sk = e_outputs.shape[1]
    d_ff = pp["w1"].shape[1]

    # int8 masks: 4x less mask DMA / VMEM than f32 (no-op if already int8).
    if trg_mask.dtype != jnp.int8:
        trg_mask = (trg_mask != 0).astype(jnp.int8)
    if src_mask.dtype != jnp.int8:
        src_mask = (src_mask != 0).astype(jnp.int8)
    trg_mask = jnp.broadcast_to(trg_mask, (B, Sq, Sq))
    src_mask = jnp.broadcast_to(src_mask, (B, Sq, Sk))

    cp_attn = pltpu.CompilerParams(dimension_semantics=("parallel",),
                                   vmem_limit_bytes=VMEM_LIMIT)

    # ---- fused block 1: norm1 + self-attention + residual ----
    # TODO(synk): for long sequences, restructure as flash-style (B, q-tile, kv-tile) grid with
    # online softmax so (Sq,Sk) score matrices are never fully materialized.
    x = pl.pallas_call(
        partial(_self_attn_kernel, heads=heads),
        out_shape=jax.ShapeDtypeStruct((B, Sq, D), x.dtype),
        grid=(B,),
        in_specs=[
            pl.BlockSpec((1, Sq, D), lambda b: (b, 0, 0)),          # x (residual + norm input)
            _const((1, D)), _const((1, D)),                         # norm1 alpha / bias
            pl.BlockSpec((1, Sq, Sq), lambda b: (b, 0, 0)),         # trg mask (int8)
            _const((D, 3 * D)), _const((1, 3 * D)),                 # merged Wqkv (bf16) / bqkv
            _const((D, D)), _const((1, D)),                         # Wo (bf16) / bo
        ],
        out_specs=pl.BlockSpec((1, Sq, D), lambda b: (b, 0, 0)),
        scratch_shapes=[pltpu.VMEM((Sq, D), jnp.float32)],          # per-head attn output slab
        compiler_params=cp_attn,
    )(x, pp["norm1_alpha"], pp["norm1_bias"], trg_mask,
      pp["wqkv"], pp["bqkv"], pp["wo1"], pp["bo1"])

    # ---- fused block 2: norm2 + cross-attention + residual ----
    x = pl.pallas_call(
        partial(_cross_attn_kernel, heads=heads),
        out_shape=jax.ShapeDtypeStruct((B, Sq, D), x.dtype),
        grid=(B,),
        in_specs=[
            pl.BlockSpec((1, Sq, D), lambda b: (b, 0, 0)),          # x (residual + norm input)
            pl.BlockSpec((1, Sk, D), lambda b: (b, 0, 0)),          # e_outputs (K/V source)
            _const((1, D)), _const((1, D)),                         # norm2 alpha / bias
            pl.BlockSpec((1, Sq, Sk), lambda b: (b, 0, 0)),         # src mask (int8)
            _const((D, D)), _const((1, D)),                         # Wq (scaled, bf16) / bq
            _const((D, 2 * D)), _const((1, 2 * D)),                 # merged Wkv (bf16) / bkv
            _const((D, D)), _const((1, D)),                         # Wo (bf16) / bo
        ],
        out_specs=pl.BlockSpec((1, Sq, D), lambda b: (b, 0, 0)),
        scratch_shapes=[pltpu.VMEM((Sq, D), jnp.float32)],
        compiler_params=cp_attn,
    )(x, e_outputs, pp["norm2_alpha"], pp["norm2_bias"], src_mask,
      pp["wq2"], pp["bq2"], pp["wkv2"], pp["bkv2"], pp["wo2"], pp["bo2"])

    # ---- fused block 3: norm3 + FFN + residual, gridded over (B, Sq-tile, d_ff-tile) ----
    TQ = _pick_tile(Sq, 256, 8)       # parallel rows (kept >= 256 when divisible)
    TFF = _pick_tile(d_ff, 512, 128)  # reduction tile over the hidden dim
    cp_ffn = pltpu.CompilerParams(
        dimension_semantics=("parallel", "parallel", "arbitrary"),
        vmem_limit_bytes=VMEM_LIMIT)
    x = pl.pallas_call(
        _ffn_kernel,
        out_shape=jax.ShapeDtypeStruct((B, Sq, D), x.dtype),
        grid=(B, Sq // TQ, d_ff // TFF),
        in_specs=[
            pl.BlockSpec((1, TQ, D), lambda b, q, f: (b, q, 0)),    # x (residual + norm input)
            _const((1, D)), _const((1, D)),                         # norm3 alpha / bias
            pl.BlockSpec((D, TFF), lambda b, q, f: (0, f)),         # W1 tile (bf16)
            pl.BlockSpec((1, TFF), lambda b, q, f: (0, f)),         # b1 tile
            pl.BlockSpec((TFF, D), lambda b, q, f: (f, 0)),         # W2 tile (bf16)
            _const((1, D)),                                         # b2
        ],
        out_specs=pl.BlockSpec((1, TQ, D), lambda b, q, f: (b, q, 0)),
        scratch_shapes=[pltpu.VMEM((TQ, D), jnp.float32),           # f32 accumulator
                        pltpu.VMEM((TQ, D), jnp.bfloat16)],         # cached normed input
        compiler_params=cp_ffn,
    )(x, pp["norm3_alpha"], pp["norm3_bias"], pp["w1"], pp["b1"], pp["w2"], pp["b2"])

    # TODO(synk): intermediate activations between blocks stay f32 for reference parity;
    # emit bf16 (or fully fuse the three blocks per q-tile) to halve inter-kernel HBM traffic.
    return x


# ---------------------------------- Param init ---------------------------------------
def _init_linear(key, din, dout):
    kw, kb = jax.random.split(key)
    bound = 1.0 / math.sqrt(din)
    w = jax.random.uniform(kw, (din, dout), jnp.float32, -bound, bound)
    b = jax.random.uniform(kb, (dout,), jnp.float32, -bound, bound)
    return w, b


def _init_attn(key, d_model):
    ks = jax.random.split(key, 4)
    wq, bq = _init_linear(ks[0], d_model, d_model)
    wk, bk = _init_linear(ks[1], d_model, d_model)
    wv, bv = _init_linear(ks[2], d_model, d_model)
    wo, bo = _init_linear(ks[3], d_model, d_model)
    return dict(wq=wq, bq=bq, wk=wk, bk=bk, wv=wv, bv=bv, wo=wo, bo=bo)


def init_params(key, d_model, d_ff=D_FF):
    ks = jax.random.split(key, 4)
    w1, b1 = _init_linear(ks[0], d_model, d_ff)
    w2, b2 = _init_linear(ks[1], d_ff, d_model)
    return dict(
        norm1_alpha=jnp.ones((d_model,), jnp.float32), norm1_bias=jnp.zeros((d_model,), jnp.float32),
        norm2_alpha=jnp.ones((d_model,), jnp.float32), norm2_bias=jnp.zeros((d_model,), jnp.float32),
        norm3_alpha=jnp.ones((d_model,), jnp.float32), norm3_bias=jnp.zeros((d_model,), jnp.float32),
        attn1=_init_attn(ks[2], d_model),
        attn2=_init_attn(ks[3], d_model),
        ff=dict(w1=w1, b1=b1, w2=w2, b2=b2),
    )


if __name__ == "__main__":
    B, S_TRG, S_SRC, D_MODEL, HEADS = 2, 8, 16, 32, 4

    key = jax.random.PRNGKey(0)
    k_params, k_x, k_e = jax.random.split(key, 3)

    params = init_params(k_params, D_MODEL)
    # one-time weight prep (merge + scale-fold + bf16 cast) - outside the jitted forward
    prepped = jax.tree_util.tree_map(jnp.asarray, prepare_params(params, heads=HEADS))

    x = jax.random.normal(k_x, (B, S_TRG, D_MODEL), jnp.float32)
    e_outputs = jax.random.normal(k_e, (B, S_SRC, D_MODEL), jnp.float32)

    # causal target mask [B, S_trg, S_trg] as int8
    trg_mask = jnp.broadcast_to(
        jnp.tril(jnp.ones((S_TRG, S_TRG), jnp.int8)), (B, S_TRG, S_TRG))
    # source padding mask [B, S_trg, S_src] as int8 (second batch element has 4 padded tokens)
    src_valid = jnp.array([S_SRC, S_SRC - 4], jnp.int32)
    src_mask = (jnp.arange(S_SRC)[None, :] < src_valid[:, None]).astype(jnp.int8)
    src_mask = jnp.broadcast_to(src_mask[:, None, :], (B, S_TRG, S_SRC))

    fwd = jax.jit(partial(decoder_layer, heads=HEADS))
    out = fwd(prepped, x, e_outputs, src_mask, trg_mask)
    jax.block_until_ready(out)
    assert out.shape == (B, S_TRG, D_MODEL) and out.dtype == jnp.float32
    print("KERNEL_OK")
</pallas_src>

<mosaic_0001>
module attributes {stable_mosaic.version = 11 : i64} {
  func.func @_ffn_kernel(%arg0: i32, %arg1: i32, %arg2: i32, %arg3: memref<1x8x32xf32, #tpu.memory_space<vmem>>, %arg4: memref<1x32xf32, #tpu.memory_space<vmem>>, %arg5: memref<1x32xf32, #tpu.memory_space<vmem>>, %arg6: memref<32x512xbf16, #tpu.memory_space<vmem>>, %arg7: memref<1x512xf32, #tpu.memory_space<vmem>>, %arg8: memref<512x32xbf16, #tpu.memory_space<vmem>>, %arg9: memref<1x32xf32, #tpu.memory_space<vmem>>, %arg10: memref<1x8x32xf32, #tpu.memory_space<vmem>>, %arg11: memref<8x32xf32, #tpu.memory_space<vmem>>, %arg12: memref<8x32xbf16, #tpu.memory_space<vmem>>) attributes {dimension_semantics = [#tpu.dimension_semantics<parallel>, #tpu.dimension_semantics<parallel>, #tpu.dimension_semantics<arbitrary>], iteration_bounds = array<i64: 2, 1, 4>, scalar_prefetch = 0 : i64, scratch_operands = 2 : i64, tpu.core_type = #tpu.core_type<tc>, window_params = [{transform_indices = @transform_0, window_bounds = array<i64: 1, 8, 32>}, {pipeline_mode = #tpu.pipeline_mode<synchronous>, transform_indices = @transform_1, window_bounds = array<i64: 1, 32>}, {pipeline_mode = #tpu.pipeline_mode<synchronous>, transform_indices = @transform_2, window_bounds = array<i64: 1, 32>}, {transform_indices = @transform_3, window_bounds = array<i64: 32, 512>}, {transform_indices = @transform_4, window_bounds = array<i64: 1, 512>}, {transform_indices = @transform_5, window_bounds = array<i64: 512, 32>}, {pipeline_mode = #tpu.pipeline_mode<synchronous>, transform_indices = @transform_6, window_bounds = array<i64: 1, 32>}, {transform_indices = @transform_7, window_bounds = array<i64: 1, 8, 32>}]} {
    %c0_i32 = arith.constant 0 : i32
    %0 = arith.cmpi eq, %arg2, %c0_i32 : i32
    %1 = arith.extui %0 : i1 to i32
    %c0_i32_0 = arith.constant 0 : i32
    %2 = arith.cmpi ne, %1, %c0_i32_0 : i32
    scf.if %2 {
      %cst_15 = arith.constant 0.000000e+00 : f32
      %20 = vector.broadcast %cst_15 : f32 to vector<8x32xf32>
      %c0_16 = arith.constant 0 : index
      %c0_17 = arith.constant 0 : index
      %21 = vector.load %arg11[%c0_16, %c0_17] : memref<8x32xf32, #tpu.memory_space<vmem>>, vector<8x32xf32>
      tpu.vector_store %arg11[%c0_16, %c0_17], %20 {strides = array<i32>} : memref<8x32xf32, #tpu.memory_space<vmem>>, vector<8x32xf32>,
      %c0_18 = arith.constant 0 : index
      %c0_19 = arith.constant 0 : index
      %c0_20 = arith.constant 0 : index
      %22 = vector.load %arg3[%c0_18, %c0_19, %c0_20] : memref<1x8x32xf32, #tpu.memory_space<vmem>>, vector<1x8x32xf32>
      %23 = vector.shape_cast %22 : vector<1x8x32xf32> to vector<8x32xf32>
      %c0_21 = arith.constant 0 : index
      %c0_22 = arith.constant 0 : index
      %24 = vector.load %arg4[%c0_21, %c0_22] : memref<1x32xf32, #tpu.memory_space<vmem>>, vector<1x32xf32>
      %c0_23 = arith.constant 0 : index
      %c0_24 = arith.constant 0 : index
      %25 = vector.load %arg5[%c0_23, %c0_24] : memref<1x32xf32, #tpu.memory_space<vmem>>, vector<1x32xf32>
      %cst_25 = arith.constant dense<0.000000e+00> : vector<8xf32>
      %26 = vector.multi_reduction <add>, %23, %cst_25 [1] : vector<8x32xf32> to vector<8xf32>
      %27 = vector.shape_cast %26 : vector<8xf32> to vector<8x1xf32>
      %cst_26 = arith.constant 3.200000e+01 : f32
      %28 = vector.broadcast %cst_26 : f32 to vector<8x1xf32>
      %29 = arith.divf %27, %28 : vector<8x1xf32>
      %30 = vector.broadcast %29 : vector<8x1xf32> to vector<8x32xf32>
      %31 = arith.subf %23, %30 : vector<8x32xf32>
      %32 = arith.mulf %31, %31 : vector<8x32xf32>
      %cst_27 = arith.constant dense<0.000000e+00> : vector<8xf32>
      %33 = vector.multi_reduction <add>, %32, %cst_27 [1] : vector<8x32xf32> to vector<8xf32>
      %34 = vector.shape_cast %33 : vector<8xf32> to vector<8x1xf32>
      %cst_28 = arith.constant 3.100000e+01 : f32
      %35 = vector.broadcast %cst_28 : f32 to vector<8x1xf32>
      %36 = arith.divf %34, %35 : vector<8x1xf32>
      %37 = math.sqrt %36 : vector<8x1xf32>
      %cst_29 = arith.constant 9.99999997E-7 : f32
      %38 = vector.broadcast %cst_29 : f32 to vector<8x1xf32>
      %39 = arith.addf %37, %38 : vector<8x1xf32>
      %cst_30 = arith.constant 1.000000e+00 : f32
      %40 = vector.broadcast %cst_30 : f32 to vector<8x1xf32>
      %41 = arith.divf %40, %39 : vector<8x1xf32>
      %42 = vector.broadcast %29 : vector<8x1xf32> to vector<8x32xf32>
      %43 = arith.subf %23, %42 : vector<8x32xf32>
      %44 = vector.broadcast %24 : vector<1x32xf32> to vector<8x32xf32>
      %45 = arith.mulf %44, %43 : vector<8x32xf32>
      %46 = vector.broadcast %41 : vector<8x1xf32> to vector<8x32xf32>
      %47 = arith.mulf %45, %46 : vector<8x32xf32>
      %48 = vector.broadcast %25 : vector<1x32xf32> to vector<8x32xf32>
      %49 = arith.addf %47, %48 : vector<8x32xf32>
      %50 = arith.truncf %49 : vector<8x32xf32> to vector<8x32xbf16>
      %c0_31 = arith.constant 0 : index
      %c0_32 = arith.constant 0 : index
      %51 = vector.load %arg12[%c0_31, %c0_32] : memref<8x32xbf16, #tpu.memory_space<vmem>>, vector<8x32xbf16>
      tpu.vector_store %arg12[%c0_31, %c0_32], %50 {strides = array<i32>} : memref<8x32xbf16, #tpu.memory_space<vmem>>, vector<8x32xbf16>,
    } else {
    }
    %c0 = arith.constant 0 : index
    %c0_1 = arith.constant 0 : index
    %3 = vector.load %arg12[%c0, %c0_1] : memref<8x32xbf16, #tpu.memory_space<vmem>>, vector<8x32xbf16>
    %c0_2 = arith.constant 0 : index
    %c0_3 = arith.constant 0 : index
    %4 = vector.load %arg6[%c0_2, %c0_3] : memref<32x512xbf16, #tpu.memory_space<vmem>>, vector<32x512xbf16>
    %cst = arith.constant dense<0.000000e+00> : vector<8x512xf32>
    %5 = tpu.matmul %3, %4, %cst {dimension_numbers = #tpu.dot_dimension_numbers<[1], [0], [0], [1], [0, 0, 1, 1], [], []>} : vector<8x32xbf16>, vector<32x512xbf16>, vector<8x512xf32> -> vector<8x512xf32>
    %c0_4 = arith.constant 0 : index
    %c0_5 = arith.constant 0 : index
    %6 = vector.load %arg7[%c0_4, %c0_5] : memref<1x512xf32, #tpu.memory_space<vmem>>, vector<1x512xf32>
    %7 = vector.broadcast %6 : vector<1x512xf32> to vector<8x512xf32>
    %8 = arith.addf %5, %7 : vector<8x512xf32>
    %cst_6 = arith.constant 0.000000e+00 : f32
    %9 = vector.broadcast %cst_6 : f32 to vector<8x512xf32>
    %10 = arith.maximumf %8, %9 : vector<8x512xf32>
    %11 = arith.truncf %10 : vector<8x512xf32> to vector<8x512xbf16>
    %c0_7 = arith.constant 0 : index
    %c0_8 = arith.constant 0 : index
    %12 = vector.load %arg11[%c0_7, %c0_8] : memref<8x32xf32, #tpu.memory_space<vmem>>, vector<8x32xf32>
    %c0_9 = arith.constant 0 : index
    %c0_10 = arith.constant 0 : index
    %13 = vector.load %arg8[%c0_9, %c0_10] : memref<512x32xbf16, #tpu.memory_space<vmem>>, vector<512x32xbf16>
    %cst_11 = arith.constant dense<0.000000e+00> : vector<8x32xf32>
    %14 = tpu.matmul %11, %13, %cst_11 {dimension_numbers = #tpu.dot_dimension_numbers<[1], [0], [0], [1], [0, 0, 1, 1], [], []>} : vector<8x512xbf16>, vector<512x32xbf16>, vector<8x32xf32> -> vector<8x32xf32>
    %15 = arith.addf %12, %14 : vector<8x32xf32>
    %c0_12 = arith.constant 0 : index
    %c0_13 = arith.constant 0 : index
    %16 = vector.load %arg11[%c0_12, %c0_13] : memref<8x32xf32, #tpu.memory_space<vmem>>, vector<8x32xf32>
    tpu.vector_store %arg11[%c0_12, %c0_13], %15 {strides = array<i32>} : memref<8x32xf32, #tpu.memory_space<vmem>>, vector<8x32xf32>,
    %c3_i32 = arith.constant 3 : i32
    %17 = arith.cmpi eq, %arg2, %c3_i32 : i32
    %18 = arith.extui %17 : i1 to i32
    %c0_i32_14 = arith.constant 0 : i32
    %19 = arith.cmpi ne, %18, %c0_i32_14 : i32
    scf.if %19 {
      %c0_15 = arith.constant 0 : index
      %c0_16 = arith.constant 0 : index
      %c0_17 = arith.constant 0 : index
      %20 = vector.load %arg3[%c0_15, %c0_16, %c0_17] : memref<1x8x32xf32, #tpu.memory_space<vmem>>, vector<1x8x32xf32>
      %21 = vector.shape_cast %20 : vector<1x8x32xf32> to vector<8x32xf32>
      %c0_18 = arith.constant 0 : index
      %c0_19 = arith.constant 0 : index
      %22 = vector.load %arg11[%c0_18, %c0_19] : memref<8x32xf32, #tpu.memory_space<vmem>>, vector<8x32xf32>
      %23 = arith.addf %21, %22 : vector<8x32xf32>
      %c0_20 = arith.constant 0 : index
      %c0_21 = arith.constant 0 : index
      %24 = vector.load %arg9[%c0_20, %c0_21] : memref<1x32xf32, #tpu.memory_space<vmem>>, vector<1x32xf32>
      %25 = vector.broadcast %24 : vector<1x32xf32> to vector<8x32xf32>
      %26 = arith.addf %23, %25 : vector<8x32xf32>
      %c0_22 = arith.constant 0 : index
      %c0_23 = arith.constant 0 : index
      %c0_24 = arith.constant 0 : index
      %27 = vector.load %arg10[%c0_22, %c0_23, %c0_24] : memref<1x8x32xf32, #tpu.memory_space<vmem>>, vector<1x8x32xf32>
      %28 = vector.shape_cast %27 : vector<1x8x32xf32> to vector<8x32xf32>
      %29 = vector.shape_cast %26 : vector<8x32xf32> to vector<1x8x32xf32>
      tpu.vector_store %arg10[%c0_22, %c0_23, %c0_24], %29 {strides = array<i32>} : memref<1x8x32xf32, #tpu.memory_space<vmem>>, vector<1x8x32xf32>,
    } else {
    }
    return
  }
  func.func @transform_0(%arg0: i32, %arg1: i32, %arg2: i32) -> (i32, i32, i32) {
    %c0_i32 = arith.constant 0 : i32
    %c0_i32_0 = arith.constant 0 : i32
    return %arg0, %arg1, %c0_i32 : i32, i32, i32
  }
  func.func @transform_1(%arg0: i32, %arg1: i32, %arg2: i32) -> (i32, i32) {
    %c0_i32 = arith.constant 0 : i32
    %c0_i32_0 = arith.constant 0 : i32
    %c0_i32_1 = arith.constant 0 : i32
    return %c0_i32, %c0_i32_0 : i32, i32
  }
  func.func @transform_2(%arg0: i32, %arg1: i32, %arg2: i32) -> (i32, i32) {
    %c0_i32 = arith.constant 0 : i32
    %c0_i32_0 = arith.constant 0 : i32
    %c0_i32_1 = arith.constant 0 : i32
    return %c0_i32, %c0_i32_0 : i32, i32
  }
  func.func @transform_3(%arg0: i32, %arg1: i32, %arg2: i32) -> (i32, i32) {
    %c0_i32 = arith.constant 0 : i32
    %c0_i32_0 = arith.constant 0 : i32
    return %c0_i32, %arg2 : i32, i32
  }
  func.func @transform_4(%arg0: i32, %arg1: i32, %arg2: i32) -> (i32, i32) {
    %c0_i32 = arith.constant 0 : i32
    %c0_i32_0 = arith.constant 0 : i32
    return %c0_i32, %arg2 : i32, i32
  }
  func.func @transform_5(%arg0: i32, %arg1: i32, %arg2: i32) -> (i32, i32) {
    %c0_i32 = arith.constant 0 : i32
    %c0_i32_0 = arith.constant 0 : i32
    return %arg2, %c0_i32 : i32, i32
  }
  func.func @transform_6(%arg0: i32, %arg1: i32, %arg2: i32) -> (i32, i32) {
    %c0_i32 = arith.constant 0 : i32
    %c0_i32_0 = arith.constant 0 : i32
    %c0_i32_1 = arith.constant 0 : i32
    return %c0_i32, %c0_i32_0 : i32, i32
  }
  func.func @transform_7(%arg0: i32, %arg1: i32, %arg2: i32) -> (i32, i32, i32) {
    %c0_i32 = arith.constant 0 : i32
    %c0_i32_0 = arith.constant 0 : i32
    return %arg0, %arg1, %c0_i32 : i32, i32, i32
  }
}

module attributes {stable_mosaic.version = 11 : i64} {
  func.func @_self_attn_kernel(%arg0: i32, %arg1: memref<1x8x32xf32, #tpu.memory_space<vmem>>, %arg2: memref<1x32xf32, #tpu.memory_space<vmem>>, %arg3: memref<1x32xf32, #tpu.memory_space<vmem>>, %arg4: memref<1x8x8xi8, #tpu.memory_space<vmem>>, %arg5: memref<32x96xbf16, #tpu.memory_space<vmem>>, %arg6: memref<1x96xf32, #tpu.memory_space<vmem>>, %arg7: memref<32x32xbf16, #tpu.memory_space<vmem>>, %arg8: memref<1x32xf32, #tpu.memory_space<vmem>>, %arg9: memref<1x8x32xf32, #tpu.memory_space<vmem>>, %arg10: memref<8x32xf32, #tpu.memory_space<vmem>>) attributes {dimension_semantics = [#tpu.dimension_semantics<parallel>], iteration_bounds = array<i64: 2>, scalar_prefetch = 0 : i64, scratch_operands = 1 : i64, tpu.core_type = #tpu.core_type<tc>, window_params = [{transform_indices = @transform_0, window_bounds = array<i64: 1, 8, 32>}, {pipeline_mode = #tpu.pipeline_mode<synchronous>, transform_indices = @transform_1, window_bounds = array<i64: 1, 32>}, {pipeline_mode = #tpu.pipeline_mode<synchronous>, transform_indices = @transform_2, window_bounds = array<i64: 1, 32>}, {transform_indices = @transform_3, window_bounds = array<i64: 1, 8, 8>}, {pipeline_mode = #tpu.pipeline_mode<synchronous>, transform_indices = @transform_4, window_bounds = array<i64: 32, 96>}, {pipeline_mode = #tpu.pipeline_mode<synchronous>, transform_indices = @transform_5, window_bounds = array<i64: 1, 96>}, {pipeline_mode = #tpu.pipeline_mode<synchronous>, transform_indices = @transform_6, window_bounds = array<i64: 32, 32>}, {pipeline_mode = #tpu.pipeline_mode<synchronous>, transform_indices = @transform_7, window_bounds = array<i64: 1, 32>}, {transform_indices = @transform_8, window_bounds = array<i64: 1, 8, 32>}]} {
    %c0 = arith.constant 0 : index
    %c0_0 = arith.constant 0 : index
    %c0_1 = arith.constant 0 : index
    %0 = vector.load %arg1[%c0, %c0_0, %c0_1] : memref<1x8x32xf32, #tpu.memory_space<vmem>>, vector<1x8x32xf32>
    %1 = vector.shape_cast %0 : vector<1x8x32xf32> to vector<8x32xf32>
    %c0_2 = arith.constant 0 : index
    %c0_3 = arith.constant 0 : index
    %2 = vector.load %arg2[%c0_2, %c0_3] : memref<1x32xf32, #tpu.memory_space<vmem>>, vector<1x32xf32>
    %c0_4 = arith.constant 0 : index
    %c0_5 = arith.constant 0 : index
    %3 = vector.load %arg3[%c0_4, %c0_5] : memref<1x32xf32, #tpu.memory_space<vmem>>, vector<1x32xf32>
    %cst = arith.constant dense<0.000000e+00> : vector<8xf32>
    %4 = vector.multi_reduction <add>, %1, %cst [1] : vector<8x32xf32> to vector<8xf32>
    %5 = vector.shape_cast %4 : vector<8xf32> to vector<8x1xf32>
    %cst_6 = arith.constant 3.200000e+01 : f32
    %6 = vector.broadcast %cst_6 : f32 to vector<8x1xf32>
    %7 = arith.divf %5, %6 : vector<8x1xf32>
    %8 = vector.broadcast %7 : vector<8x1xf32> to vector<8x32xf32>
    %9 = arith.subf %1, %8 : vector<8x32xf32>
    %10 = arith.mulf %9, %9 : vector<8x32xf32>
    %cst_7 = arith.constant dense<0.000000e+00> : vector<8xf32>
    %11 = vector.multi_reduction <add>, %10, %cst_7 [1] : vector<8x32xf32> to vector<8xf32>
    %12 = vector.shape_cast %11 : vector<8xf32> to vector<8x1xf32>
    %cst_8 = arith.constant 3.100000e+01 : f32
    %13 = vector.broadcast %cst_8 : f32 to vector<8x1xf32>
    %14 = arith.divf %12, %13 : vector<8x1xf32>
    %15 = math.sqrt %14 : vector<8x1xf32>
    %cst_9 = arith.constant 9.99999997E-7 : f32
    %16 = vector.broadcast %cst_9 : f32 to vector<8x1xf32>
    %17 = arith.addf %15, %16 : vector<8x1xf32>
    %cst_10 = arith.constant 1.000000e+00 : f32
    %18 = vector.broadcast %cst_10 : f32 to vector<8x1xf32>
    %19 = arith.divf %18, %17 : vector<8x1xf32>
    %20 = vector.broadcast %7 : vector<8x1xf32> to vector<8x32xf32>
    %21 = arith.subf %1, %20 : vector<8x32xf32>
    %22 = vector.broadcast %2 : vector<1x32xf32> to vector<8x32xf32>
    %23 = arith.mulf %22, %21 : vector<8x32xf32>
    %24 = vector.broadcast %19 : vector<8x1xf32> to vector<8x32xf32>
    %25 = arith.mulf %23, %24 : vector<8x32xf32>
    %26 = vector.broadcast %3 : vector<1x32xf32> to vector<8x32xf32>
    %27 = arith.addf %25, %26 : vector<8x32xf32>
    %28 = arith.truncf %27 : vector<8x32xf32> to vector<8x32xbf16>
    %c0_11 = arith.constant 0 : index
    %c0_12 = arith.constant 0 : index
    %29 = vector.load %arg5[%c0_11, %c0_12] : memref<32x96xbf16, #tpu.memory_space<vmem>>, vector<32x96xbf16>
    %cst_13 = arith.constant dense<0.000000e+00> : vector<8x96xf32>
    %30 = tpu.matmul %28, %29, %cst_13 {dimension_numbers = #tpu.dot_dimension_numbers<[1], [0], [0], [1], [0, 0, 1, 1], [], []>} : vector<8x32xbf16>, vector<32x96xbf16>, vector<8x96xf32> -> vector<8x96xf32>
    %c0_14 = arith.constant 0 : index
    %c0_15 = arith.constant 0 : index
    %31 = vector.load %arg6[%c0_14, %c0_15] : memref<1x96xf32, #tpu.memory_space<vmem>>, vector<1x96xf32>
    %32 = vector.broadcast %31 : vector<1x96xf32> to vector<8x96xf32>
    %33 = arith.addf %30, %32 : vector<8x96xf32>
    %34 = vector.extract_strided_slice %33 {offsets = [0, 0], sizes = [8, 32], strides = [1, 1]} : vector<8x96xf32> to vector<8x32xf32>
    %35 = vector.extract_strided_slice %33 {offsets = [0, 32], sizes = [8, 32], strides = [1, 1]} : vector<8x96xf32> to vector<8x32xf32>
    %36 = vector.extract_strided_slice %33 {offsets = [0, 64], sizes = [8, 32], strides = [1, 1]} : vector<8x96xf32> to vector<8x32xf32>
    %c0_16 = arith.constant 0 : index
    %c0_17 = arith.constant 0 : index
    %c0_18 = arith.constant 0 : index
    %37 = vector.load %arg4[%c0_16, %c0_17, %c0_18] : memref<1x8x8xi8, #tpu.memory_space<vmem>>, vector<1x8x8xi8>
    %38 = vector.shape_cast %37 : vector<1x8x8xi8> to vector<8x8xi8>
    %39 = arith.sitofp %38 : vector<8x8xi8> to vector<8x8xf32>
    %cst_19 = arith.constant 0.000000e+00 : f32
    %40 = vector.broadcast %cst_19 : f32 to vector<8x8xf32>
    %41 = arith.cmpf oeq, %39, %40 : vector<8x8xf32>
    %cst_20 = arith.constant -1.000000e+09 : f32
    %cst_21 = arith.constant 0.000000e+00 : f32
    %42 = vector.broadcast %cst_20 : f32 to vector<8x8xf32>
    %43 = vector.broadcast %cst_21 : f32 to vector<8x8xf32>
    %44 = arith.select %41, %42, %43 : vector<8x8xi1>, vector<8x8xf32>
    %45 = arith.truncf %34 : vector<8x32xf32> to vector<8x32xbf16>
    %46 = arith.truncf %35 : vector<8x32xf32> to vector<8x32xbf16>
    %47 = arith.truncf %36 : vector<8x32xf32> to vector<8x32xbf16>
    %48 = vector.extract_strided_slice %45 {offsets = [0, 0], sizes = [8, 8], strides = [1, 1]} : vector<8x32xbf16> to vector<8x8xbf16>
    %49 = vector.extract_strided_slice %46 {offsets = [0, 0], sizes = [8, 8], strides = [1, 1]} : vector<8x32xbf16> to vector<8x8xbf16>
    %cst_22 = arith.constant dense<0.000000e+00> : vector<8x8xf32>
    %50 = tpu.matmul %48, %49, %cst_22 {dimension_numbers = #tpu.dot_dimension_numbers<[1], [1], [0], [0], [0, 0, 1, 0], [], []>} : vector<8x8xbf16>, vector<8x8xbf16>, vector<8x8xf32> -> vector<8x8xf32>
    %51 = arith.addf %50, %44 : vector<8x8xf32>
    %cst_23 = arith.constant dense<0xFF800000> : vector<8xf32>
    %52 = vector.multi_reduction <maximumf>, %51, %cst_23 [1] : vector<8x8xf32> to vector<8xf32>
    %53 = vector.shape_cast %52 : vector<8xf32> to vector<8x1xf32>
    %54 = vector.broadcast %53 : vector<8x1xf32> to vector<8x8xf32>
    %55 = arith.subf %51, %54 : vector<8x8xf32>
    %56 = math.exp %55 : vector<8x8xf32>
    %cst_24 = arith.constant dense<0.000000e+00> : vector<8xf32>
    %57 = vector.multi_reduction <add>, %56, %cst_24 [1] : vector<8x8xf32> to vector<8xf32>
    %58 = vector.shape_cast %57 : vector<8xf32> to vector<8x1xf32>
    %59 = tpu.reciprocal %58 {approx = true} : vector<8x1xf32> -> vector<8x1xf32>
    %60 = vector.broadcast %59 : vector<8x1xf32> to vector<8x8xf32>
    %61 = arith.mulf %56, %60 : vector<8x8xf32>
    %62 = arith.truncf %61 : vector<8x8xf32> to vector<8x8xbf16>
    %63 = vector.extract_strided_slice %47 {offsets = [0, 0], sizes = [8, 8], strides = [1, 1]} : vector<8x32xbf16> to vector<8x8xbf16>
    %cst_25 = arith.constant dense<0.000000e+00> : vector<8x8xf32>
    %64 = tpu.matmul %62, %63, %cst_25 {dimension_numbers = #tpu.dot_dimension_numbers<[1], [0], [0], [1], [0, 0, 1, 1], [], []>} : vector<8x8xbf16>, vector<8x8xbf16>, vector<8x8xf32> -> vector<8x8xf32>
    %c0_26 = arith.constant 0 : index
    %c0_27 = arith.constant 0 : index
    %65 = vector.load %arg10[%c0_26, %c0_27] : memref<8x32xf32, #tpu.memory_space<vmem>>, vector<8x8xf32>
    tpu.vector_store %arg10[%c0_26, %c0_27], %64 {strides = array<i32>} : memref<8x32xf32, #tpu.memory_space<vmem>>, vector<8x8xf32>,
    %66 = vector.extract_strided_slice %45 {offsets = [0, 8], sizes = [8, 8], strides = [1, 1]} : vector<8x32xbf16> to vector<8x8xbf16>
    %67 = vector.extract_strided_slice %46 {offsets = [0, 8], sizes = [8, 8], strides = [1, 1]} : vector<8x32xbf16> to vector<8x8xbf16>
    %cst_28 = arith.constant dense<0.000000e+00> : vector<8x8xf32>
    %68 = tpu.matmul %66, %67, %cst_28 {dimension_numbers = #tpu.dot_dimension_numbers<[1], [1], [0], [0], [0, 0, 1, 0], [], []>} : vector<8x8xbf16>, vector<8x8xbf16>, vector<8x8xf32> -> vector<8x8xf32>
    %69 = arith.addf %68, %44 : vector<8x8xf32>
    %cst_29 = arith.constant dense<0xFF800000> : vector<8xf32>
    %70 = vector.multi_reduction <maximumf>, %69, %cst_29 [1] : vector<8x8xf32> to vector<8xf32>
    %71 = vector.shape_cast %70 : vector<8xf32> to vector<8x1xf32>
    %72 = vector.broadcast %71 : vector<8x1xf32> to vector<8x8xf32>
    %73 = arith.subf %69, %72 : vector<8x8xf32>
    %74 = math.exp %73 : vector<8x8xf32>
    %cst_30 = arith.constant dense<0.000000e+00> : vector<8xf32>
    %75 = vector.multi_reduction <add>, %74, %cst_30 [1] : vector<8x8xf32> to vector<8xf32>
    %76 = vector.shape_cast %75 : vector<8xf32> to vector<8x1xf32>
    %77 = tpu.reciprocal %76 {approx = true} : vector<8x1xf32> -> vector<8x1xf32>
    %78 = vector.broadcast %77 : vector<8x1xf32> to vector<8x8xf32>
    %79 = arith.mulf %74, %78 : vector<8x8xf32>
    %80 = arith.truncf %79 : vector<8x8xf32> to vector<8x8xbf16>
    %81 = vector.extract_strided_slice %47 {offsets = [0, 8], sizes = [8, 8], strides = [1, 1]} : vector<8x32xbf16> to vector<8x8xbf16>
    %cst_31 = arith.constant dense<0.000000e+00> : vector<8x8xf32>
    %82 = tpu.matmul %80, %81, %cst_31 {dimension_numbers = #tpu.dot_dimension_numbers<[1], [0], [0], [1], [0, 0, 1, 1], [], []>} : vector<8x8xbf16>, vector<8x8xbf16>, vector<8x8xf32> -> vector<8x8xf32>
    %c0_32 = arith.constant 0 : index
    %c8 = arith.constant 8 : index
    %83 = vector.load %arg10[%c0_32, %c8] : memref<8x32xf32, #tpu.memory_space<vmem>>, vector<8x8xf32>
    tpu.vector_store %arg10[%c0_32, %c8], %82 {strides = array<i32>} : memref<8x32xf32, #tpu.memory_space<vmem>>, vector<8x8xf32>,
    %84 = vector.extract_strided_slice %45 {offsets = [0, 16], sizes = [8, 8], strides = [1, 1]} : vector<8x32xbf16> to vector<8x8xbf16>
    %85 = vector.extract_strided_slice %46 {offsets = [0, 16], sizes = [8, 8], strides = [1, 1]} : vector<8x32xbf16> to vector<8x8xbf16>
    %cst_33 = arith.constant dense<0.000000e+00> : vector<8x8xf32>
    %86 = tpu.matmul %84, %85, %cst_33 {dimension_numbers = #tpu.dot_dimension_numbers<[1], [1], [0], [0], [0, 0, 1, 0], [], []>} : vector<8x8xbf16>, vector<8x8xbf16>, vector<8x8xf32> -> vector<8x8xf32>
    %87 = arith.addf %86, %44 : vector<8x8xf32>
    %cst_34 = arith.constant dense<0xFF800000> : vector<8xf32>
    %88 = vector.multi_reduction <maximumf>, %87, %cst_34 [1] : vector<8x8xf32> to vector<8xf32>
    %89 = vector.shape_cast %88 : vector<8xf32> to vector<8x1xf32>
    %90 = vector.broadcast %89 : vector<8x1xf32> to vector<8x8xf32>
    %91 = arith.subf %87, %90 : vector<8x8xf32>
    %92 = math.exp %91 : vector<8x8xf32>
    %cst_35 = arith.constant dense<0.000000e+00> : vector<8xf32>
    %93 = vector.multi_reduction <add>, %92, %cst_35 [1] : vector<8x8xf32> to vector<8xf32>
    %94 = vector.shape_cast %93 : vector<8xf32> to vector<8x1xf32>
    %95 = tpu.reciprocal %94 {approx = true} : vector<8x1xf32> -> vector<8x1xf32>
    %96 = vector.broadcast %95 : vector<8x1xf32> to vector<8x8xf32>
    %97 = arith.mulf %92, %96 : vector<8x8xf32>
    %98 = arith.truncf %97 : vector<8x8xf32> to vector<8x8xbf16>
    %99 = vector.extract_strided_slice %47 {offsets = [0, 16], sizes = [8, 8], strides = [1, 1]} : vector<8x32xbf16> to vector<8x8xbf16>
    %cst_36 = arith.constant dense<0.000000e+00> : vector<8x8xf32>
    %100 = tpu.matmul %98, %99, %cst_36 {dimension_numbers = #tpu.dot_dimension_numbers<[1], [0], [0], [1], [0, 0, 1, 1], [], []>} : vector<8x8xbf16>, vector<8x8xbf16>, vector<8x8xf32> -> vector<8x8xf32>
    %c0_37 = arith.constant 0 : index
    %c16 = arith.constant 16 : index
    %101 = vector.load %arg10[%c0_37, %c16] : memref<8x32xf32, #tpu.memory_space<vmem>>, vector<8x8xf32>
    tpu.vector_store %arg10[%c0_37, %c16], %100 {strides = array<i32>} : memref<8x32xf32, #tpu.memory_space<vmem>>, vector<8x8xf32>,
    %102 = vector.extract_strided_slice %45 {offsets = [0, 24], sizes = [8, 8], strides = [1, 1]} : vector<8x32xbf16> to vector<8x8xbf16>
    %103 = vector.extract_strided_slice %46 {offsets = [0, 24], sizes = [8, 8], strides = [1, 1]} : vector<8x32xbf16> to vector<8x8xbf16>
    %cst_38 = arith.constant dense<0.000000e+00> : vector<8x8xf32>
    %104 = tpu.matmul %102, %103, %cst_38 {dimension_numbers = #tpu.dot_dimension_numbers<[1], [1], [0], [0], [0, 0, 1, 0], [], []>} : vector<8x8xbf16>, vector<8x8xbf16>, vector<8x8xf32> -> vector<8x8xf32>
    %105 = arith.addf %104, %44 : vector<8x8xf32>
    %cst_39 = arith.constant dense<0xFF800000> : vector<8xf32>
    %106 = vector.multi_reduction <maximumf>, %105, %cst_39 [1] : vector<8x8xf32> to vector<8xf32>
    %107 = vector.shape_cast %106 : vector<8xf32> to vector<8x1xf32>
    %108 = vector.broadcast %107 : vector<8x1xf32> to vector<8x8xf32>
    %109 = arith.subf %105, %108 : vector<8x8xf32>
    %110 = math.exp %109 : vector<8x8xf32>
    %cst_40 = arith.constant dense<0.000000e+00> : vector<8xf32>
    %111 = vector.multi_reduction <add>, %110, %cst_40 [1] : vector<8x8xf32> to vector<8xf32>
    %112 = vector.shape_cast %111 : vector<8xf32> to vector<8x1xf32>
    %113 = tpu.reciprocal %112 {approx = true} : vector<8x1xf32> -> vector<8x1xf32>
    %114 = vector.broadcast %113 : vector<8x1xf32> to vector<8x8xf32>
    %115 = arith.mulf %110, %114 : vector<8x8xf32>
    %116 = arith.truncf %115 : vector<8x8xf32> to vector<8x8xbf16>
    %117 = vector.extract_strided_slice %47 {offsets = [0, 24], sizes = [8, 8], strides = [1, 1]} : vector<8x32xbf16> to vector<8x8xbf16>
    %cst_41 = arith.constant dense<0.000000e+00> : vector<8x8xf32>
    %118 = tpu.matmul %116, %117, %cst_41 {dimension_numbers = #tpu.dot_dimension_numbers<[1], [0], [0], [1], [0, 0, 1, 1], [], []>} : vector<8x8xbf16>, vector<8x8xbf16>, vector<8x8xf32> -> vector<8x8xf32>
    %c0_42 = arith.constant 0 : index
    %c24 = arith.constant 24 : index
    %119 = vector.load %arg10[%c0_42, %c24] : memref<8x32xf32, #tpu.memory_space<vmem>>, vector<8x8xf32>
    tpu.vector_store %arg10[%c0_42, %c24], %118 {strides = array<i32>} : memref<8x32xf32, #tpu.memory_space<vmem>>, vector<8x8xf32>,
    %c0_43 = arith.constant 0 : index
    %c0_44 = arith.constant 0 : index
    %120 = vector.load %arg10[%c0_43, %c0_44] : memref<8x32xf32, #tpu.memory_space<vmem>>, vector<8x32xf32>
    %121 = arith.truncf %120 : vector<8x32xf32> to vector<8x32xbf16>
    %c0_45 = arith.constant 0 : index
    %c0_46 = arith.constant 0 : index
    %122 = vector.load %arg7[%c0_45, %c0_46] : memref<32x32xbf16, #tpu.memory_space<vmem>>, vector<32x32xbf16>
    %cst_47 = arith.constant dense<0.000000e+00> : vector<8x32xf32>
    %123 = tpu.matmul %121, %122, %cst_47 {dimension_numbers = #tpu.dot_dimension_numbers<[1], [0], [0], [1], [0, 0, 1, 1], [], []>} : vector<8x32xbf16>, vector<32x32xbf16>, vector<8x32xf32> -> vector<8x32xf32>
    %c0_48 = arith.constant 0 : index
    %c0_49 = arith.constant 0 : index
    %124 = vector.load %arg8[%c0_48, %c0_49] : memref<1x32xf32, #tpu.memory_space<vmem>>, vector<1x32xf32>
    %125 = vector.broadcast %124 : vector<1x32xf32> to vector<8x32xf32>
    %126 = arith.addf %123, %125 : vector<8x32xf32>
    %127 = arith.addf %1, %126 : vector<8x32xf32>
    %c0_50 = arith.constant 0 : index
    %c0_51 = arith.constant 0 : index
    %c0_52 = arith.constant 0 : index
    %128 = vector.load %arg9[%c0_50, %c0_51, %c0_52] : memref<1x8x32xf32, #tpu.memory_space<vmem>>, vector<1x8x32xf32>
    %129 = vector.shape_cast %128 : vector<1x8x32xf32> to vector<8x32xf32>
    %130 = vector.shape_cast %127 : vector<8x32xf32> to vector<1x8x32xf32>
    tpu.vector_store %arg9[%c0_50, %c0_51, %c0_52], %130 {strides = array<i32>} : memref<1x8x32xf32, #tpu.memory_space<vmem>>, vector<1x8x32xf32>,
    return
  }
  func.func @transform_0(%arg0: i32) -> (i32, i32, i32) {
    %c0_i32 = arith.constant 0 : i32
    %c0_i32_0 = arith.constant 0 : i32
    %c0_i32_1 = arith.constant 0 : i32
    return %arg0, %c0_i32, %c0_i32_0 : i32, i32, i32
  }
  func.func @transform_1(%arg0: i32) -> (i32, i32) {
    %c0_i32 = arith.constant 0 : i32
    %c0_i32_0 = arith.constant 0 : i32
    %c0_i32_1 = arith.constant 0 : i32
    return %c0_i32, %c0_i32_0 : i32, i32
  }
  func.func @transform_2(%arg0: i32) -> (i32, i32) {
    %c0_i32 = arith.constant 0 : i32
    %c0_i32_0 = arith.constant 0 : i32
    %c0_i32_1 = arith.constant 0 : i32
    return %c0_i32, %c0_i32_0 : i32, i32
  }
  func.func @transform_3(%arg0: i32) -> (i32, i32, i32) {
    %c0_i32 = arith.constant 0 : i32
    %c0_i32_0 = arith.constant 0 : i32
    %c0_i32_1 = arith.constant 0 : i32
    return %arg0, %c0_i32, %c0_i32_0 : i32, i32, i32
  }
  func.func @transform_4(%arg0: i32) -> (i32, i32) {
    %c0_i32 = arith.constant 0 : i32
    %c0_i32_0 = arith.constant 0 : i32
    %c0_i32_1 = arith.constant 0 : i32
    return %c0_i32, %c0_i32_0 : i32, i32
  }
  func.func @transform_5(%arg0: i32) -> (i32, i32) {
    %c0_i32 = arith.constant 0 : i32
    %c0_i32_0 = arith.constant 0 : i32
    %c0_i32_1 = arith.constant 0 : i32
    return %c0_i32, %c0_i32_0 : i32, i32
  }
  func.func @transform_6(%arg0: i32) -> (i32, i32) {
    %c0_i32 = arith.constant 0 : i32
    %c0_i32_0 = arith.constant 0 : i32
    %c0_i32_1 = arith.constant 0 : i32
    return %c0_i32, %c0_i32_0 : i32, i32
  }
  func.func @transform_7(%arg0: i32) -> (i32, i32) {
    %c0_i32 = arith.constant 0 : i32
    %c0_i32_0 = arith.constant 0 : i32
    %c0_i32_1 = arith.constant 0 : i32
    return %c0_i32, %c0_i32_0 : i32, i32
  }
  func.func @transform_8(%arg0: i32) -> (i32, i32, i32) {
    %c0_i32 = arith.constant 0 : i32
    %c0_i32_0 = arith.constant 0 : i32
    %c0_i32_1 = arith.constant 0 : i32
    return %arg0, %c0_i32, %c0_i32_0 : i32, i32, i32
  }
}

module attributes {stable_mosaic.version = 11 : i64} {
  func.func @_cross_attn_kernel(%arg0: i32, %arg1: memref<1x8x32xf32, #tpu.memory_space<vmem>>, %arg2: memref<1x16x32xf32, #tpu.memory_space<vmem>>, %arg3: memref<1x32xf32, #tpu.memory_space<vmem>>, %arg4: memref<1x32xf32, #tpu.memory_space<vmem>>, %arg5: memref<1x8x16xi8, #tpu.memory_space<vmem>>, %arg6: memref<32x32xbf16, #tpu.memory_space<vmem>>, %arg7: memref<1x32xf32, #tpu.memory_space<vmem>>, %arg8: memref<32x64xbf16, #tpu.memory_space<vmem>>, %arg9: memref<1x64xf32, #tpu.memory_space<vmem>>, %arg10: memref<32x32xbf16, #tpu.memory_space<vmem>>, %arg11: memref<1x32xf32, #tpu.memory_space<vmem>>, %arg12: memref<1x8x32xf32, #tpu.memory_space<vmem>>, %arg13: memref<8x32xf32, #tpu.memory_space<vmem>>) attributes {dimension_semantics = [#tpu.dimension_semantics<parallel>], iteration_bounds = array<i64: 2>, scalar_prefetch = 0 : i64, scratch_operands = 1 : i64, tpu.core_type = #tpu.core_type<tc>, window_params = [{transform_indices = @transform_0, window_bounds = array<i64: 1, 8, 32>}, {transform_indices = @transform_1, window_bounds = array<i64: 1, 16, 32>}, {pipeline_mode = #tpu.pipeline_mode<synchronous>, transform_indices = @transform_2, window_bounds = array<i64: 1, 32>}, {pipeline_mode = #tpu.pipeline_mode<synchronous>, transform_indices = @transform_3, window_bounds = array<i64: 1, 32>}, {transform_indices = @transform_4, window_bounds = array<i64: 1, 8, 16>}, {pipeline_mode = #tpu.pipeline_mode<synchronous>, transform_indices = @transform_5, window_bounds = array<i64: 32, 32>}, {pipeline_mode = #tpu.pipeline_mode<synchronous>, transform_indices = @transform_6, window_bounds = array<i64: 1, 32>}, {pipeline_mode = #tpu.pipeline_mode<synchronous>, transform_indices = @transform_7, window_bounds = array<i64: 32, 64>}, {pipeline_mode = #tpu.pipeline_mode<synchronous>, transform_indices = @transform_8, window_bounds = array<i64: 1, 64>}, {pipeline_mode = #tpu.pipeline_mode<synchronous>, transform_indices = @transform_9, window_bounds = array<i64: 32, 32>}, {pipeline_mode = #tpu.pipeline_mode<synchronous>, transform_indices = @transform_10, window_bounds = array<i64: 1, 32>}, {transform_indices = @transform_11, window_bounds = array<i64: 1, 8, 32>}]} {
    %c0 = arith.constant 0 : index
    %c0_0 = arith.constant 0 : index
    %c0_1 = arith.constant 0 : index
    %0 = vector.load %arg1[%c0, %c0_0, %c0_1] : memref<1x8x32xf32, #tpu.memory_space<vmem>>, vector<1x8x32xf32>
    %1 = vector.shape_cast %0 : vector<1x8x32xf32> to vector<8x32xf32>
    %c0_2 = arith.constant 0 : index
    %c0_3 = arith.constant 0 : index
    %c0_4 = arith.constant 0 : index
    %2 = vector.load %arg2[%c0_2, %c0_3, %c0_4] : memref<1x16x32xf32, #tpu.memory_space<vmem>>, vector<1x16x32xf32>
    %3 = vector.shape_cast %2 : vector<1x16x32xf32> to vector<16x32xf32>
    %c0_5 = arith.constant 0 : index
    %c0_6 = arith.constant 0 : index
    %4 = vector.load %arg3[%c0_5, %c0_6] : memref<1x32xf32, #tpu.memory_space<vmem>>, vector<1x32xf32>
    %c0_7 = arith.constant 0 : index
    %c0_8 = arith.constant 0 : index
    %5 = vector.load %arg4[%c0_7, %c0_8] : memref<1x32xf32, #tpu.memory_space<vmem>>, vector<1x32xf32>
    %cst = arith.constant dense<0.000000e+00> : vector<8xf32>
    %6 = vector.multi_reduction <add>, %1, %cst [1] : vector<8x32xf32> to vector<8xf32>
    %7 = vector.shape_cast %6 : vector<8xf32> to vector<8x1xf32>
    %cst_9 = arith.constant 3.200000e+01 : f32
    %8 = vector.broadcast %cst_9 : f32 to vector<8x1xf32>
    %9 = arith.divf %7, %8 : vector<8x1xf32>
    %10 = vector.broadcast %9 : vector<8x1xf32> to vector<8x32xf32>
    %11 = arith.subf %1, %10 : vector<8x32xf32>
    %12 = arith.mulf %11, %11 : vector<8x32xf32>
    %cst_10 = arith.constant dense<0.000000e+00> : vector<8xf32>
    %13 = vector.multi_reduction <add>, %12, %cst_10 [1] : vector<8x32xf32> to vector<8xf32>
    %14 = vector.shape_cast %13 : vector<8xf32> to vector<8x1xf32>
    %cst_11 = arith.constant 3.100000e+01 : f32
    %15 = vector.broadcast %cst_11 : f32 to vector<8x1xf32>
    %16 = arith.divf %14, %15 : vector<8x1xf32>
    %17 = math.sqrt %16 : vector<8x1xf32>
    %cst_12 = arith.constant 9.99999997E-7 : f32
    %18 = vector.broadcast %cst_12 : f32 to vector<8x1xf32>
    %19 = arith.addf %17, %18 : vector<8x1xf32>
    %cst_13 = arith.constant 1.000000e+00 : f32
    %20 = vector.broadcast %cst_13 : f32 to vector<8x1xf32>
    %21 = arith.divf %20, %19 : vector<8x1xf32>
    %22 = vector.broadcast %9 : vector<8x1xf32> to vector<8x32xf32>
    %23 = arith.subf %1, %22 : vector<8x32xf32>
    %24 = vector.broadcast %4 : vector<1x32xf32> to vector<8x32xf32>
    %25 = arith.mulf %24, %23 : vector<8x32xf32>
    %26 = vector.broadcast %21 : vector<8x1xf32> to vector<8x32xf32>
    %27 = arith.mulf %25, %26 : vector<8x32xf32>
    %28 = vector.broadcast %5 : vector<1x32xf32> to vector<8x32xf32>
    %29 = arith.addf %27, %28 : vector<8x32xf32>
    %30 = arith.truncf %29 : vector<8x32xf32> to vector<8x32xbf16>
    %c0_14 = arith.constant 0 : index
    %c0_15 = arith.constant 0 : index
    %31 = vector.load %arg6[%c0_14, %c0_15] : memref<32x32xbf16, #tpu.memory_space<vmem>>, vector<32x32xbf16>
    %cst_16 = arith.constant dense<0.000000e+00> : vector<8x32xf32>
    %32 = tpu.matmul %30, %31, %cst_16 {dimension_numbers = #tpu.dot_dimension_numbers<[1], [0], [0], [1], [0, 0, 1, 1], [], []>} : vector<8x32xbf16>, vector<32x32xbf16>, vector<8x32xf32> -> vector<8x32xf32>
    %c0_17 = arith.constant 0 : index
    %c0_18 = arith.constant 0 : index
    %33 = vector.load %arg7[%c0_17, %c0_18] : memref<1x32xf32, #tpu.memory_space<vmem>>, vector<1x32xf32>
    %34 = vector.broadcast %33 : vector<1x32xf32> to vector<8x32xf32>
    %35 = arith.addf %32, %34 : vector<8x32xf32>
    %36 = arith.truncf %3 : vector<16x32xf32> to vector<16x32xbf16>
    %c0_19 = arith.constant 0 : index
    %c0_20 = arith.constant 0 : index
    %37 = vector.load %arg8[%c0_19, %c0_20] : memref<32x64xbf16, #tpu.memory_space<vmem>>, vector<32x64xbf16>
    %cst_21 = arith.constant dense<0.000000e+00> : vector<16x64xf32>
    %38 = tpu.matmul %36, %37, %cst_21 {dimension_numbers = #tpu.dot_dimension_numbers<[1], [0], [0], [1], [0, 0, 1, 1], [], []>} : vector<16x32xbf16>, vector<32x64xbf16>, vector<16x64xf32> -> vector<16x64xf32>
    %c0_22 = arith.constant 0 : index
    %c0_23 = arith.constant 0 : index
    %39 = vector.load %arg9[%c0_22, %c0_23] : memref<1x64xf32, #tpu.memory_space<vmem>>, vector<1x64xf32>
    %40 = vector.broadcast %39 : vector<1x64xf32> to vector<16x64xf32>
    %41 = arith.addf %38, %40 : vector<16x64xf32>
    %42 = vector.extract_strided_slice %41 {offsets = [0, 0], sizes = [16, 32], strides = [1, 1]} : vector<16x64xf32> to vector<16x32xf32>
    %43 = vector.extract_strided_slice %41 {offsets = [0, 32], sizes = [16, 32], strides = [1, 1]} : vector<16x64xf32> to vector<16x32xf32>
    %c0_24 = arith.constant 0 : index
    %c0_25 = arith.constant 0 : index
    %c0_26 = arith.constant 0 : index
    %44 = vector.load %arg5[%c0_24, %c0_25, %c0_26] : memref<1x8x16xi8, #tpu.memory_space<vmem>>, vector<1x8x16xi8>
    %45 = vector.shape_cast %44 : vector<1x8x16xi8> to vector<8x16xi8>
    %46 = arith.sitofp %45 : vector<8x16xi8> to vector<8x16xf32>
    %cst_27 = arith.constant 0.000000e+00 : f32
    %47 = vector.broadcast %cst_27 : f32 to vector<8x16xf32>
    %48 = arith.cmpf oeq, %46, %47 : vector<8x16xf32>
    %cst_28 = arith.constant -1.000000e+09 : f32
    %cst_29 = arith.constant 0.000000e+00 : f32
    %49 = vector.broadcast %cst_28 : f32 to vector<8x16xf32>
    %50 = vector.broadcast %cst_29 : f32 to vector<8x16xf32>
    %51 = arith.select %48, %49, %50 : vector<8x16xi1>, vector<8x16xf32>
    %52 = arith.truncf %35 : vector<8x32xf32> to vector<8x32xbf16>
    %53 = arith.truncf %42 : vector<16x32xf32> to vector<16x32xbf16>
    %54 = arith.truncf %43 : vector<16x32xf32> to vector<16x32xbf16>
    %55 = vector.extract_strided_slice %52 {offsets = [0, 0], sizes = [8, 8], strides = [1, 1]} : vector<8x32xbf16> to vector<8x8xbf16>
    %56 = vector.extract_strided_slice %53 {offsets = [0, 0], sizes = [16, 8], strides = [1, 1]} : vector<16x32xbf16> to vector<16x8xbf16>
    %cst_30 = arith.constant dense<0.000000e+00> : vector<8x16xf32>
    %57 = tpu.matmul %55, %56, %cst_30 {dimension_numbers = #tpu.dot_dimension_numbers<[1], [1], [0], [0], [0, 0, 1, 0], [], []>} : vector<8x8xbf16>, vector<16x8xbf16>, vector<8x16xf32> -> vector<8x16xf32>
    %58 = arith.addf %57, %51 : vector<8x16xf32>
    %cst_31 = arith.constant dense<0xFF800000> : vector<8xf32>
    %59 = vector.multi_reduction <maximumf>, %58, %cst_31 [1] : vector<8x16xf32> to vector<8xf32>
    %60 = vector.shape_cast %59 : vector<8xf32> to vector<8x1xf32>
    %61 = vector.broadcast %60 : vector<8x1xf32> to vector<8x16xf32>
    %62 = arith.subf %58, %61 : vector<8x16xf32>
    %63 = math.exp %62 : vector<8x16xf32>
    %cst_32 = arith.constant dense<0.000000e+00> : vector<8xf32>
    %64 = vector.multi_reduction <add>, %63, %cst_32 [1] : vector<8x16xf32> to vector<8xf32>
    %65 = vector.shape_cast %64 : vector<8xf32> to vector<8x1xf32>
    %66 = tpu.reciprocal %65 {approx = true} : vector<8x1xf32> -> vector<8x1xf32>
    %67 = vector.broadcast %66 : vector<8x1xf32> to vector<8x16xf32>
    %68 = arith.mulf %63, %67 : vector<8x16xf32>
    %69 = arith.truncf %68 : vector<8x16xf32> to vector<8x16xbf16>
    %70 = vector.extract_strided_slice %54 {offsets = [0, 0], sizes = [16, 8], strides = [1, 1]} : vector<16x32xbf16> to vector<16x8xbf16>
    %cst_33 = arith.constant dense<0.000000e+00> : vector<8x8xf32>
    %71 = tpu.matmul %69, %70, %cst_33 {dimension_numbers = #tpu.dot_dimension_numbers<[1], [0], [0], [1], [0, 0, 1, 1], [], []>} : vector<8x16xbf16>, vector<16x8xbf16>, vector<8x8xf32> -> vector<8x8xf32>
    %c0_34 = arith.constant 0 : index
    %c0_35 = arith.constant 0 : index
    %72 = vector.load %arg13[%c0_34, %c0_35] : memref<8x32xf32, #tpu.memory_space<vmem>>, vector<8x8xf32>
    tpu.vector_store %arg13[%c0_34, %c0_35], %71 {strides = array<i32>} : memref<8x32xf32, #tpu.memory_space<vmem>>, vector<8x8xf32>,
    %73 = vector.extract_strided_slice %52 {offsets = [0, 8], sizes = [8, 8], strides = [1, 1]} : vector<8x32xbf16> to vector<8x8xbf16>
    %74 = vector.extract_strided_slice %53 {offsets = [0, 8], sizes = [16, 8], strides = [1, 1]} : vector<16x32xbf16> to vector<16x8xbf16>
    %cst_36 = arith.constant dense<0.000000e+00> : vector<8x16xf32>
    %75 = tpu.matmul %73, %74, %cst_36 {dimension_numbers = #tpu.dot_dimension_numbers<[1], [1], [0], [0], [0, 0, 1, 0], [], []>} : vector<8x8xbf16>, vector<16x8xbf16>, vector<8x16xf32> -> vector<8x16xf32>
    %76 = arith.addf %75, %51 : vector<8x16xf32>
    %cst_37 = arith.constant dense<0xFF800000> : vector<8xf32>
    %77 = vector.multi_reduction <maximumf>, %76, %cst_37 [1] : vector<8x16xf32> to vector<8xf32>
    %78 = vector.shape_cast %77 : vector<8xf32> to vector<8x1xf32>
    %79 = vector.broadcast %78 : vector<8x1xf32> to vector<8x16xf32>
    %80 = arith.subf %76, %79 : vector<8x16xf32>
    %81 = math.exp %80 : vector<8x16xf32>
    %cst_38 = arith.constant dense<0.000000e+00> : vector<8xf32>
    %82 = vector.multi_reduction <add>, %81, %cst_38 [1] : vector<8x16xf32> to vector<8xf32>
    %83 = vector.shape_cast %82 : vector<8xf32> to vector<8x1xf32>
    %84 = tpu.reciprocal %83 {approx = true} : vector<8x1xf32> -> vector<8x1xf32>
    %85 = vector.broadcast %84 : vector<8x1xf32> to vector<8x16xf32>
    %86 = arith.mulf %81, %85 : vector<8x16xf32>
    %87 = arith.truncf %86 : vector<8x16xf32> to vector<8x16xbf16>
    %88 = vector.extract_strided_slice %54 {offsets = [0, 8], sizes = [16, 8], strides = [1, 1]} : vector<16x32xbf16> to vector<16x8xbf16>
    %cst_39 = arith.constant dense<0.000000e+00> : vector<8x8xf32>
    %89 = tpu.matmul %87, %88, %cst_39 {dimension_numbers = #tpu.dot_dimension_numbers<[1], [0], [0], [1], [0, 0, 1, 1], [], []>} : vector<8x16xbf16>, vector<16x8xbf16>, vector<8x8xf32> -> vector<8x8xf32>
    %c0_40 = arith.constant 0 : index
    %c8 = arith.constant 8 : index
    %90 = vector.load %arg13[%c0_40, %c8] : memref<8x32xf32, #tpu.memory_space<vmem>>, vector<8x8xf32>
    tpu.vector_store %arg13[%c0_40, %c8], %89 {strides = array<i32>} : memref<8x32xf32, #tpu.memory_space<vmem>>, vector<8x8xf32>,
    %91 = vector.extract_strided_slice %52 {offsets = [0, 16], sizes = [8, 8], strides = [1, 1]} : vector<8x32xbf16> to vector<8x8xbf16>
    %92 = vector.extract_strided_slice %53 {offsets = [0, 16], sizes = [16, 8], strides = [1, 1]} : vector<16x32xbf16> to vector<16x8xbf16>
    %cst_41 = arith.constant dense<0.000000e+00> : vector<8x16xf32>
    %93 = tpu.matmul %91, %92, %cst_41 {dimension_numbers = #tpu.dot_dimension_numbers<[1], [1], [0], [0], [0, 0, 1, 0], [], []>} : vector<8x8xbf16>, vector<16x8xbf16>, vector<8x16xf32> -> vector<8x16xf32>
    %94 = arith.addf %93, %51 : vector<8x16xf32>
    %cst_42 = arith.constant dense<0xFF800000> : vector<8xf32>
    %95 = vector.multi_reduction <maximumf>, %94, %cst_42 [1] : vector<8x16xf32> to vector<8xf32>
    %96 = vector.shape_cast %95 : vector<8xf32> to vector<8x1xf32>
    %97 = vector.broadcast %96 : vector<8x1xf32> to vector<8x16xf32>
    %98 = arith.subf %94, %97 : vector<8x16xf32>
    %99 = math.exp %98 : vector<8x16xf32>
    %cst_43 = arith.constant dense<0.000000e+00> : vector<8xf32>
    %100 = vector.multi_reduction <add>, %99, %cst_43 [1] : vector<8x16xf32> to vector<8xf32>
    %101 = vector.shape_cast %100 : vector<8xf32> to vector<8x1xf32>
    %102 = tpu.reciprocal %101 {approx = true} : vector<8x1xf32> -> vector<8x1xf32>
    %103 = vector.broadcast %102 : vector<8x1xf32> to vector<8x16xf32>
    %104 = arith.mulf %99, %103 : vector<8x16xf32>
    %105 = arith.truncf %104 : vector<8x16xf32> to vector<8x16xbf16>
    %106 = vector.extract_strided_slice %54 {offsets = [0, 16], sizes = [16, 8], strides = [1, 1]} : vector<16x32xbf16> to vector<16x8xbf16>
    %cst_44 = arith.constant dense<0.000000e+00> : vector<8x8xf32>
    %107 = tpu.matmul %105, %106, %cst_44 {dimension_numbers = #tpu.dot_dimension_numbers<[1], [0], [0], [1], [0, 0, 1, 1], [], []>} : vector<8x16xbf16>, vector<16x8xbf16>, vector<8x8xf32> -> vector<8x8xf32>
    %c0_45 = arith.constant 0 : index
    %c16 = arith.constant 16 : index
    %108 = vector.load %arg13[%c0_45, %c16] : memref<8x32xf32, #tpu.memory_space<vmem>>, vector<8x8xf32>
    tpu.vector_store %arg13[%c0_45, %c16], %107 {strides = array<i32>} : memref<8x32xf32, #tpu.memory_space<vmem>>, vector<8x8xf32>,
    %109 = vector.extract_strided_slice %52 {offsets = [0, 24], sizes = [8, 8], strides = [1, 1]} : vector<8x32xbf16> to vector<8x8xbf16>
    %110 = vector.extract_strided_slice %53 {offsets = [0, 24], sizes = [16, 8], strides = [1, 1]} : vector<16x32xbf16> to vector<16x8xbf16>
    %cst_46 = arith.constant dense<0.000000e+00> : vector<8x16xf32>
    %111 = tpu.matmul %109, %110, %cst_46 {dimension_numbers = #tpu.dot_dimension_numbers<[1], [1], [0], [0], [0, 0, 1, 0], [], []>} : vector<8x8xbf16>, vector<16x8xbf16>, vector<8x16xf32> -> vector<8x16xf32>
    %112 = arith.addf %111, %51 : vector<8x16xf32>
    %cst_47 = arith.constant dense<0xFF800000> : vector<8xf32>
    %113 = vector.multi_reduction <maximumf>, %112, %cst_47 [1] : vector<8x16xf32> to vector<8xf32>
    %114 = vector.shape_cast %113 : vector<8xf32> to vector<8x1xf32>
    %115 = vector.broadcast %114 : vector<8x1xf32> to vector<8x16xf32>
    %116 = arith.subf %112, %115 : vector<8x16xf32>
    %117 = math.exp %116 : vector<8x16xf32>
    %cst_48 = arith.constant dense<0.000000e+00> : vector<8xf32>
    %118 = vector.multi_reduction <add>, %117, %cst_48 [1] : vector<8x16xf32> to vector<8xf32>
    %119 = vector.shape_cast %118 : vector<8xf32> to vector<8x1xf32>
    %120 = tpu.reciprocal %119 {approx = true} : vector<8x1xf32> -> vector<8x1xf32>
    %121 = vector.broadcast %120 : vector<8x1xf32> to vector<8x16xf32>
    %122 = arith.mulf %117, %121 : vector<8x16xf32>
    %123 = arith.truncf %122 : vector<8x16xf32> to vector<8x16xbf16>
    %124 = vector.extract_strided_slice %54 {offsets = [0, 24], sizes = [16, 8], strides = [1, 1]} : vector<16x32xbf16> to vector<16x8xbf16>
    %cst_49 = arith.constant dense<0.000000e+00> : vector<8x8xf32>
    %125 = tpu.matmul %123, %124, %cst_49 {dimension_numbers = #tpu.dot_dimension_numbers<[1], [0], [0], [1], [0, 0, 1, 1], [], []>} : vector<8x16xbf16>, vector<16x8xbf16>, vector<8x8xf32> -> vector<8x8xf32>
    %c0_50 = arith.constant 0 : index
    %c24 = arith.constant 24 : index
    %126 = vector.load %arg13[%c0_50, %c24] : memref<8x32xf32, #tpu.memory_space<vmem>>, vector<8x8xf32>
    tpu.vector_store %arg13[%c0_50, %c24], %125 {strides = array<i32>} : memref<8x32xf32, #tpu.memory_space<vmem>>, vector<8x8xf32>,
    %c0_51 = arith.constant 0 : index
    %c0_52 = arith.constant 0 : index
    %127 = vector.load %arg13[%c0_51, %c0_52] : memref<8x32xf32, #tpu.memory_space<vmem>>, vector<8x32xf32>
    %128 = arith.truncf %127 : vector<8x32xf32> to vector<8x32xbf16>
    %c0_53 = arith.constant 0 : index
    %c0_54 = arith.constant 0 : index
    %129 = vector.load %arg10[%c0_53, %c0_54] : memref<32x32xbf16, #tpu.memory_space<vmem>>, vector<32x32xbf16>
    %cst_55 = arith.constant dense<0.000000e+00> : vector<8x32xf32>
    %130 = tpu.matmul %128, %129, %cst_55 {dimension_numbers = #tpu.dot_dimension_numbers<[1], [0], [0], [1], [0, 0, 1, 1], [], []>} : vector<8x32xbf16>, vector<32x32xbf16>, vector<8x32xf32> -> vector<8x32xf32>
    %c0_56 = arith.constant 0 : index
    %c0_57 = arith.constant 0 : index
    %131 = vector.load %arg11[%c0_56, %c0_57] : memref<1x32xf32, #tpu.memory_space<vmem>>, vector<1x32xf32>
    %132 = vector.broadcast %131 : vector<1x32xf32> to vector<8x32xf32>
    %133 = arith.addf %130, %132 : vector<8x32xf32>
    %134 = arith.addf %1, %133 : vector<8x32xf32>
    %c0_58 = arith.constant 0 : index
    %c0_59 = arith.constant 0 : index
    %c0_60 = arith.constant 0 : index
    %135 = vector.load %arg12[%c0_58, %c0_59, %c0_60] : memref<1x8x32xf32, #tpu.memory_space<vmem>>, vector<1x8x32xf32>
    %136 = vector.shape_cast %135 : vector<1x8x32xf32> to vector<8x32xf32>
    %137 = vector.shape_cast %134 : vector<8x32xf32> to vector<1x8x32xf32>
    tpu.vector_store %arg12[%c0_58, %c0_59, %c0_60], %137 {strides = array<i32>} : memref<1x8x32xf32, #tpu.memory_space<vmem>>, vector<1x8x32xf32>,
    return
  }
  func.func @transform_0(%arg0: i32) -> (i32, i32, i32) {
    %c0_i32 = arith.constant 0 : i32
    %c0_i32_0 = arith.constant 0 : i32
    %c0_i32_1 = arith.constant 0 : i32
    return %arg0, %c0_i32, %c0_i32_0 : i32, i32, i32
  }
  func.func @transform_1(%arg0: i32) -> (i32, i32, i32) {
    %c0_i32 = arith.constant 0 : i32
    %c0_i32_0 = arith.constant 0 : i32
    %c0_i32_1 = arith.constant 0 : i32
    return %arg0, %c0_i32, %c0_i32_0 : i32, i32, i32
  }
  func.func @transform_2(%arg0: i32) -> (i32, i32) {
    %c0_i32 = arith.constant 0 : i32
    %c0_i32_0 = arith.constant 0 : i32
    %c0_i32_1 = arith.constant 0 : i32
    return %c0_i32, %c0_i32_0 : i32, i32
  }
  func.func @transform_3(%arg0: i32) -> (i32, i32) {
    %c0_i32 = arith.constant 0 : i32
    %c0_i32_0 = arith.constant 0 : i32
    %c0_i32_1 = arith.constant 0 : i32
    return %c0_i32, %c0_i32_0 : i32, i32
  }
  func.func @transform_4(%arg0: i32) -> (i32, i32, i32) {
    %c0_i32 = arith.constant 0 : i32
    %c0_i32_0 = arith.constant 0 : i32
    %c0_i32_1 = arith.constant 0 : i32
    return %arg0, %c0_i32, %c0_i32_0 : i32, i32, i32
  }
  func.func @transform_5(%arg0: i32) -> (i32, i32) {
    %c0_i32 = arith.constant 0 : i32
    %c0_i32_0 = arith.constant 0 : i32
    %c0_i32_1 = arith.constant 0 : i32
    return %c0_i32, %c0_i32_0 : i32, i32
  }
  func.func @transform_6(%arg0: i32) -> (i32, i32) {
    %c0_i32 = arith.constant 0 : i32
    %c0_i32_0 = arith.constant 0 : i32
    %c0_i32_1 = arith.constant 0 : i32
    return %c0_i32, %c0_i32_0 : i32, i32
  }
  func.func @transform_7(%arg0: i32) -> (i32, i32) {
    %c0_i32 = arith.constant 0 : i32
    %c0_i32_0 = arith.constant 0 : i32
    %c0_i32_1 = arith.constant 0 : i32
    return %c0_i32, %c0_i32_0 : i32, i32
  }
  func.func @transform_8(%arg0: i32) -> (i32, i32) {
    %c0_i32 = arith.constant 0 : i32
    %c0_i32_0 = arith.constant 0 : i32
    %c0_i32_1 = arith.constant 0 : i32
    return %c0_i32, %c0_i32_0 : i32, i32
  }
  func.func @transform_9(%arg0: i32) -> (i32, i32) {
    %c0_i32 = arith.constant 0 : i32
    %c0_i32_0 = arith.constant 0 : i32
    %c0_i32_1 = arith.constant 0 : i32
    return %c0_i32, %c0_i32_0 : i32, i32
  }
  func.func @transform_10(%arg0: i32) -> (i32, i32) {
    %c0_i32 = arith.constant 0 : i32
    %c0_i32_0 = arith.constant 0 : i32
    %c0_i32_1 = arith.constant 0 : i32
    return %c0_i32, %c0_i32_0 : i32, i32
  }
  func.func @transform_11(%arg0: i32) -> (i32, i32, i32) {
    %c0_i32 = arith.constant 0 : i32
    %c0_i32_0 = arith.constant 0 : i32
    %c0_i32_1 = arith.constant 0 : i32
    return %arg0, %c0_i32, %c0_i32_0 : i32, i32, i32
  }
}

</mosaic_0001>

<llo_original>
// kernel: decoder_layer.4
$region0: #{decoder_layer.4}
  #allocation0 [shape = 'u32[]', space=smem, size = 0x4, offset = 0x4, fixed_abs, tag = 'smem constant byte address 0x4 - core index']
  #allocation1 [shape = 'u32[144,128]{1,0:T(1,128)}', space=vmem, size = 0x12000, scoped, tag = 'internal scratch']
  #allocation2 [shape = 'f32[8,32]{1,0:T(8,128)}', space=vmem, size = 0x1000, scoped, tag = 'scratch operand']
  %s0 = inlined_call_operand.vmem [shape: f32[2,8,32], index: 0, kind: input, shape index: {}]
  %s1 = inlined_call_operand.vmem [shape: f32[2,16,32], index: 1, kind: input, shape index: {}]
  %s2 = inlined_call_operand.hbm [shape: f32[1,32], index: 2, kind: input, shape index: {}]
  %s3 = inlined_call_operand.hbm [shape: f32[1,32], index: 3, kind: input, shape index: {}]
  %s4 = inlined_call_operand.vmem [shape: s8[2,8,16], index: 4, kind: input, shape index: {}]
  %s5 = inlined_call_operand.vmem [shape: bf16[32,32], index: 5, kind: input, shape index: {}]
  %s6 = inlined_call_operand.hbm [shape: f32[1,32], index: 6, kind: input, shape index: {}]
  %s7 = inlined_call_operand.vmem [shape: bf16[32,64], index: 7, kind: input, shape index: {}]
  %s8 = inlined_call_operand.hbm [shape: f32[1,64], index: 8, kind: input, shape index: {}]
  %s9 = inlined_call_operand.vmem [shape: bf16[32,32], index: 9, kind: input, shape index: {}]
  %s10 = inlined_call_operand.hbm [shape: f32[1,32], index: 10, kind: input, shape index: {}]
  %s11 = inlined_call_operand.vmem [shape: f32[2,8,32], index: 11, kind: output, shape index: {}]
  %s12 = sld [smem:[#allocation0]]
  $region97: #{decoder_layer.4} parent=0
    _
  %s14 = ssub.s32 1, %s12
  %s15 = scalar_select 0, %s14, %s12
  $region1: #{decoder_layer.4} parent=0
    #allocation3 [shape = 'u8[512]{0}', space=vmem, size = 0x400, scoped, tag = 'input window, operand 2, single buffered']
    #allocation4 [shape = 's32[2]{0}', space=sflag, size = 0x8, scoped, tag = 'scoped memory for decoder_layer.4']
    #allocation5 [shape = 'u8[512]{0}', space=vmem, size = 0x400, scoped, tag = 'input window, operand 3, single buffered']
    #allocation6 [shape = 's32[1]{0}', space=sflag, size = 0x4, scoped, tag = 'scoped memory for decoder_layer.4']
    #allocation7 [shape = 'u8[512]{0}', space=vmem, size = 0x400, scoped, tag = 'input window, operand 6, single buffered']
    #allocation8 [shape = 'u8[512]{0}', space=vmem, size = 0x400, scoped, tag = 'input window, operand 8, single buffered']
    #allocation9 [shape = 's32[1]{0}', space=sflag, size = 0x4, scoped, tag = 'scoped memory for decoder_layer.4']
    #allocation10 [shape = 'u8[512]{0}', space=vmem, size = 0x400, scoped, tag = 'input window, operand 10, single buffered']
    %16 = vsyncpa [#allocation4], 0
    %17 = vsyncpa [#allocation6], 0
    %18 = vsyncpa [#allocation9], 0
    loop: start=0, step=1, limit=4
    $region2: #{decoder_layer.4} parent=1 // loop_pre_header
      _
    $region3: #{decoder_layer.4} parent=1 // loop_header
      %s20 = sphi 0, %s24
      %p21 = scmp.ge.s32.totalorder %s20, 4
      %s30 = sphi 0, %s32
      %s33 = sphi 0, %s30
      %s34 = sphi 0, %s33
      %s50 = sphi 0, %s34
      %s56 = sphi 0, %s58
      %s59 = sphi 0, %s56
      %s60 = sphi 0, %s59
      %s76 = sphi 0, %s60
      %s80 = sphi 0, %s80
      %s82 = sphi 0, %s80
      %s83 = sphi 0, %s82
      %s97 = sphi 0, %s83
      %s101 = sphi 0, %s101
      %s103 = sphi 0, %s101
      %s104 = sphi 0, %s103
      %s118 = sphi 0, %s104
      %s124 = sphi 0, %s126
      %s127 = sphi 0, %s124
      %s128 = sphi 0, %s127
      %s144 = sphi 0, %s128
      %s148 = sphi 0, %s148
      %s150 = sphi 0, %s148
      %s151 = sphi 0, %s150
      %s165 = sphi 0, %s151
      %s169 = sphi 0, %s169
      %s171 = sphi 0, %s169
      %s172 = sphi 0, %s171
      %s186 = sphi 0, %s172
      %s190 = sphi 0, %s190
      %s192 = sphi 0, %s190
      %s193 = sphi 0, %s192
      %s207 = sphi 0, %s193
      %s211 = sphi 0, %s211
      %s213 = sphi 0, %s211
      %s214 = sphi 0, %s213
      %s228 = sphi 0, %s214
      %s232 = sphi 0, %s232
      %s234 = sphi 0, %s232
      %s235 = sphi 0, %s234
      %s249 = sphi 0, %s235
      %s253 = sphi 0, %s253
      %s255 = sphi 0, %s253
      %s256 = sphi 0, %s255
      %s270 = sphi 0, %s256
      %s276 = sphi 0, %s278
      %s279 = sphi 0, %s276
      %s280 = sphi 0, %s279
      %s296 = sphi 0, %s280
    $region4: #{decoder_layer.4} parent=1 // loop_header_branch
      %23 = sbr.rel (%p21) target = $region8
    $region5: #{decoder_layer.4} parent=1 // loop_body
      %s25 = ssub.s32 %s20, 1
      %s26 = ssub.s32 %s20, 2
      %s27 = sadd.s32 %s20, 1
      %s28 = ssub.s32 %s20, %s27
      %p29 = scmp.eq.s32.totalorder %s28, 0
      %s31 = sadd.s32 %s30, 1
      %s32 = scalar_select %p29, %s30, %s31
      %p35 = pneg %p29
      %p36 = scmp.eq.s32.totalorder %s20, 1
      %p37 = por %p35, %p36
      %p38 = scmp.ne.s32.totalorder %s30, %s33
      %p39 = scmp.eq.s32.totalorder %s20, 0
      %p40 = por %p38, %p39
      %p41 = scmp.ne.s32.totalorder %s30, %s33
      %p42 = scmp.eq.s32.totalorder %s25, 1
      %p43 = por %p41, %p42
      %p44 = scmp.ne.s32.totalorder %s33, %s34
      %p45 = scmp.eq.s32.totalorder %s25, 0
      %p46 = por %p44, %p45
      %p47 = scmp.ne.s32.totalorder %s33, %s34
      %p48 = scmp.eq.s32.totalorder %s26, 1
      %p49 = por %p47, %p48
      %p51 = scmp.ne.s32.totalorder %s34, %s50
      %p52 = scmp.eq.s32.totalorder %s26, 0
      %p53 = por %p51, %p52
      %s54 = ssub.s32 %s20, %s27
      %p55 = scmp.eq.s32.totalorder %s54, 0
      %s57 = sadd.s32 %s56, 1
      %s58 = scalar_select %p55, %s56, %s57
      %p61 = pneg %p55
      %p62 = scmp.eq.s32.totalorder %s20, 1
      %p63 = por %p61, %p62
      %p64 = scmp.ne.s32.totalorder %s56, %s59
      %p65 = scmp.eq.s32.totalorder %s20, 0
      %p66 = por %p64, %p65
      %p67 = scmp.ne.s32.totalorder %s56, %s59
      %p68 = scmp.eq.s32.totalorder %s25, 1
      %p69 = por %p67, %p68
      %p70 = scmp.ne.s32.totalorder %s59, %s60
      %p71 = scmp.eq.s32.totalorder %s25, 0
      %p72 = por %p70, %p71
      %p73 = scmp.ne.s32.totalorder %s59, %s60
      %p74 = scmp.eq.s32.totalorder %s26, 1
      %p75 = por %p73, %p74
      %p77 = scmp.ne.s32.totalorder %s60, %s76
      %p78 = scmp.eq.s32.totalorder %s26, 0
      %p79 = por %p77, %p78
      %s81 = sadd.s32 %s80, 1
      %p84 = scmp.eq.s32.totalorder %s20, 1
      %p85 = scmp.ne.s32.totalorder %s80, %s82
      %p86 = scmp.eq.s32.totalorder %s20, 0
      %p87 = por %p85, %p86
      %p88 = scmp.ne.s32.totalorder %s80, %s82
      %p89 = scmp.eq.s32.totalorder %s25, 1
      %p90 = por %p88, %p89
      %p91 = scmp.ne.s32.totalorder %s82, %s83
      %p92 = scmp.eq.s32.totalorder %s25, 0
      %p93 = por %p91, %p92
      %p94 = scmp.ne.s32.totalorder %s82, %s83
      %p95 = scmp.eq.s32.totalorder %s26, 1
      %p96 = por %p94, %p95
      %p98 = scmp.ne.s32.totalorder %s83, %s97
      %p99 = scmp.eq.s32.totalorder %s26, 0
      %p100 = por %p98, %p99
      %s102 = sadd.s32 %s101, 1
      %p105 = scmp.eq.s32.totalorder %s20, 1
      %p106 = scmp.ne.s32.totalorder %s101, %s103
      %p107 = scmp.eq.s32.totalorder %s20, 0
      %p108 = por %p106, %p107
      %p109 = scmp.ne.s32.totalorder %s101, %s103
      %p110 = scmp.eq.s32.totalorder %s25, 1
      %p111 = por %p109, %p110
      %p112 = scmp.ne.s32.totalorder %s103, %s104
      %p113 = scmp.eq.s32.totalorder %s25, 0
      %p114 = por %p112, %p113
      %p115 = scmp.ne.s32.totalorder %s103, %s104
      %p116 = scmp.eq.s32.totalorder %s26, 1
      %p117 = por %p115, %p116
      %p119 = scmp.ne.s32.totalorder %s104, %s118
      %p120 = scmp.eq.s32.totalorder %s26, 0
      %p121 = por %p119, %p120
      %s122 = ssub.s32 %s20, %s27
      %p123 = scmp.eq.s32.totalorder %s122, 0
      %s125 = sadd.s32 %s124, 1
      %s126 = scalar_select %p123, %s124, %s125
      %p129 = pneg %p123
      %p130 = scmp.eq.s32.totalorder %s20, 1
      %p131 = por %p129, %p130
      %p132 = scmp.ne.s32.totalorder %s124, %s127
      %p133 = scmp.eq.s32.totalorder %s20, 0
      %p134 = por %p132, %p133
      %p135 = scmp.ne.s32.totalorder %s124, %s127
      %p136 = scmp.eq.s32.totalorder %s25, 1
      %p137 = por %p135, %p136
      %p138 = scmp.ne.s32.totalorder %s127, %s128
      %p139 = scmp.eq.s32.totalorder %s25, 0
      %p140 = por %p138, %p139
      %p141 = scmp.ne.s32.totalorder %s127, %s128
      %p142 = scmp.eq.s32.totalorder %s26, 1
      %p143 = por %p141, %p142
      %p145 = scmp.ne.s32.totalorder %s128, %s144
      %p146 = scmp.eq.s32.totalorder %s26, 0
      %p147 = por %p145, %p146
      %s149 = sadd.s32 %s148, 1
      %p152 = scmp.eq.s32.totalorder %s20, 1
      %p153 = scmp.ne.s32.totalorder %s148, %s150
      %p154 = scmp.eq.s32.totalorder %s20, 0
      %p155 = por %p153, %p154
      %p156 = scmp.ne.s32.totalorder %s148, %s150
      %p157 = scmp.eq.s32.totalorder %s25, 1
      %p158 = por %p156, %p157
      %p159 = scmp.ne.s32.totalorder %s150, %s151
      %p160 = scmp.eq.s32.totalorder %s25, 0
      %p161 = por %p159, %p160
      %p162 = scmp.ne.s32.totalorder %s150, %s151
      %p163 = scmp.eq.s32.totalorder %s26, 1
      %p164 = por %p162, %p163
      %p166 = scmp.ne.s32.totalorder %s151, %s165
      %p167 = scmp.eq.s32.totalorder %s26, 0
      %p168 = por %p166, %p167
      %s170 = sadd.s32 %s169, 1
      %p173 = scmp.eq.s32.totalorder %s20, 1
      %p174 = scmp.ne.s32.totalorder %s169, %s171
      %p175 = scmp.eq.s32.totalorder %s20, 0
      %p176 = por %p174, %p175
      %p177 = scmp.ne.s32.totalorder %s169, %s171
      %p178 = scmp.eq.s32.totalorder %s25, 1
      %p179 = por %p177, %p178
      %p180 = scmp.ne.s32.totalorder %s171, %s172
      %p181 = scmp.eq.s32.totalorder %s25, 0
      %p182 = por %p180, %p181
      %p183 = scmp.ne.s32.totalorder %s171, %s172
      %p184 = scmp.eq.s32.totalorder %s26, 1
      %p185 = por %p183, %p184
      %p187 = scmp.ne.s32.totalorder %s172, %s186
      %p188 = scmp.eq.s32.totalorder %s26, 0
      %p189 = por %p187, %p188
      %s191 = sadd.s32 %s190, 1
      %p194 = scmp.eq.s32.totalorder %s20, 1
      %p195 = scmp.ne.s32.totalorder %s190, %s192
      %p196 = scmp.eq.s32.totalorder %s20, 0
      %p197 = por %p195, %p196
      %p198 = scmp.ne.s32.totalorder %s190, %s192
      %p199 = scmp.eq.s32.totalorder %s25, 1
      %p200 = por %p198, %p199
      %p201 = scmp.ne.s32.totalorder %s192, %s193
      %p202 = scmp.eq.s32.totalorder %s25, 0
      %p203 = por %p201, %p202
      %p204 = scmp.ne.s32.totalorder %s192, %s193
      %p205 = scmp.eq.s32.totalorder %s26, 1
      %p206 = por %p204, %p205
      %p208 = scmp.ne.s32.totalorder %s193, %s207
      %p209 = scmp.eq.s32.totalorder %s26, 0
      %p210 = por %p208, %p209
      %s212 = sadd.s32 %s211, 1
      %p215 = scmp.eq.s32.totalorder %s20, 1
      %p216 = scmp.ne.s32.totalorder %s211, %s213
      %p217 = scmp.eq.s32.totalorder %s20, 0
      %p218 = por %p216, %p217
      %p219 = scmp.ne.s32.totalorder %s211, %s213
      %p220 = scmp.eq.s32.totalorder %s25, 1
      %p221 = por %p219, %p220
      %p222 = scmp.ne.s32.totalorder %s213, %s214
      %p223 = scmp.eq.s32.totalorder %s25, 0
      %p224 = por %p222, %p223
      %p225 = scmp.ne.s32.totalorder %s213, %s214
      %p226 = scmp.eq.s32.totalorder %s26, 1
      %p227 = por %p225, %p226
      %p229 = scmp.ne.s32.totalorder %s214, %s228
      %p230 = scmp.eq.s32.totalorder %s26, 0
      %p231 = por %p229, %p230
      %s233 = sadd.s32 %s232, 1
      %p236 = scmp.eq.s32.totalorder %s20, 1
      %p237 = scmp.ne.s32.totalorder %s232, %s234
      %p238 = scmp.eq.s32.totalorder %s20, 0
      %p239 = por %p237, %p238
      %p240 = scmp.ne.s32.totalorder %s232, %s234
      %p241 = scmp.eq.s32.totalorder %s25, 1
      %p242 = por %p240, %p241
      %p243 = scmp.ne.s32.totalorder %s234, %s235
      %p244 = scmp.eq.s32.totalorder %s25, 0
      %p245 = por %p243, %p244
      %p246 = scmp.ne.s32.totalorder %s234, %s235
      %p247 = scmp.eq.s32.totalorder %s26, 1
      %p248 = por %p246, %p247
      %p250 = scmp.ne.s32.totalorder %s235, %s249
      %p251 = scmp.eq.s32.totalorder %s26, 0
      %p252 = por %p250, %p251
      %s254 = sadd.s32 %s253, 1
      %p257 = scmp.eq.s32.totalorder %s20, 1
      %p258 = scmp.ne.s32.totalorder %s253, %s255
      %p259 = scmp.eq.s32.totalorder %s20, 0
      %p260 = por %p258, %p259
      %p261 = scmp.ne.s32.totalorder %s253, %s255
      %p262 = scmp.eq.s32.totalorder %s25, 1
      %p263 = por %p261, %p262
      %p264 = scmp.ne.s32.totalorder %s255, %s256
      %p265 = scmp.eq.s32.totalorder %s25, 0
      %p266 = por %p264, %p265
      %p267 = scmp.ne.s32.totalorder %s255, %s256
      %p268 = scmp.eq.s32.totalorder %s26, 1
      %p269 = por %p267, %p268
      %p271 = scmp.ne.s32.totalorder %s256, %s270
      %p272 = scmp.eq.s32.totalorder %s26, 0
      %p273 = por %p271, %p272
      %s274 = ssub.s32 %s20, %s27
      %p275 = scmp.eq.s32.totalorder %s274, 0
      %s277 = sadd.s32 %s276, 1
      %s278 = scalar_select %p275, %s276, %s277
      %p281 = pneg %p275
      %p282 = scmp.eq.s32.totalorder %s20, 1
      %p283 = por %p281, %p282
      %p284 = scmp.ne.s32.totalorder %s276, %s279
      %p285 = scmp.eq.s32.totalorder %s20, 0
      %p286 = por %p284, %p285
      %p287 = scmp.ne.s32.totalorder %s276, %s279
      %p288 = scmp.eq.s32.totalorder %s25, 1
      %p289 = por %p287, %p288
      %p290 = scmp.ne.s32.totalorder %s279, %s280
      %p291 = scmp.eq.s32.totalorder %s25, 0
      %p292 = por %p290, %p291
      %p293 = scmp.ne.s32.totalorder %s279, %s280
      %p294 = scmp.eq.s32.totalorder %s26, 1
      %p295 = por %p293, %p294
      %p297 = scmp.ne.s32.totalorder %s280, %s296
      %p298 = scmp.eq.s32.totalorder %s26, 0
      %p299 = por %p297, %p298
      %p300 = scmp.le.s32.totalorder 1, %s20
      %p301 = scmp.lt.s32.totalorder %s20, 3
      %p302 = pnand %p300, %p301
      %p303 = pneg %p302
      // Predicated region
      $region9: #{decoder_layer.4} parent=5 // pred_check
        _
      $region10: #{decoder_layer.4} parent=5 // pred_check_branch
        %305 = sbr.rel (%p302) target = $region12
      $region11: #{decoder_layer.4} parent=5 // pred_region
        %s306 = ssub.s32 %s20, 1
        // Predicated region
        $region13: #{decoder_layer.4} parent=11 // pred_check
          %p307 = pneg %p93
        $region14: #{decoder_layer.4} parent=11 // pred_check_branch
          %309 = sbr.rel (%p307) target = $region16
        $region15: #{decoder_layer.4} parent=11 // pred_region
          %s311 = ssub.s32 16, 16
          %312 = vsyncadd [#allocation4], %s311
          %s314 = sshll.u32 [#allocation3], 4
          %s315 = int_to_ptr.vmem [resolvable:$true] %s314
          %317 = dma.hbm_to_vmem [thread:$0]  %s2, 16, %s315, [#allocation4]
        $region16: #{decoder_layer.4} parent=11 // pred_fallthru
          _
        // Predicated region
        $region17: #{decoder_layer.4} parent=11 // pred_check
          %p318 = pneg %p114
        $region18: #{decoder_layer.4} parent=11 // pred_check_branch
          %320 = sbr.rel (%p318) target = $region20
        $region19: #{decoder_layer.4} parent=11 // pred_region
          %s322 = ssub.s32 16, 16
          %323 = vsyncadd [#allocation6], %s322
          %s325 = sshll.u32 [#allocation5], 4
          %s326 = int_to_ptr.vmem [resolvable:$true] %s325
          %328 = dma.hbm_to_vmem [thread:$0]  %s3, 16, %s326, [#allocation6]
        $region20: #{decoder_layer.4} parent=11 // pred_fallthru
          _
        // Predicated region
        $region21: #{decoder_layer.4} parent=11 // pred_check
          %p329 = pneg %p161
        $region22: #{decoder_layer.4} parent=11 // pred_check_branch
          %331 = sbr.rel (%p329) target = $region24
        $region23: #{decoder_layer.4} parent=11 // pred_region
          _
        $region24: #{decoder_layer.4} parent=11 // pred_fallthru
          _
        // Predicated region
        $region25: #{decoder_layer.4} parent=11 // pred_check
          %p332 = pneg %p182
        $region26: #{decoder_layer.4} parent=11 // pred_check_branch
          %334 = sbr.rel (%p332) target = $region28
        $region27: #{decoder_layer.4} parent=11 // pred_region
          %s336 = ssub.s32 16, 16
          %337 = vsyncadd [#allocation6], %s336
          %s339 = sshll.u32 [#allocation7], 4
          %s340 = int_to_ptr.vmem [resolvable:$true] %s339
          %342 = dma.hbm_to_vmem [thread:$0]  %s6, 16, %s340, [#allocation6]
        $region28: #{decoder_layer.4} parent=11 // pred_fallthru
          _
        // Predicated region
        $region29: #{decoder_layer.4} parent=11 // pred_check
          %p343 = pneg %p203
        $region30: #{decoder_layer.4} parent=11 // pred_check_branch
          %345 = sbr.rel (%p343) target = $region32
        $region31: #{decoder_layer.4} parent=11 // pred_region
          _
        $region32: #{decoder_layer.4} parent=11 // pred_fallthru
          _
        // Predicated region
        $region33: #{decoder_layer.4} parent=11 // pred_check
          %p346 = pneg %p224
        $region34: #{decoder_layer.4} parent=11 // pred_check_branch
          %348 = sbr.rel (%p346) target = $region36
        $region35: #{decoder_layer.4} parent=11 // pred_region
          %s350 = ssub.s32 16, 16
          %351 = vsyncadd [#allocation9], %s350
          %s353 = sshll.u32 [#allocation8], 4
          %s354 = int_to_ptr.vmem [resolvable:$true] %s353
          %356 = dma.hbm_to_vmem [thread:$0]  %s8, 16, %s354, [#allocation9]
        $region36: #{decoder_layer.4} parent=11 // pred_fallthru
          _
        // Predicated region
        $region37: #{decoder_layer.4} parent=11 // pred_check
          %p357 = pneg %p245
        $region38: #{decoder_layer.4} parent=11 // pred_check_branch
          %359 = sbr.rel (%p357) target = $region40
        $region39: #{decoder_layer.4} parent=11 // pred_region
          _
        $region40: #{decoder_layer.4} parent=11 // pred_fallthru
          _
        // Predicated region
        $region41: #{decoder_layer.4} parent=11 // pred_check
          %p360 = pneg %p266
        $region42: #{decoder_layer.4} parent=11 // pred_check_branch
          %362 = sbr.rel (%p360) target = $region44
        $region43: #{decoder_layer.4} parent=11 // pred_region
          %s364 = ssub.s32 16, 16
          %365 = vsyncadd [#allocation9], %s364
          %s367 = sshll.u32 [#allocation10], 4
          %s368 = int_to_ptr.vmem [resolvable:$true] %s367
          %370 = dma.hbm_to_vmem [thread:$0]  %s10, 16, %s368, [#allocation9]
        $region44: #{decoder_layer.4} parent=11 // pred_fallthru
          _
      $region12: #{decoder_layer.4} parent=5 // pred_fallthru
        _
      %p371 = scmp.lt.s32.totalorder %s20, 2
      // Predicated region
      $region45: #{decoder_layer.4} parent=5 // pred_check
        %p372 = pneg %p371
      $region46: #{decoder_layer.4} parent=5 // pred_check_branch
        %374 = sbr.rel (%p372) target = $region48
      $region47: #{decoder_layer.4} parent=5 // pred_region
        // Predicated region
        $region49: #{decoder_layer.4} parent=47 // pred_check
          %p375 = pneg %p40
        $region50: #{decoder_layer.4} parent=47 // pred_check_branch
          %377 = sbr.rel (%p375) target = $region52
        $region51: #{decoder_layer.4} parent=47 // pred_region
          %p378 = scmp.lt.s32.totalorder %s20, 1
          %s379 = scalar_select %p378, %s20, 1
          %s380 = smul.addr %s379, 8
          %s381 = scalar_lea.vmem %s0, %s380
        $region52: #{decoder_layer.4} parent=47 // pred_fallthru
          _
        // Predicated region
        $region53: #{decoder_layer.4} parent=47 // pred_check
          %p382 = pneg %p66
        $region54: #{decoder_layer.4} parent=47 // pred_check_branch
          %384 = sbr.rel (%p382) target = $region56
        $region55: #{decoder_layer.4} parent=47 // pred_region
          %p385 = scmp.lt.s32.totalorder %s20, 1
          %s386 = scalar_select %p385, %s20, 1
          %s387 = smul.addr %s386, 2
          %s388 = smul.addr %s387, 8
          %s389 = scalar_lea.vmem %s1, %s388
        $region56: #{decoder_layer.4} parent=47 // pred_fallthru
          _
        // Predicated region
        $region57: #{decoder_layer.4} parent=47 // pred_check
          %p390 = pneg %p134
        $region58: #{decoder_layer.4} parent=47 // pred_check_branch
          %392 = sbr.rel (%p390) target = $region60
        $region59: #{decoder_layer.4} parent=47 // pred_region
          %p393 = scmp.lt.s32.totalorder %s20, 1
          %s394 = scalar_select %p393, %s20, 1
          %s395 = smul.addr %s394, 2
          %s396 = scalar_lea.vmem %s4, %s395
        $region60: #{decoder_layer.4} parent=47 // pred_fallthru
          _
      $region48: #{decoder_layer.4} parent=5 // pred_fallthru
        _
      %p397 = scmp.le.s32.totalorder 1, %s20
      %p398 = scmp.lt.s32.totalorder %s20, 3
      %p399 = pnand %p397, %p398
      %p400 = pneg %p399
      // Predicated region
      $region61: #{decoder_layer.4} parent=5 // pred_check
        _
      $region62: #{decoder_layer.4} parent=5 // pred_check_branch
        %402 = sbr.rel (%p399) target = $region64
      $region63: #{decoder_layer.4} parent=5 // pred_region
        %s403 = ssub.s32 %s20, 1
        // Predicated region
        $region65: #{decoder_layer.4} parent=63 // pred_check
          %p404 = pneg %p93
        $region66: #{decoder_layer.4} parent=63 // pred_check_branch
          %406 = sbr.rel (%p404) target = $region68
        $region67: #{decoder_layer.4} parent=63 // pred_region
          %407 = dma.done [#allocation4], 16
        $region68: #{decoder_layer.4} parent=63 // pred_fallthru
          _
        // Predicated region
        $region69: #{decoder_layer.4} parent=63 // pred_check
          %p408 = pneg %p114
        $region70: #{decoder_layer.4} parent=63 // pred_check_branch
          %410 = sbr.rel (%p408) target = $region72
        $region71: #{decoder_layer.4} parent=63 // pred_region
          %411 = dma.done [#allocation6], 16
        $region72: #{decoder_layer.4} parent=63 // pred_fallthru
          _
        // Predicated region
        $region73: #{decoder_layer.4} parent=63 // pred_check
          %p412 = pneg %p182
        $region74: #{decoder_layer.4} parent=63 // pred_check_branch
          %414 = sbr.rel (%p412) target = $region76
        $region75: #{decoder_layer.4} parent=63 // pred_region
          %415 = dma.done [#allocation6], 16
        $region76: #{decoder_layer.4} parent=63 // pred_fallthru
          _
        // Predicated region
        $region77: #{decoder_layer.4} parent=63 // pred_check
          %p416 = pneg %p224
        $region78: #{decoder_layer.4} parent=63 // pred_check_branch
          %418 = sbr.rel (%p416) target = $region80
        $region79: #{decoder_layer.4} parent=63 // pred_region
          %419 = dma.done [#allocation9], 16
        $region80: #{decoder_layer.4} parent=63 // pred_fallthru
          _
        // Predicated region
        $region81: #{decoder_layer.4} parent=63 // pred_check
          %p420 = pneg %p266
        $region82: #{decoder_layer.4} parent=63 // pred_check_branch
          %422 = sbr.rel (%p420) target = $region84
        $region83: #{decoder_layer.4} parent=63 // pred_region
          %423 = dma.done [#allocation9], 16
        $region84: #{decoder_layer.4} parent=63 // pred_fallthru
          _
        %p424 = scmp.lt.s32.totalorder %s25, 1
        %s425 = scalar_select %p424, %s25, 1
        %s426 = smul.addr %s425, 8
        %s427 = scalar_lea.vmem %s0, %s426
        %p428 = pneg %p46
        %p429 = pneg %p43
        %p430 = scmp.lt.s32.totalorder %s25, 1
        %s431 = scalar_select %p430, %s25, 1
        %s432 = smul.addr %s431, 2
        %s433 = smul.addr %s432, 8
        %s434 = scalar_lea.vmem %s1, %s433
        %p435 = pneg %p72
        %p436 = pneg %p69
        %p437 = pneg %p93
        %p438 = pneg %p90
        %p439 = pneg %p114
        %p440 = pneg %p111
        %p441 = scmp.lt.s32.totalorder %s25, 1
        %s442 = scalar_select %p441, %s25, 1
        %s443 = smul.addr %s442, 2
        %s444 = scalar_lea.vmem %s4, %s443
        %p445 = pneg %p140
        %p446 = pneg %p137
        %p447 = pneg %p161
        %p448 = pneg %p158
        %p449 = pneg %p182
        %p450 = pneg %p179
        %p451 = pneg %p203
        %p452 = pneg %p200
        %p453 = pneg %p224
        %p454 = pneg %p221
        %p455 = pneg %p245
        %p456 = pneg %p242
        %p457 = pneg %p266
        %p458 = pneg %p263
        %p459 = pneg %p292
        %p460 = pneg %p289
        %p461 = scmp.lt.s32.totalorder %s25, 1
        %s462 = scalar_select %p461, %s25, 1
        %s463 = smul.addr %s462, 8
        %s464 = scalar_lea.vmem %s11, %s463
        %p465 = scmp.lt.s32.totalorder %s25, 1
        %s466 = scalar_select %p465, %s25, 1
        %s467 = smul.addr %s466, 8
        %s468 = scalar_lea.vmem %s0, %s467
        %p469 = scmp.lt.s32.totalorder %s25, 1
        %s470 = scalar_select %p469, %s25, 1
        %s471 = smul.addr %s470, 2
        %s472 = smul.addr %s471, 8
        %s473 = scalar_lea.vmem %s1, %s472
        %p474 = scmp.lt.s32.totalorder %s25, 1
        %s475 = scalar_select %p474, %s25, 1
        %s476 = smul.addr %s475, 2
        %s477 = scalar_lea.vmem %s4, %s476
        %p478 = scmp.lt.s32.totalorder %s25, 1
        %s479 = scalar_select %p478, %s25, 1
        %s480 = smul.addr %s479, 8
        %s481 = scalar_lea.vmem %s11, %s480
        %v483 = vld [vmem:[%s468] sm:$0xff]
        %v484 = vld [vmem:[%s473] sm:$0xff]
        %v485 = vld [vmem:[%s473 + $0x8] sm:$0xff]
        %v486 = vld [vmem:[#allocation3] sm:$0x1]
        %v487 = vld [vmem:[#allocation5] sm:$0x1]
        %vm488 = vcmask 261120
        %v489 = vsel %vm488, %v483, 0.0
        %490 = vadd.xlane.f32.xlu0 %v489
        %v491 = vpop.xlane.xlu0 %490
        %v492 = vrcp.pop 32.0
        %v493 = vmul.f32 %v491, %v492
        %v494 = vsub.f32 %v483, %v493
        %v495 = vmul.f32 %v494, %v494
        %v496 = vsel %vm488, %v495, 0.0
        %497 = vadd.xlane.f32.xlu0 %v496
        %v498 = vpop.xlane.xlu0 %497
        %v499 = vrcp.pop 31.0
        %v500 = vmul.f32 %v498, %v499
        %v501 = vrsqrt.pop %v500
        %v502 = vmul.f32 %v500, %v501
        %vm503 = vcmp.eq.f32.partialorder %v500, inf
        %v504 = vsel %vm503, %v500, %v502
        %vm505 = vcmp.eq.f32.partialorder %v500, 0.0
        %v506 = vand.u32 %v500, 2147483648
        %v507 = vsel %vm505, %v506, %v504
        %v508 = vadd.f32 %v507, 1e-06
        %v509 = vrcp.pop %v508
        %v510 = vmul.f32 1.0, %v509
        %v512 = vlaneseq
        %v513 = vshrl.u32 %v512, 7
        %v514 = vsub.s32 0, %v513
        %v515 = vrot.slane %v486, %v514
        %v517 = vmul.f32 %v515, %v494
        %v518 = vmul.f32 %v517, %v510
        %v520 = vlaneseq
        %v521 = vshrl.u32 %v520, 7
        %v522 = vsub.s32 0, %v521
        %v523 = vrot.slane %v487, %v522
        %v525 = vadd.f32 %v518, %v523
        %v526 = vpack.c.bf16 %v525, %v525
        %v527 = vld [vmem:[%s5] sm:$0xf]
        %v528 = vld [vmem:[%s5 + $0x4] sm:$0xf]
        %v529 = vld [vmem:[%s5 + $0x8] sm:$0xf]
        %v530 = vld [vmem:[%s5 + $0xc] sm:$0xf]
        %v531 = vld [vmem:[#allocation7] sm:$0x1]
        %v533 = vlaneseq
        %v534 = vshrl.u32 %v533, 7
        %v535 = vsub.s32 0, %v534
        %v536 = vrot.slane %v531, %v535
        %v542 = vunpack.c.l.b16 %v527
        %v543 = vunpack.c.l.b16 %v528
        %v544 = vunpack.c.l.b16 %v529
        %v545 = vunpack.c.l.b16 %v530
        %v546 = vpack.c.b16 %v543, %v542
        %v547 = vpack.c.b16 %v545, %v544
        %v551 = vsel %vm488, %v526, 0
        %553 = vmatprep.subr.bf16.mxu0 0
        %554 = vmatpush1.bf16.msra.mxu0 0
        %555 = vmatprep.subr.bf16.mxu0 0
        %556 = vmatpush1.bf16.msra.mxu0 0
        %557 = vmatprep.subr.bf16.mxu0 0
        %558 = vmatpush1.bf16.msra.mxu0 0
        %559 = vmatprep.subr.bf16.mxu0 0
        %560 = vmatpush1.bf16.msra.mxu0 0
        %561 = vmatprep.subr.bf16.mxu0 0
        %562 = vmatpush1.bf16.msra.mxu0 0
        %563 = vmatprep.subr.bf16.mxu0 0
        %564 = vmatpush1.bf16.msra.mxu0 0
        %565 = vmatprep.subr.bf16.mxu0 0
        %566 = vmatpush1.bf16.msra.mxu0 %v547
        %567 = vmatprep.subr.bf16.mxu0 0
        %568 = vmatpush1.bf16.msra.mxu0 %v546
        %569 = vmatprep.subr.bf16.mxu0 0
        %570 = vmatpush2.bf16.msra.mxu0 0
        %571 = vmatprep.subr.bf16.mxu0 0
        %572 = vmatpush2.bf16.msra.mxu0 0
        %573 = vmatprep.subr.bf16.mxu0 0
        %574 = vmatpush2.bf16.msra.mxu0 0
        %575 = vmatprep.subr.bf16.mxu0 0
        %576 = vmatpush2.bf16.msra.mxu0 0
        %577 = vmatprep.subr.bf16.mxu0 0
        %578 = vmatpush2.bf16.msra.mxu0 0
        %579 = vmatprep.subr.bf16.mxu0 0
        %580 = vmatpush2.bf16.msra.mxu0 0
        %581 = vmatprep.subr.bf16.mxu0 0
        %582 = vmatpush2.bf16.msra.mxu0 0
        %583 = vmatprep.subr.bf16.mxu0 0
        %584 = vmatpush2.bf16.msra.mxu0 0
        %585 = vmatprep.mubr.bf16.mxu0 0
        %586 = vmatmul.mubr.bf16.gmra.mxu0 %v551
        %v587 = vpop.f32.mrf.mxu0
        %v588 = vadd.f32 %v536, %v587
        %v589 = vpop.f32.mrf.mxu0
        %v590 = vpop.f32.mrf.mxu0
        %v591 = vpop.f32.mrf.mxu0
        %592 = vdwg.mxu0
        %v593 = vpack.c.bf16 %v485, %v484
        %v594 = vld [vmem:[%s7] sm:$0xf]
        %v595 = vld [vmem:[%s7 + $0x4] sm:$0xf]
        %v596 = vld [vmem:[%s7 + $0x8] sm:$0xf]
        %v597 = vld [vmem:[%s7 + $0xc] sm:$0xf]
        %v598 = vld [vmem:[#allocation8] sm:$0x1]
        %v600 = vlaneseq
        %v601 = vshrl.u32 %v600, 7
        %v602 = vsub.s32 0, %v601
        %v603 = vrot.slane %v598, %v602
        %v609 = vunpack.c.l.b16 %v594
        %v610 = vunpack.c.l.b16 %v595
        %v611 = vunpack.c.l.b16 %v596
        %v612 = vunpack.c.l.b16 %v597
        %v613 = vpack.c.b16 %v610, %v609
        %v614 = vpack.c.b16 %v612, %v611
        %v618 = vsel %vm488, %v593, 0
        %620 = vmatprep.subr.bf16.mxu0 0
        %621 = vmatpush1.bf16.msra.mxu0 0
        %622 = vmatprep.subr.bf16.mxu0 0
        %623 = vmatpush1.bf16.msra.mxu0 0
        %624 = vmatprep.subr.bf16.mxu0 0
        %625 = vmatpush1.bf16.msra.mxu0 0
        %626 = vmatprep.subr.bf16.mxu0 0
        %627 = vmatpush1.bf16.msra.mxu0 0
        %628 = vmatprep.subr.bf16.mxu0 0
        %629 = vmatpush1.bf16.msra.mxu0 0
        %630 = vmatprep.subr.bf16.mxu0 0
        %631 = vmatpush1.bf16.msra.mxu0 0
        %632 = vmatprep.subr.bf16.mxu0 0
        %633 = vmatpush1.bf16.msra.mxu0 %v614
        %634 = vmatprep.subr.bf16.mxu0 0
        %635 = vmatpush1.bf16.msra.mxu0 %v613
        %636 = vmatprep.subr.bf16.mxu0 0
        %637 = vmatpush2.bf16.msra.mxu0 0
        %638 = vmatprep.subr.bf16.mxu0 0
        %639 = vmatpush2.bf16.msra.mxu0 0
        %640 = vmatprep.subr.bf16.mxu0 0
        %641 = vmatpush2.bf16.msra.mxu0 0
        %642 = vmatprep.subr.bf16.mxu0 0
        %643 = vmatpush2.bf16.msra.mxu0 0
        %644 = vmatprep.subr.bf16.mxu0 0
        %645 = vmatpush2.bf16.msra.mxu0 0
        %646 = vmatprep.subr.bf16.mxu0 0
        %647 = vmatpush2.bf16.msra.mxu0 0
        %648 = vmatprep.subr.bf16.mxu0 0
        %649 = vmatpush2.bf16.msra.mxu0 0
        %650 = vmatprep.subr.bf16.mxu0 0
        %651 = vmatpush2.bf16.msra.mxu0 0
        %652 = vmatprep.mubr.bf16.mxu0 0
        %653 = vmatmul.mubr.bf16.gmra.mxu0 %v618
        %v654 = vpop.f32.mrf.mxu0
        %v655 = vadd.f32 %v603, %v654
        %v656 = vpop.f32.mrf.mxu0
        %v657 = vpop.f32.mrf.mxu0
        %v658 = vadd.f32 %v603, %v657
        %v659 = vpop.f32.mrf.mxu0
        %660 = vdwg.mxu0
        %v661 = vld [vmem:[%s477] sm:$0x3]
        %v662 = vunpack.c.0.s8 %v661
        %v663 = vcvt.s32.f32 %v662
        %vm664 = vcmp.eq.f32.partialorder %v663, 0.0
        %v665 = vsel %vm664, -1e+09, 0.0
        %v666 = vpack.c.bf16 %v588, %v588
        %v667 = vpack.c.bf16 %v658, %v655
        %vm668 = vcmask 64512
        %v670 = vsel %vm668, %v666, 0
        %v673 = vsel %vm668, %v667, 0
        %675 = vmatprep.subr.bf16.mxu0 0
        %676 = vmatpush1.bf16.xpose.msra.mxu0 0
        %677 = vmatprep.subr.bf16.mxu0 0
        %678 = vmatpush1.bf16.xpose.msra.mxu0 0
        %679 = vmatprep.subr.bf16.mxu0 0
        %680 = vmatpush1.bf16.xpose.msra.mxu0 0
        %681 = vmatprep.subr.bf16.mxu0 0
        %682 = vmatpush1.bf16.xpose.msra.mxu0 0
        %683 = vmatprep.subr.bf16.mxu0 0
        %684 = vmatpush1.bf16.xpose.msra.mxu0 0
        %685 = vmatprep.subr.bf16.mxu0 0
        %686 = vmatpush1.bf16.xpose.msra.mxu0 0
        %687 = vmatprep.subr.bf16.mxu0 0
        %688 = vmatpush1.bf16.xpose.msra.mxu0 0
        %689 = vmatprep.subr.bf16.mxu0 0
        %690 = vmatpush1.bf16.xpose.msra.mxu0 %v673
        %691 = vmatprep.subr.bf16.mxu0 0
        %692 = vmatpush2.bf16.xpose.msra.mxu0 0
        %693 = vmatprep.subr.bf16.mxu0 0
        %694 = vmatpush2.bf16.xpose.msra.mxu0 0
        %695 = vmatprep.subr.bf16.mxu0 0
        %696 = vmatpush2.bf16.xpose.msra.mxu0 0
        %697 = vmatprep.subr.bf16.mxu0 0
        %698 = vmatpush2.bf16.xpose.msra.mxu0 0
        %699 = vmatprep.subr.bf16.mxu0 0
        %700 = vmatpush2.bf16.xpose.msra.mxu0 0
        %701 = vmatprep.subr.bf16.mxu0 0
        %702 = vmatpush2.bf16.xpose.msra.mxu0 0
        %703 = vmatprep.subr.bf16.mxu0 0
        %704 = vmatpush2.bf16.xpose.msra.mxu0 0
        %705 = vmatprep.subr.bf16.mxu0 0
        %706 = vmatpush2.bf16.xpose.msra.mxu0 0
        %707 = vmatprep.mubr.bf16.mxu0 0
        %708 = vmatmul.mubr.bf16.gmra.mxu0 %v670
        %v709 = vpop.f32.mrf.mxu0
        %v710 = vadd.f32 %v665, %v709
        %v711 = vpop.f32.mrf.mxu0
        %v712 = vpop.f32.mrf.mxu0
        %v713 = vpop.f32.mrf.mxu0
        %714 = vdwg.mxu0
        %vm715 = vcmask 130048
        %v716 = vsel %vm715, %v710, -inf
        %717 = vmax.xlane.f32.xlu0 %v716
        %v718 = vpop.xlane.xlu0 %717
        %v719 = vsub.f32 %v710, %v718
        %v720 = vmul.f32 %v719, 1.442695
        %v721 = vpow.pop %v720
        %v722 = vsel %vm715, %v721, 0.0
        %723 = vadd.xlane.f32.xlu0 %v722
        %v724 = vpop.xlane.xlu0 %723
        %v725 = vrcp.pop %v724
        %v726 = vmul.f32 %v721, %v725
        %v727 = vpack.c.bf16 %v726, %v726
        %729 = vrot.lane.b32.xlu0 %v667, 96
        %v730 = vpop.permute.xlu0 %729
        %v733 = vsel %vm715, %v727, 0
        %735 = vmatprep.subr.bf16.mxu0 0
        %736 = vmatpush1.bf16.msra.mxu0 0
        %737 = vmatprep.subr.bf16.mxu0 0
        %738 = vmatpush1.bf16.msra.mxu0 0
        %739 = vmatprep.subr.bf16.mxu0 0
        %740 = vmatpush1.bf16.msra.mxu0 0
        %741 = vmatprep.subr.bf16.mxu0 0
        %742 = vmatpush1.bf16.msra.mxu0 0
        %743 = vmatprep.subr.bf16.mxu0 0
        %744 = vmatpush1.bf16.msra.mxu0 0
        %745 = vmatprep.subr.bf16.mxu0 0
        %746 = vmatpush1.bf16.msra.mxu0 0
        %747 = vmatprep.subr.bf16.mxu0 0
        %748 = vmatpush1.bf16.msra.mxu0 0
        %749 = vmatprep.subr.bf16.mxu0 0
        %750 = vmatpush1.bf16.msra.mxu0 %v730
        %751 = vmatprep.subr.bf16.mxu0 0
        %752 = vmatpush2.bf16.msra.mxu0 0
        %753 = vmatprep.subr.bf16.mxu0 0
        %754 = vmatpush2.bf16.msra.mxu0 0
        %755 = vmatprep.subr.bf16.mxu0 0
        %756 = vmatpush2.bf16.msra.mxu0 0
        %757 = vmatprep.subr.bf16.mxu0 0
        %758 = vmatpush2.bf16.msra.mxu0 0
        %759 = vmatprep.subr.bf16.mxu0 0
        %760 = vmatpush2.bf16.msra.mxu0 0
        %761 = vmatprep.subr.bf16.mxu0 0
        %762 = vmatpush2.bf16.msra.mxu0 0
        %763 = vmatprep.subr.bf16.mxu0 0
        %764 = vmatpush2.bf16.msra.mxu0 0
        %765 = vmatprep.subr.bf16.mxu0 0
        %766 = vmatpush2.bf16.msra.mxu0 0
        %767 = vmatprep.mubr.bf16.mxu0 0
        %768 = vmatmul.mubr.bf16.gmra.mxu0 %v733
        %v769 = vpop.f32.mrf.mxu0
        %v770 = vadd.f32 0.0, %v769
        %v771 = vpop.f32.mrf.mxu0
        %v772 = vpop.f32.mrf.mxu0
        %v773 = vpop.f32.mrf.mxu0
        %774 = vdwg.mxu0
        %775 = vst.msk [vmem:[#allocation2] sm:$0xff] %vm668, %v770
        %777 = vrot.lane.b32.xlu0 %v666, 120
        %v778 = vpop.permute.xlu0 %777
        %779 = vrot.lane.b32.xlu0 %v667, 120
        %v780 = vpop.permute.xlu0 %779
        %v782 = vsel %vm668, %v778, 0
        %v785 = vsel %vm668, %v780, 0
        %787 = vmatprep.subr.bf16.mxu0 0
        %788 = vmatpush1.bf16.xpose.msra.mxu0 0
        %789 = vmatprep.subr.bf16.mxu0 0
        %790 = vmatpush1.bf16.xpose.msra.mxu0 0
        %791 = vmatprep.subr.bf16.mxu0 0
        %792 = vmatpush1.bf16.xpose.msra.mxu0 0
        %793 = vmatprep.subr.bf16.mxu0 0
        %794 = vmatpush1.bf16.xpose.msra.mxu0 0
        %795 = vmatprep.subr.bf16.mxu0 0
        %796 = vmatpush1.bf16.xpose.msra.mxu0 0
        %797 = vmatprep.subr.bf16.mxu0 0
        %798 = vmatpush1.bf16.xpose.msra.mxu0 0
        %799 = vmatprep.subr.bf16.mxu0 0
        %800 = vmatpush1.bf16.xpose.msra.mxu0 0
        %801 = vmatprep.subr.bf16.mxu0 0
        %802 = vmatpush1.bf16.xpose.msra.mxu0 %v785
        %803 = vmatprep.subr.bf16.mxu0 0
        %804 = vmatpush2.bf16.xpose.msra.mxu0 0
        %805 = vmatprep.subr.bf16.mxu0 0
        %806 = vmatpush2.bf16.xpose.msra.mxu0 0
        %807 = vmatprep.subr.bf16.mxu0 0
        %808 = vmatpush2.bf16.xpose.msra.mxu0 0
        %809 = vmatprep.subr.bf16.mxu0 0
        %810 = vmatpush2.bf16.xpose.msra.mxu0 0
        %811 = vmatprep.subr.bf16.mxu0 0
        %812 = vmatpush2.bf16.xpose.msra.mxu0 0
        %813 = vmatprep.subr.bf16.mxu0 0
        %814 = vmatpush2.bf16.xpose.msra.mxu0 0
        %815 = vmatprep.subr.bf16.mxu0 0
        %816 = vmatpush2.bf16.xpose.msra.mxu0 0
        %817 = vmatprep.subr.bf16.mxu0 0
        %818 = vmatpush2.bf16.xpose.msra.mxu0 0
        %819 = vmatprep.mubr.bf16.mxu0 0
        %820 = vmatmul.mubr.bf16.gmra.mxu0 %v782
        %v821 = vpop.f32.mrf.mxu0
        %v822 = vadd.f32 %v665, %v821
        %v823 = vpop.f32.mrf.mxu0
        %v824 = vpop.f32.mrf.mxu0
        %v825 = vpop.f32.mrf.mxu0
        %826 = vdwg.mxu0
        %v827 = vsel %vm715, %v822, -inf
        %828 = vmax.xlane.f32.xlu0 %v827
        %v829 = vpop.xlane.xlu0 %828
        %v830 = vsub.f32 %v822, %v829
        %v831 = vmul.f32 %v830, 1.442695
        %v832 = vpow.pop %v831
        %v833 = vsel %vm715, %v832, 0.0
        %834 = vadd.xlane.f32.xlu0 %v833
        %v835 = vpop.xlane.xlu0 %834
        %v836 = vrcp.pop %v835
        %v837 = vmul.f32 %v832, %v836
        %v838 = vpack.c.bf16 %v837, %v837
        %839 = vrot.lane.b32.xlu0 %v667, 88
        %v840 = vpop.permute.xlu0 %839
        %v843 = vsel %vm715, %v838, 0
        %845 = vmatprep.subr.bf16.mxu0 0
        %846 = vmatpush1.bf16.msra.mxu0 0
        %847 = vmatprep.subr.bf16.mxu0 0
        %848 = vmatpush1.bf16.msra.mxu0 0
        %849 = vmatprep.subr.bf16.mxu0 0
        %850 = vmatpush1.bf16.msra.mxu0 0
        %851 = vmatprep.subr.bf16.mxu0 0
        %852 = vmatpush1.bf16.msra.mxu0 0
        %853 = vmatprep.subr.bf16.mxu0 0
        %854 = vmatpush1.bf16.msra.mxu0 0
        %855 = vmatprep.subr.bf16.mxu0 0
        %856 = vmatpush1.bf16.msra.mxu0 0
        %857 = vmatprep.subr.bf16.mxu0 0
        %858 = vmatpush1.bf16.msra.mxu0 0
        %859 = vmatprep.subr.bf16.mxu0 0
        %860 = vmatpush1.bf16.msra.mxu0 %v840
        %861 = vmatprep.subr.bf16.mxu0 0
        %862 = vmatpush2.bf16.msra.mxu0 0
        %863 = vmatprep.subr.bf16.mxu0 0
        %864 = vmatpush2.bf16.msra.mxu0 0
        %865 = vmatprep.subr.bf16.mxu0 0
        %866 = vmatpush2.bf16.msra.mxu0 0
        %867 = vmatprep.subr.bf16.mxu0 0
        %868 = vmatpush2.bf16.msra.mxu0 0
        %869 = vmatprep.subr.bf16.mxu0 0
        %870 = vmatpush2.bf16.msra.mxu0 0
        %871 = vmatprep.subr.bf16.mxu0 0
        %872 = vmatpush2.bf16.msra.mxu0 0
        %873 = vmatprep.subr.bf16.mxu0 0
        %874 = vmatpush2.bf16.msra.mxu0 0
        %875 = vmatprep.subr.bf16.mxu0 0
        %876 = vmatpush2.bf16.msra.mxu0 0
        %877 = vmatprep.mubr.bf16.mxu0 0
        %878 = vmatmul.mubr.bf16.gmra.mxu0 %v843
        %v879 = vpop.f32.mrf.mxu0
        %v880 = vadd.f32 0.0, %v879
        %v881 = vpop.f32.mrf.mxu0
        %v882 = vpop.f32.mrf.mxu0
        %v883 = vpop.f32.mrf.mxu0
        %884 = vdwg.mxu0
        %886 = vrot.lane.b32.xlu0 %v880, 8
        %v887 = vpop.permute.xlu0 %886
        %vm889 = vcmask 130112
        %890 = vst.msk [vmem:[#allocation2] sm:$0xff] %vm889, %v887
        %891 = vrot.lane.b32.xlu0 %v666, 112
        %v892 = vpop.permute.xlu0 %891
        %893 = vrot.lane.b32.xlu0 %v667, 112
        %v894 = vpop.permute.xlu0 %893
        %v896 = vsel %vm668, %v892, 0
        %v899 = vsel %vm668, %v894, 0
        %901 = vmatprep.subr.bf16.mxu0 0
        %902 = vmatpush1.bf16.xpose.msra.mxu0 0
        %903 = vmatprep.subr.bf16.mxu0 0
        %904 = vmatpush1.bf16.xpose.msra.mxu0 0
        %905 = vmatprep.subr.bf16.mxu0 0
        %906 = vmatpush1.bf16.xpose.msra.mxu0 0
        %907 = vmatprep.subr.bf16.mxu0 0
        %908 = vmatpush1.bf16.xpose.msra.mxu0 0
        %909 = vmatprep.subr.bf16.mxu0 0
        %910 = vmatpush1.bf16.xpose.msra.mxu0 0
        %911 = vmatprep.subr.bf16.mxu0 0
        %912 = vmatpush1.bf16.xpose.msra.mxu0 0
        %913 = vmatprep.subr.bf16.mxu0 0
        %914 = vmatpush1.bf16.xpose.msra.mxu0 0
        %915 = vmatprep.subr.bf16.mxu0 0
        %916 = vmatpush1.bf16.xpose.msra.mxu0 %v899
        %917 = vmatprep.subr.bf16.mxu0 0
        %918 = vmatpush2.bf16.xpose.msra.mxu0 0
        %919 = vmatprep.subr.bf16.mxu0 0
        %920 = vmatpush2.bf16.xpose.msra.mxu0 0
        %921 = vmatprep.subr.bf16.mxu0 0
        %922 = vmatpush2.bf16.xpose.msra.mxu0 0
        %923 = vmatprep.subr.bf16.mxu0 0
        %924 = vmatpush2.bf16.xpose.msra.mxu0 0
        %925 = vmatprep.subr.bf16.mxu0 0
        %926 = vmatpush2.bf16.xpose.msra.mxu0 0
        %927 = vmatprep.subr.bf16.mxu0 0
        %928 = vmatpush2.bf16.xpose.msra.mxu0 0
        %929 = vmatprep.subr.bf16.mxu0 0
        %930 = vmatpush2.bf16.xpose.msra.mxu0 0
        %931 = vmatprep.subr.bf16.mxu0 0
        %932 = vmatpush2.bf16.xpose.msra.mxu0 0
        %933 = vmatprep.mubr.bf16.mxu0 0
        %934 = vmatmul.mubr.bf16.gmra.mxu0 %v896
        %v935 = vpop.f32.mrf.mxu0
        %v936 = vadd.f32 %v665, %v935
        %v937 = vpop.f32.mrf.mxu0
        %v938 = vpop.f32.mrf.mxu0
        %v939 = vpop.f32.mrf.mxu0
        %940 = vdwg.mxu0
        %v941 = vsel %vm715, %v936, -inf
        %942 = vmax.xlane.f32.xlu0 %v941
        %v943 = vpop.xlane.xlu0 %942
        %v944 = vsub.f32 %v936, %v943
        %v945 = vmul.f32 %v944, 1.442695
        %v946 = vpow.pop %v945
        %v947 = vsel %vm715, %v946, 0.0
        %948 = vadd.xlane.f32.xlu0 %v947
        %v949 = vpop.xlane.xlu0 %948
        %v950 = vrcp.pop %v949
        %v951 = vmul.f32 %v946, %v950
        %v952 = vpack.c.bf16 %v951, %v951
        %953 = vrot.lane.b32.xlu0 %v667, 80
        %v954 = vpop.permute.xlu0 %953
        %v957 = vsel %vm715, %v952, 0
        %959 = vmatprep.subr.bf16.mxu0 0
        %960 = vmatpush1.bf16.msra.mxu0 0
        %961 = vmatprep.subr.bf16.mxu0 0
        %962 = vmatpush1.bf16.msra.mxu0 0
        %963 = vmatprep.subr.bf16.mxu0 0
        %964 = vmatpush1.bf16.msra.mxu0 0
        %965 = vmatprep.subr.bf16.mxu0 0
        %966 = vmatpush1.bf16.msra.mxu0 0
        %967 = vmatprep.subr.bf16.mxu0 0
        %968 = vmatpush1.bf16.msra.mxu0 0
        %969 = vmatprep.subr.bf16.mxu0 0
        %970 = vmatpush1.bf16.msra.mxu0 0
        %971 = vmatprep.subr.bf16.mxu0 0
        %972 = vmatpush1.bf16.msra.mxu0 0
        %973 = vmatprep.subr.bf16.mxu0 0
        %974 = vmatpush1.bf16.msra.mxu0 %v954
        %975 = vmatprep.subr.bf16.mxu0 0
        %976 = vmatpush2.bf16.msra.mxu0 0
        %977 = vmatprep.subr.bf16.mxu0 0
        %978 = vmatpush2.bf16.msra.mxu0 0
        %979 = vmatprep.subr.bf16.mxu0 0
        %980 = vmatpush2.bf16.msra.mxu0 0
        %981 = vmatprep.subr.bf16.mxu0 0
        %982 = vmatpush2.bf16.msra.mxu0 0
        %983 = vmatprep.subr.bf16.mxu0 0
        %984 = vmatpush2.bf16.msra.mxu0 0
        %985 = vmatprep.subr.bf16.mxu0 0
        %986 = vmatpush2.bf16.msra.mxu0 0
        %987 = vmatprep.subr.bf16.mxu0 0
        %988 = vmatpush2.bf16.msra.mxu0 0
        %989 = vmatprep.subr.bf16.mxu0 0
        %990 = vmatpush2.bf16.msra.mxu0 0
        %991 = vmatprep.mubr.bf16.mxu0 0
        %992 = vmatmul.mubr.bf16.gmra.mxu0 %v957
        %v993 = vpop.f32.mrf.mxu0
        %v994 = vadd.f32 0.0, %v993
        %v995 = vpop.f32.mrf.mxu0
        %v996 = vpop.f32.mrf.mxu0
        %v997 = vpop.f32.mrf.mxu0
        %998 = vdwg.mxu0
        %1000 = vrot.lane.b32.xlu0 %v994, 16
        %v1001 = vpop.permute.xlu0 %1000
        %vm1003 = vcmask 195712
        %1004 = vst.msk [vmem:[#allocation2] sm:$0xff] %vm1003, %v1001
        %1005 = vrot.lane.b32.xlu0 %v666, 104
        %v1006 = vpop.permute.xlu0 %1005
        %1007 = vrot.lane.b32.xlu0 %v667, 104
        %v1008 = vpop.permute.xlu0 %1007
        %v1010 = vsel %vm668, %v1006, 0
        %v1013 = vsel %vm668, %v1008, 0
        %1015 = vmatprep.subr.bf16.mxu0 0
        %1016 = vmatpush1.bf16.xpose.msra.mxu0 0
        %1017 = vmatprep.subr.bf16.mxu0 0
        %1018 = vmatpush1.bf16.xpose.msra.mxu0 0
        %1019 = vmatprep.subr.bf16.mxu0 0
        %1020 = vmatpush1.bf16.xpose.msra.mxu0 0
        %1021 = vmatprep.subr.bf16.mxu0 0
        %1022 = vmatpush1.bf16.xpose.msra.mxu0 0
        %1023 = vmatprep.subr.bf16.mxu0 0
        %1024 = vmatpush1.bf16.xpose.msra.mxu0 0
        %1025 = vmatprep.subr.bf16.mxu0 0
        %1026 = vmatpush1.bf16.xpose.msra.mxu0 0
        %1027 = vmatprep.subr.bf16.mxu0 0
        %1028 = vmatpush1.bf16.xpose.msra.mxu0 0
        %1029 = vmatprep.subr.bf16.mxu0 0
        %1030 = vmatpush1.bf16.xpose.msra.mxu0 %v1013
        %1031 = vmatprep.subr.bf16.mxu0 0
        %1032 = vmatpush2.bf16.xpose.msra.mxu0 0
        %1033 = vmatprep.subr.bf16.mxu0 0
        %1034 = vmatpush2.bf16.xpose.msra.mxu0 0
        %1035 = vmatprep.subr.bf16.mxu0 0
        %1036 = vmatpush2.bf16.xpose.msra.mxu0 0
        %1037 = vmatprep.subr.bf16.mxu0 0
        %1038 = vmatpush2.bf16.xpose.msra.mxu0 0
        %1039 = vmatprep.subr.bf16.mxu0 0
        %1040 = vmatpush2.bf16.xpose.msra.mxu0 0
        %1041 = vmatprep.subr.bf16.mxu0 0
        %1042 = vmatpush2.bf16.xpose.msra.mxu0 0
        %1043 = vmatprep.subr.bf16.mxu0 0
        %1044 = vmatpush2.bf16.xpose.msra.mxu0 0
        %1045 = vmatprep.subr.bf16.mxu0 0
        %1046 = vmatpush2.bf16.xpose.msra.mxu0 0
        %1047 = vmatprep.mubr.bf16.mxu0 0
        %1048 = vmatmul.mubr.bf16.gmra.mxu0 %v1010
        %v1049 = vpop.f32.mrf.mxu0
        %v1050 = vadd.f32 %v665, %v1049
        %v1051 = vpop.f32.mrf.mxu0
        %v1052 = vpop.f32.mrf.mxu0
        %v1053 = vpop.f32.mrf.mxu0
        %1054 = vdwg.mxu0
        %v1055 = vsel %vm715, %v1050, -inf
        %1056 = vmax.xlane.f32.xlu0 %v1055
        %v1057 = vpop.xlane.xlu0 %1056
        %v1058 = vsub.f32 %v1050, %v1057
        %v1059 = vmul.f32 %v1058, 1.442695
        %v1060 = vpow.pop %v1059
        %v1061 = vsel %vm715, %v1060, 0.0
        %1062 = vadd.xlane.f32.xlu0 %v1061
        %v1063 = vpop.xlane.xlu0 %1062
        %v1064 = vrcp.pop %v1063
        %v1065 = vmul.f32 %v1060, %v1064
        %v1066 = vpack.c.bf16 %v1065, %v1065
        %1067 = vrot.lane.b32.xlu0 %v667, 72
        %v1068 = vpop.permute.xlu0 %1067
        %v1071 = vsel %vm715, %v1066, 0
        %1073 = vmatprep.subr.bf16.mxu0 0
        %1074 = vmatpush1.bf16.msra.mxu0 0
        %1075 = vmatprep.subr.bf16.mxu0 0
        %1076 = vmatpush1.bf16.msra.mxu0 0
        %1077 = vmatprep.subr.bf16.mxu0 0
        %1078 = vmatpush1.bf16.msra.mxu0 0
        %1079 = vmatprep.subr.bf16.mxu0 0
        %1080 = vmatpush1.bf16.msra.mxu0 0
        %1081 = vmatprep.subr.bf16.mxu0 0
        %1082 = vmatpush1.bf16.msra.mxu0 0
        %1083 = vmatprep.subr.bf16.mxu0 0
        %1084 = vmatpush1.bf16.msra.mxu0 0
        %1085 = vmatprep.subr.bf16.mxu0 0
        %1086 = vmatpush1.bf16.msra.mxu0 0
        %1087 = vmatprep.subr.bf16.mxu0 0
        %1088 = vmatpush1.bf16.msra.mxu0 %v1068
        %1089 = vmatprep.subr.bf16.mxu0 0
        %1090 = vmatpush2.bf16.msra.mxu0 0
        %1091 = vmatprep.subr.bf16.mxu0 0
        %1092 = vmatpush2.bf16.msra.mxu0 0
        %1093 = vmatprep.subr.bf16.mxu0 0
        %1094 = vmatpush2.bf16.msra.mxu0 0
        %1095 = vmatprep.subr.bf16.mxu0 0
        %1096 = vmatpush2.bf16.msra.mxu0 0
        %1097 = vmatprep.subr.bf16.mxu0 0
        %1098 = vmatpush2.bf16.msra.mxu0 0
        %1099 = vmatprep.subr.bf16.mxu0 0
        %1100 = vmatpush2.bf16.msra.mxu0 0
        %1101 = vmatprep.subr.bf16.mxu0 0
        %1102 = vmatpush2.bf16.msra.mxu0 0
        %1103 = vmatprep.subr.bf16.mxu0 0
        %1104 = vmatpush2.bf16.msra.mxu0 0
        %1105 = vmatprep.mubr.bf16.mxu0 0
        %1106 = vmatmul.mubr.bf16.gmra.mxu0 %v1071
        %v1107 = vpop.f32.mrf.mxu0
        %v1108 = vadd.f32 0.0, %v1107
        %v1109 = vpop.f32.mrf.mxu0
        %v1110 = vpop.f32.mrf.mxu0
        %v1111 = vpop.f32.mrf.mxu0
        %1112 = vdwg.mxu0
        %1114 = vrot.lane.b32.xlu0 %v1108, 24
        %v1115 = vpop.permute.xlu0 %1114
        %vm1117 = vcmask 261312
        %1118 = vst.msk [vmem:[#allocation2] sm:$0xff] %vm1117, %v1115
        %v1119 = vld [vmem:[#allocation2] sm:$0xff]
        %v1120 = vpack.c.bf16 %v1119, %v1119
        %v1121 = vld [vmem:[%s9] sm:$0xf]
        %v1122 = vld [vmem:[%s9 + $0x4] sm:$0xf]
        %v1123 = vld [vmem:[%s9 + $0x8] sm:$0xf]
        %v1124 = vld [vmem:[%s9 + $0xc] sm:$0xf]
        %v1125 = vld [vmem:[#allocation10] sm:$0x1]
        %v1127 = vlaneseq
        %v1128 = vshrl.u32 %v1127, 7
        %v1129 = vsub.s32 0, %v1128
        %v1130 = vrot.slane %v1125, %v1129
        %v1136 = vunpack.c.l.b16 %v1121
        %v1137 = vunpack.c.l.b16 %v1122
        %v1138 = vunpack.c.l.b16 %v1123
        %v1139 = vunpack.c.l.b16 %v1124
        %v1140 = vpack.c.b16 %v1137, %v1136
        %v1141 = vpack.c.b16 %v1139, %v1138
        %v1145 = vsel %vm488, %v1120, 0
        %1147 = vmatprep.subr.bf16.mxu0 0
        %1148 = vmatpush1.bf16.msra.mxu0 0
        %1149 = vmatprep.subr.bf16.mxu0 0
        %1150 = vmatpush1.bf16.msra.mxu0 0
        %1151 = vmatprep.subr.bf16.mxu0 0
        %1152 = vmatpush1.bf16.msra.mxu0 0
        %1153 = vmatprep.subr.bf16.mxu0 0
        %1154 = vmatpush1.bf16.msra.mxu0 0
        %1155 = vmatprep.subr.bf16.mxu0 0
        %1156 = vmatpush1.bf16.msra.mxu0 0
        %1157 = vmatprep.subr.bf16.mxu0 0
        %1158 = vmatpush1.bf16.msra.mxu0 0
        %1159 = vmatprep.subr.bf16.mxu0 0
        %1160 = vmatpush1.bf16.msra.mxu0 %v1141
        %1161 = vmatprep.subr.bf16.mxu0 0
        %1162 = vmatpush1.bf16.msra.mxu0 %v1140
        %1163 = vmatprep.subr.bf16.mxu0 0
        %1164 = vmatpush2.bf16.msra.mxu0 0
        %1165 = vmatprep.subr.bf16.mxu0 0
        %1166 = vmatpush2.bf16.msra.mxu0 0
        %1167 = vmatprep.subr.bf16.mxu0 0
        %1168 = vmatpush2.bf16.msra.mxu0 0
        %1169 = vmatprep.subr.bf16.mxu0 0
        %1170 = vmatpush2.bf16.msra.mxu0 0
        %1171 = vmatprep.subr.bf16.mxu0 0
        %1172 = vmatpush2.bf16.msra.mxu0 0
        %1173 = vmatprep.subr.bf16.mxu0 0
        %1174 = vmatpush2.bf16.msra.mxu0 0
        %1175 = vmatprep.subr.bf16.mxu0 0
        %1176 = vmatpush2.bf16.msra.mxu0 0
        %1177 = vmatprep.subr.bf16.mxu0 0
        %1178 = vmatpush2.bf16.msra.mxu0 0
        %1179 = vmatprep.mubr.bf16.mxu0 0
        %1180 = vmatmul.mubr.bf16.gmra.mxu0 %v1145
        %v1181 = vpop.f32.mrf.mxu0
        %v1182 = vadd.f32 %v1130, %v1181
        %v1183 = vpop.f32.mrf.mxu0
        %v1184 = vpop.f32.mrf.mxu0
        %v1185 = vpop.f32.mrf.mxu0
        %1186 = vdwg.mxu0
        %v1187 = vadd.f32 %v483, %v1182
        %1188 = vst.msk [vmem:[%s481] sm:$0xff] %vm488, %v1187
        %p1189 = scmp.lt.s32.totalorder %s25, 1
        %s1190 = scalar_select %p1189, %s25, 1
        %s1191 = smul.addr %s1190, 8
        %s1192 = scalar_lea.vmem %s11, %s1191
        // Predicated region
        $region85: #{decoder_layer.4} parent=63 // pred_check
          %p1193 = pneg %p289
        $region86: #{decoder_layer.4} parent=63 // pred_check_branch
          %1195 = sbr.rel (%p1193) target = $region88
        $region87: #{decoder_layer.4} parent=63 // pred_region
          _
        $region88: #{decoder_layer.4} parent=63 // pred_fallthru
          _
      $region64: #{decoder_layer.4} parent=5 // pred_fallthru
        _
      %p1196 = scmp.le.s32.totalorder 2, %s20
      // Predicated region
      $region89: #{decoder_layer.4} parent=5 // pred_check
        %p1197 = pneg %p1196
      $region90: #{decoder_layer.4} parent=5 // pred_check_branch
        %1199 = sbr.rel (%p1197) target = $region92
      $region91: #{decoder_layer.4} parent=5 // pred_region
        %s1200 = ssub.s32 %s20, 2
        // Predicated region
        $region93: #{decoder_layer.4} parent=91 // pred_check
          %p1201 = pneg %p295
        $region94: #{decoder_layer.4} parent=91 // pred_check_branch
          %1203 = sbr.rel (%p1201) target = $region96
        $region95: #{decoder_layer.4} parent=91 // pred_region
          %p1204 = scmp.lt.s32.totalorder %s26, 1
          %s1205 = scalar_select %p1204, %s26, 1
          %s1206 = smul.addr %s1205, 8
          %s1207 = scalar_lea.vmem %s11, %s1206
        $region96: #{decoder_layer.4} parent=91 // pred_fallthru
          _
      $region92: #{decoder_layer.4} parent=5 // pred_fallthru
        _
    $region6: #{decoder_layer.4} parent=1 // loop_footer
      %s24 = sadd.s32 1, %s20
    $region7: #{decoder_layer.4} parent=1 // loop_footer_branch
      %19 = sbr.rel target = $region3
    $region8: #{decoder_layer.4} parent=1 // loop_exit
      _
    %1208 = vsyncpa [#allocation4], 1
    %s1209 = scalar_lea.sflag [#allocation4], 1
    %1210 = vsyncpa %s1209, 1
    %1211 = vsyncpa [#allocation6], 1
    %1212 = vsyncpa [#allocation9], 1

// kernel: decoder_layer.3
$region0: #{decoder_layer.3}
  #allocation0 [shape = 'u32[]', space=smem, size = 0x4, offset = 0x4, fixed_abs, tag = 'smem constant byte address 0x4 - core index']
  #allocation1 [shape = 'u32[144,128]{1,0:T(1,128)}', space=vmem, size = 0x12000, scoped, tag = 'internal scratch']
  #allocation2 [shape = 'f32[8,32]{1,0:T(8,128)}', space=vmem, size = 0x1000, scoped, tag = 'scratch operand']
  %s0 = inlined_call_operand.vmem [shape: f32[2,8,32], index: 0, kind: input, shape index: {}]
  %s1 = inlined_call_operand.hbm [shape: f32[1,32], index: 1, kind: input, shape index: {}]
  %s2 = inlined_call_operand.hbm [shape: f32[1,32], index: 2, kind: input, shape index: {}]
  %s3 = inlined_call_operand.vmem [shape: s8[2,8,8], index: 3, kind: input, shape index: {}]
  %s4 = inlined_call_operand.hbm [shape: bf16[32,96], index: 4, kind: input, shape index: {}]
  %s5 = inlined_call_operand.hbm [shape: f32[1,96], index: 5, kind: input, shape index: {}]
  %s6 = inlined_call_operand.hbm [shape: bf16[32,32], index: 6, kind: input, shape index: {}]
  %s7 = inlined_call_operand.hbm [shape: f32[1,32], index: 7, kind: input, shape index: {}]
  %s8 = inlined_call_operand.vmem [shape: f32[2,8,32], index: 8, kind: output, shape index: {}]
  %s9 = sld [smem:[#allocation0]]
  $region89: #{decoder_layer.3} parent=0
    _
  %s11 = ssub.s32 1, %s9
  %s12 = scalar_select 0, %s11, %s9
  $region1: #{decoder_layer.3} parent=0
    #allocation3 [shape = 'u8[512]{0}', space=vmem, size = 0x400, scoped, tag = 'input window, operand 1, single buffered']
    #allocation4 [shape = 's32[2]{0}', space=sflag, size = 0x8, scoped, tag = 'scoped memory for decoder_layer.3']
    #allocation5 [shape = 'u8[512]{0}', space=vmem, size = 0x400, scoped, tag = 'input window, operand 2, single buffered']
    #allocation6 [shape = 's32[1]{0}', space=sflag, size = 0x4, scoped, tag = 'scoped memory for decoder_layer.3']
    #allocation7 [shape = 'u8[8192]{0}', space=vmem, size = 0x2000, scoped, tag = 'input window, operand 4, single buffered']
    #allocation8 [shape = 'u8[512]{0}', space=vmem, size = 0x400, scoped, tag = 'input window, operand 5, single buffered']
    #allocation9 [shape = 's32[1]{0}', space=sflag, size = 0x4, scoped, tag = 'scoped memory for decoder_layer.3']
    #allocation10 [shape = 'u8[8192]{0}', space=vmem, size = 0x2000, scoped, tag = 'input window, operand 6, single buffered']
    #allocation11 [shape = 'u8[512]{0}', space=vmem, size = 0x400, scoped, tag = 'input window, operand 7, single buffered']
    #allocation12 [shape = 's32[1]{0}', space=sflag, size = 0x4, scoped, tag = 'scoped memory for decoder_layer.3']
    %13 = vsyncpa [#allocation4], 0
    %14 = vsyncpa [#allocation6], 0
    %15 = vsyncpa [#allocation9], 0
    %16 = vsyncpa [#allocation12], 0
    loop: start=0, step=1, limit=4
    $region2: #{decoder_layer.3} parent=1 // loop_pre_header
      _
    $region3: #{decoder_layer.3} parent=1 // loop_header
      %s18 = sphi 0, %s22
      %p19 = scmp.ge.s32.totalorder %s18, 4
      %s28 = sphi 0, %s30
      %s31 = sphi 0, %s28
      %s32 = sphi 0, %s31
      %s48 = sphi 0, %s32
      %s52 = sphi 0, %s52
      %s54 = sphi 0, %s52
      %s55 = sphi 0, %s54
      %s69 = sphi 0, %s55
      %s73 = sphi 0, %s73
      %s75 = sphi 0, %s73
      %s76 = sphi 0, %s75
      %s90 = sphi 0, %s76
      %s96 = sphi 0, %s98
      %s99 = sphi 0, %s96
      %s100 = sphi 0, %s99
      %s116 = sphi 0, %s100
      %s120 = sphi 0, %s120
      %s122 = sphi 0, %s120
      %s123 = sphi 0, %s122
      %s137 = sphi 0, %s123
      %s141 = sphi 0, %s141
      %s143 = sphi 0, %s141
      %s144 = sphi 0, %s143
      %s158 = sphi 0, %s144
      %s162 = sphi 0, %s162
      %s164 = sphi 0, %s162
      %s165 = sphi 0, %s164
      %s179 = sphi 0, %s165
      %s183 = sphi 0, %s183
      %s185 = sphi 0, %s183
      %s186 = sphi 0, %s185
      %s200 = sphi 0, %s186
      %s206 = sphi 0, %s208
      %s209 = sphi 0, %s206
      %s210 = sphi 0, %s209
      %s226 = sphi 0, %s210
    $region4: #{decoder_layer.3} parent=1 // loop_header_branch
      %21 = sbr.rel (%p19) target = $region8
    $region5: #{decoder_layer.3} parent=1 // loop_body
      %s23 = ssub.s32 %s18, 1
      %s24 = ssub.s32 %s18, 2
      %s25 = sadd.s32 %s18, 1
      %s26 = ssub.s32 %s18, %s25
      %p27 = scmp.eq.s32.totalorder %s26, 0
      %s29 = sadd.s32 %s28, 1
      %s30 = scalar_select %p27, %s28, %s29
      %p33 = pneg %p27
      %p34 = scmp.eq.s32.totalorder %s18, 1
      %p35 = por %p33, %p34
      %p36 = scmp.ne.s32.totalorder %s28, %s31
      %p37 = scmp.eq.s32.totalorder %s18, 0
      %p38 = por %p36, %p37
      %p39 = scmp.ne.s32.totalorder %s28, %s31
      %p40 = scmp.eq.s32.totalorder %s23, 1
      %p41 = por %p39, %p40
      %p42 = scmp.ne.s32.totalorder %s31, %s32
      %p43 = scmp.eq.s32.totalorder %s23, 0
      %p44 = por %p42, %p43
      %p45 = scmp.ne.s32.totalorder %s31, %s32
      %p46 = scmp.eq.s32.totalorder %s24, 1
      %p47 = por %p45, %p46
      %p49 = scmp.ne.s32.totalorder %s32, %s48
      %p50 = scmp.eq.s32.totalorder %s24, 0
      %p51 = por %p49, %p50
      %s53 = sadd.s32 %s52, 1
      %p56 = scmp.eq.s32.totalorder %s18, 1
      %p57 = scmp.ne.s32.totalorder %s52, %s54
      %p58 = scmp.eq.s32.totalorder %s18, 0
      %p59 = por %p57, %p58
      %p60 = scmp.ne.s32.totalorder %s52, %s54
      %p61 = scmp.eq.s32.totalorder %s23, 1
      %p62 = por %p60, %p61
      %p63 = scmp.ne.s32.totalorder %s54, %s55
      %p64 = scmp.eq.s32.totalorder %s23, 0
      %p65 = por %p63, %p64
      %p66 = scmp.ne.s32.totalorder %s54, %s55
      %p67 = scmp.eq.s32.totalorder %s24, 1
      %p68 = por %p66, %p67
      %p70 = scmp.ne.s32.totalorder %s55, %s69
      %p71 = scmp.eq.s32.totalorder %s24, 0
      %p72 = por %p70, %p71
      %s74 = sadd.s32 %s73, 1
      %p77 = scmp.eq.s32.totalorder %s18, 1
      %p78 = scmp.ne.s32.totalorder %s73, %s75
      %p79 = scmp.eq.s32.totalorder %s18, 0
      %p80 = por %p78, %p79
      %p81 = scmp.ne.s32.totalorder %s73, %s75
      %p82 = scmp.eq.s32.totalorder %s23, 1
      %p83 = por %p81, %p82
      %p84 = scmp.ne.s32.totalorder %s75, %s76
      %p85 = scmp.eq.s32.totalorder %s23, 0
      %p86 = por %p84, %p85
      %p87 = scmp.ne.s32.totalorder %s75, %s76
      %p88 = scmp.eq.s32.totalorder %s24, 1
      %p89 = por %p87, %p88
      %p91 = scmp.ne.s32.totalorder %s76, %s90
      %p92 = scmp.eq.s32.totalorder %s24, 0
      %p93 = por %p91, %p92
      %s94 = ssub.s32 %s18, %s25
      %p95 = scmp.eq.s32.totalorder %s94, 0
      %s97 = sadd.s32 %s96, 1
      %s98 = scalar_select %p95, %s96, %s97
      %p101 = pneg %p95
      %p102 = scmp.eq.s32.totalorder %s18, 1
      %p103 = por %p101, %p102
      %p104 = scmp.ne.s32.totalorder %s96, %s99
      %p105 = scmp.eq.s32.totalorder %s18, 0
      %p106 = por %p104, %p105
      %p107 = scmp.ne.s32.totalorder %s96, %s99
      %p108 = scmp.eq.s32.totalorder %s23, 1
      %p109 = por %p107, %p108
      %p110 = scmp.ne.s32.totalorder %s99, %s100
      %p111 = scmp.eq.s32.totalorder %s23, 0
      %p112 = por %p110, %p111
      %p113 = scmp.ne.s32.totalorder %s99, %s100
      %p114 = scmp.eq.s32.totalorder %s24, 1
      %p115 = por %p113, %p114
      %p117 = scmp.ne.s32.totalorder %s100, %s116
      %p118 = scmp.eq.s32.totalorder %s24, 0
      %p119 = por %p117, %p118
      %s121 = sadd.s32 %s120, 1
      %p124 = scmp.eq.s32.totalorder %s18, 1
      %p125 = scmp.ne.s32.totalorder %s120, %s122
      %p126 = scmp.eq.s32.totalorder %s18, 0
      %p127 = por %p125, %p126
      %p128 = scmp.ne.s32.totalorder %s120, %s122
      %p129 = scmp.eq.s32.totalorder %s23, 1
      %p130 = por %p128, %p129
      %p131 = scmp.ne.s32.totalorder %s122, %s123
      %p132 = scmp.eq.s32.totalorder %s23, 0
      %p133 = por %p131, %p132
      %p134 = scmp.ne.s32.totalorder %s122, %s123
      %p135 = scmp.eq.s32.totalorder %s24, 1
      %p136 = por %p134, %p135
      %p138 = scmp.ne.s32.totalorder %s123, %s137
      %p139 = scmp.eq.s32.totalorder %s24, 0
      %p140 = por %p138, %p139
      %s142 = sadd.s32 %s141, 1
      %p145 = scmp.eq.s32.totalorder %s18, 1
      %p146 = scmp.ne.s32.totalorder %s141, %s143
      %p147 = scmp.eq.s32.totalorder %s18, 0
      %p148 = por %p146, %p147
      %p149 = scmp.ne.s32.totalorder %s141, %s143
      %p150 = scmp.eq.s32.totalorder %s23, 1
      %p151 = por %p149, %p150
      %p152 = scmp.ne.s32.totalorder %s143, %s144
      %p153 = scmp.eq.s32.totalorder %s23, 0
      %p154 = por %p152, %p153
      %p155 = scmp.ne.s32.totalorder %s143, %s144
      %p156 = scmp.eq.s32.totalorder %s24, 1
      %p157 = por %p155, %p156
      %p159 = scmp.ne.s32.totalorder %s144, %s158
      %p160 = scmp.eq.s32.totalorder %s24, 0
      %p161 = por %p159, %p160
      %s163 = sadd.s32 %s162, 1
      %p166 = scmp.eq.s32.totalorder %s18, 1
      %p167 = scmp.ne.s32.totalorder %s162, %s164
      %p168 = scmp.eq.s32.totalorder %s18, 0
      %p169 = por %p167, %p168
      %p170 = scmp.ne.s32.totalorder %s162, %s164
      %p171 = scmp.eq.s32.totalorder %s23, 1
      %p172 = por %p170, %p171
      %p173 = scmp.ne.s32.totalorder %s164, %s165
      %p174 = scmp.eq.s32.totalorder %s23, 0
      %p175 = por %p173, %p174
      %p176 = scmp.ne.s32.totalorder %s164, %s165
      %p177 = scmp.eq.s32.totalorder %s24, 1
      %p178 = por %p176, %p177
      %p180 = scmp.ne.s32.totalorder %s165, %s179
      %p181 = scmp.eq.s32.totalorder %s24, 0
      %p182 = por %p180, %p181
      %s184 = sadd.s32 %s183, 1
      %p187 = scmp.eq.s32.totalorder %s18, 1
      %p188 = scmp.ne.s32.totalorder %s183, %s185
      %p189 = scmp.eq.s32.totalorder %s18, 0
      %p190 = por %p188, %p189
      %p191 = scmp.ne.s32.totalorder %s183, %s185
      %p192 = scmp.eq.s32.totalorder %s23, 1
      %p193 = por %p191, %p192
      %p194 = scmp.ne.s32.totalorder %s185, %s186
      %p195 = scmp.eq.s32.totalorder %s23, 0
      %p196 = por %p194, %p195
      %p197 = scmp.ne.s32.totalorder %s185, %s186
      %p198 = scmp.eq.s32.totalorder %s24, 1
      %p199 = por %p197, %p198
      %p201 = scmp.ne.s32.totalorder %s186, %s200
      %p202 = scmp.eq.s32.totalorder %s24, 0
      %p203 = por %p201, %p202
      %s204 = ssub.s32 %s18, %s25
      %p205 = scmp.eq.s32.totalorder %s204, 0
      %s207 = sadd.s32 %s206, 1
      %s208 = scalar_select %p205, %s206, %s207
      %p211 = pneg %p205
      %p212 = scmp.eq.s32.totalorder %s18, 1
      %p213 = por %p211, %p212
      %p214 = scmp.ne.s32.totalorder %s206, %s209
      %p215 = scmp.eq.s32.totalorder %s18, 0
      %p216 = por %p214, %p215
      %p217 = scmp.ne.s32.totalorder %s206, %s209
      %p218 = scmp.eq.s32.totalorder %s23, 1
      %p219 = por %p217, %p218
      %p220 = scmp.ne.s32.totalorder %s209, %s210
      %p221 = scmp.eq.s32.totalorder %s23, 0
      %p222 = por %p220, %p221
      %p223 = scmp.ne.s32.totalorder %s209, %s210
      %p224 = scmp.eq.s32.totalorder %s24, 1
      %p225 = por %p223, %p224
      %p227 = scmp.ne.s32.totalorder %s210, %s226
      %p228 = scmp.eq.s32.totalorder %s24, 0
      %p229 = por %p227, %p228
      %p230 = scmp.le.s32.totalorder 1, %s18
      %p231 = scmp.lt.s32.totalorder %s18, 3
      %p232 = pnand %p230, %p231
      %p233 = pneg %p232
      // Predicated region
      $region9: #{decoder_layer.3} parent=5 // pred_check
        _
      $region10: #{decoder_layer.3} parent=5 // pred_check_branch
        %235 = sbr.rel (%p232) target = $region12
      $region11: #{decoder_layer.3} parent=5 // pred_region
        %s236 = ssub.s32 %s18, 1
        // Predicated region
        $region13: #{decoder_layer.3} parent=11 // pred_check
          %p237 = pneg %p65
        $region14: #{decoder_layer.3} parent=11 // pred_check_branch
          %239 = sbr.rel (%p237) target = $region16
        $region15: #{decoder_layer.3} parent=11 // pred_region
          %s241 = ssub.s32 16, 16
          %242 = vsyncadd [#allocation4], %s241
          %s244 = sshll.u32 [#allocation3], 4
          %s245 = int_to_ptr.vmem [resolvable:$true] %s244
          %247 = dma.hbm_to_vmem [thread:$0]  %s1, 16, %s245, [#allocation4]
        $region16: #{decoder_layer.3} parent=11 // pred_fallthru
          _
        // Predicated region
        $region17: #{decoder_layer.3} parent=11 // pred_check
          %p248 = pneg %p86
        $region18: #{decoder_layer.3} parent=11 // pred_check_branch
          %250 = sbr.rel (%p248) target = $region20
        $region19: #{decoder_layer.3} parent=11 // pred_region
          %s252 = ssub.s32 16, 16
          %253 = vsyncadd [#allocation6], %s252
          %s255 = sshll.u32 [#allocation5], 4
          %s256 = int_to_ptr.vmem [resolvable:$true] %s255
          %258 = dma.hbm_to_vmem [thread:$0]  %s2, 16, %s256, [#allocation6]
        $region20: #{decoder_layer.3} parent=11 // pred_fallthru
          _
        // Predicated region
        $region21: #{decoder_layer.3} parent=11 // pred_check
          %p259 = pneg %p133
        $region22: #{decoder_layer.3} parent=11 // pred_check_branch
          %261 = sbr.rel (%p259) target = $region24
        $region23: #{decoder_layer.3} parent=11 // pred_region
          %s263 = ssub.s32 256, 256
          %264 = vsyncadd [#allocation6], %s263
          %s265 = sshll.u32 [#allocation7], 4
          %s266 = int_to_ptr.vmem [resolvable:$true] %s265
          %271 = dma.hbm_to_vmem [thread:$0]  %s4, 256, %s266, [#allocation6], 64, 64, 4
        $region24: #{decoder_layer.3} parent=11 // pred_fallthru
          _
        // Predicated region
        $region25: #{decoder_layer.3} parent=11 // pred_check
          %p272 = pneg %p154
        $region26: #{decoder_layer.3} parent=11 // pred_check_branch
          %274 = sbr.rel (%p272) target = $region28
        $region27: #{decoder_layer.3} parent=11 // pred_region
          %s276 = ssub.s32 16, 16
          %277 = vsyncadd [#allocation9], %s276
          %s279 = sshll.u32 [#allocation8], 4
          %s280 = int_to_ptr.vmem [resolvable:$true] %s279
          %282 = dma.hbm_to_vmem [thread:$0]  %s5, 16, %s280, [#allocation9]
        $region28: #{decoder_layer.3} parent=11 // pred_fallthru
          _
        // Predicated region
        $region29: #{decoder_layer.3} parent=11 // pred_check
          %p283 = pneg %p175
        $region30: #{decoder_layer.3} parent=11 // pred_check_branch
          %285 = sbr.rel (%p283) target = $region32
        $region31: #{decoder_layer.3} parent=11 // pred_region
          %s287 = ssub.s32 256, 256
          %288 = vsyncadd [#allocation9], %s287
          %s289 = sshll.u32 [#allocation10], 4
          %s290 = int_to_ptr.vmem [resolvable:$true] %s289
          %295 = dma.hbm_to_vmem [thread:$0]  %s6, 256, %s290, [#allocation9], 64, 64, 4
        $region32: #{decoder_layer.3} parent=11 // pred_fallthru
          _
        // Predicated region
        $region33: #{decoder_layer.3} parent=11 // pred_check
          %p296 = pneg %p196
        $region34: #{decoder_layer.3} parent=11 // pred_check_branch
          %298 = sbr.rel (%p296) target = $region36
        $region35: #{decoder_layer.3} parent=11 // pred_region
          %s300 = ssub.s32 16, 16
          %301 = vsyncadd [#allocation12], %s300
          %s303 = sshll.u32 [#allocation11], 4
          %s304 = int_to_ptr.vmem [resolvable:$true] %s303
          %306 = dma.hbm_to_vmem [thread:$0]  %s7, 16, %s304, [#allocation12]
        $region36: #{decoder_layer.3} parent=11 // pred_fallthru
          _
      $region12: #{decoder_layer.3} parent=5 // pred_fallthru
        _
      %p307 = scmp.lt.s32.totalorder %s18, 2
      // Predicated region
      $region37: #{decoder_layer.3} parent=5 // pred_check
        %p308 = pneg %p307
      $region38: #{decoder_layer.3} parent=5 // pred_check_branch
        %310 = sbr.rel (%p308) target = $region40
      $region39: #{decoder_layer.3} parent=5 // pred_region
        // Predicated region
        $region41: #{decoder_layer.3} parent=39 // pred_check
          %p311 = pneg %p38
        $region42: #{decoder_layer.3} parent=39 // pred_check_branch
          %313 = sbr.rel (%p311) target = $region44
        $region43: #{decoder_layer.3} parent=39 // pred_region
          %p314 = scmp.lt.s32.totalorder %s18, 1
          %s315 = scalar_select %p314, %s18, 1
          %s316 = smul.addr %s315, 8
          %s317 = scalar_lea.vmem %s0, %s316
        $region44: #{decoder_layer.3} parent=39 // pred_fallthru
          _
        // Predicated region
        $region45: #{decoder_layer.3} parent=39 // pred_check
          %p318 = pneg %p106
        $region46: #{decoder_layer.3} parent=39 // pred_check_branch
          %320 = sbr.rel (%p318) target = $region48
        $region47: #{decoder_layer.3} parent=39 // pred_region
          %p321 = scmp.lt.s32.totalorder %s18, 1
          %s322 = scalar_select %p321, %s18, 1
          %s323 = smul.addr %s322, 2
          %s324 = scalar_lea.vmem %s3, %s323
        $region48: #{decoder_layer.3} parent=39 // pred_fallthru
          _
      $region40: #{decoder_layer.3} parent=5 // pred_fallthru
        _
      %p325 = scmp.le.s32.totalorder 1, %s18
      %p326 = scmp.lt.s32.totalorder %s18, 3
      %p327 = pnand %p325, %p326
      %p328 = pneg %p327
      // Predicated region
      $region49: #{decoder_layer.3} parent=5 // pred_check
        _
      $region50: #{decoder_layer.3} parent=5 // pred_check_branch
        %330 = sbr.rel (%p327) target = $region52
      $region51: #{decoder_layer.3} parent=5 // pred_region
        %s331 = ssub.s32 %s18, 1
        // Predicated region
        $region53: #{decoder_layer.3} parent=51 // pred_check
          %p332 = pneg %p65
        $region54: #{decoder_layer.3} parent=51 // pred_check_branch
          %334 = sbr.rel (%p332) target = $region56
        $region55: #{decoder_layer.3} parent=51 // pred_region
          %335 = dma.done [#allocation4], 16
        $region56: #{decoder_layer.3} parent=51 // pred_fallthru
          _
        // Predicated region
        $region57: #{decoder_layer.3} parent=51 // pred_check
          %p336 = pneg %p86
        $region58: #{decoder_layer.3} parent=51 // pred_check_branch
          %338 = sbr.rel (%p336) target = $region60
        $region59: #{decoder_layer.3} parent=51 // pred_region
          %339 = dma.done [#allocation6], 16
        $region60: #{decoder_layer.3} parent=51 // pred_fallthru
          _
        // Predicated region
        $region61: #{decoder_layer.3} parent=51 // pred_check
          %p340 = pneg %p133
        $region62: #{decoder_layer.3} parent=51 // pred_check_branch
          %342 = sbr.rel (%p340) target = $region64
        $region63: #{decoder_layer.3} parent=51 // pred_region
          %343 = dma.done [#allocation6], 256
        $region64: #{decoder_layer.3} parent=51 // pred_fallthru
          _
        // Predicated region
        $region65: #{decoder_layer.3} parent=51 // pred_check
          %p344 = pneg %p154
        $region66: #{decoder_layer.3} parent=51 // pred_check_branch
          %346 = sbr.rel (%p344) target = $region68
        $region67: #{decoder_layer.3} parent=51 // pred_region
          %347 = dma.done [#allocation9], 16
        $region68: #{decoder_layer.3} parent=51 // pred_fallthru
          _
        // Predicated region
        $region69: #{decoder_layer.3} parent=51 // pred_check
          %p348 = pneg %p175
        $region70: #{decoder_layer.3} parent=51 // pred_check_branch
          %350 = sbr.rel (%p348) target = $region72
        $region71: #{decoder_layer.3} parent=51 // pred_region
          %351 = dma.done [#allocation9], 256
        $region72: #{decoder_layer.3} parent=51 // pred_fallthru
          _
        // Predicated region
        $region73: #{decoder_layer.3} parent=51 // pred_check
          %p352 = pneg %p196
        $region74: #{decoder_layer.3} parent=51 // pred_check_branch
          %354 = sbr.rel (%p352) target = $region76
        $region75: #{decoder_layer.3} parent=51 // pred_region
          %355 = dma.done [#allocation12], 16
        $region76: #{decoder_layer.3} parent=51 // pred_fallthru
          _
        %p356 = scmp.lt.s32.totalorder %s23, 1
        %s357 = scalar_select %p356, %s23, 1
        %s358 = smul.addr %s357, 8
        %s359 = scalar_lea.vmem %s0, %s358
        %p360 = pneg %p44
        %p361 = pneg %p41
        %p362 = pneg %p65
        %p363 = pneg %p62
        %p364 = pneg %p86
        %p365 = pneg %p83
        %p366 = scmp.lt.s32.totalorder %s23, 1
        %s367 = scalar_select %p366, %s23, 1
        %s368 = smul.addr %s367, 2
        %s369 = scalar_lea.vmem %s3, %s368
        %p370 = pneg %p112
        %p371 = pneg %p109
        %p372 = pneg %p133
        %p373 = pneg %p130
        %p374 = pneg %p154
        %p375 = pneg %p151
        %p376 = pneg %p175
        %p377 = pneg %p172
        %p378 = pneg %p196
        %p379 = pneg %p193
        %p380 = pneg %p222
        %p381 = pneg %p219
        %p382 = scmp.lt.s32.totalorder %s23, 1
        %s383 = scalar_select %p382, %s23, 1
        %s384 = smul.addr %s383, 8
        %s385 = scalar_lea.vmem %s8, %s384
        %p386 = scmp.lt.s32.totalorder %s23, 1
        %s387 = scalar_select %p386, %s23, 1
        %s388 = smul.addr %s387, 8
        %s389 = scalar_lea.vmem %s0, %s388
        %p390 = scmp.lt.s32.totalorder %s23, 1
        %s391 = scalar_select %p390, %s23, 1
        %s392 = smul.addr %s391, 2
        %s393 = scalar_lea.vmem %s3, %s392
        %p394 = scmp.lt.s32.totalorder %s23, 1
        %s395 = scalar_select %p394, %s23, 1
        %s396 = smul.addr %s395, 8
        %s397 = scalar_lea.vmem %s8, %s396
        %v399 = vld [vmem:[%s389] sm:$0xff]
        %v400 = vld [vmem:[#allocation3] sm:$0x1]
        %v401 = vld [vmem:[#allocation5] sm:$0x1]
        %vm402 = vcmask 261120
        %v403 = vsel %vm402, %v399, 0.0
        %404 = vadd.xlane.f32.xlu0 %v403
        %v405 = vpop.xlane.xlu0 %404
        %v406 = vrcp.pop 32.0
        %v407 = vmul.f32 %v405, %v406
        %v408 = vsub.f32 %v399, %v407
        %v409 = vmul.f32 %v408, %v408
        %v410 = vsel %vm402, %v409, 0.0
        %411 = vadd.xlane.f32.xlu0 %v410
        %v412 = vpop.xlane.xlu0 %411
        %v413 = vrcp.pop 31.0
        %v414 = vmul.f32 %v412, %v413
        %v415 = vrsqrt.pop %v414
        %v416 = vmul.f32 %v414, %v415
        %vm417 = vcmp.eq.f32.partialorder %v414, inf
        %v418 = vsel %vm417, %v414, %v416
        %vm419 = vcmp.eq.f32.partialorder %v414, 0.0
        %v420 = vand.u32 %v414, 2147483648
        %v421 = vsel %vm419, %v420, %v418
        %v422 = vadd.f32 %v421, 1e-06
        %v423 = vrcp.pop %v422
        %v424 = vmul.f32 1.0, %v423
        %v426 = vlaneseq
        %v427 = vshrl.u32 %v426, 7
        %v428 = vsub.s32 0, %v427
        %v429 = vrot.slane %v400, %v428
        %v431 = vmul.f32 %v429, %v408
        %v432 = vmul.f32 %v431, %v424
        %v434 = vlaneseq
        %v435 = vshrl.u32 %v434, 7
        %v436 = vsub.s32 0, %v435
        %v437 = vrot.slane %v401, %v436
        %v439 = vadd.f32 %v432, %v437
        %v440 = vpack.c.bf16 %v439, %v439
        %v441 = vld [vmem:[#allocation7] sm:$0xf]
        %v442 = vld [vmem:[#allocation7 + $0x4] sm:$0xf]
        %v443 = vld [vmem:[#allocation7 + $0x8] sm:$0xf]
        %v444 = vld [vmem:[#allocation7 + $0xc] sm:$0xf]
        %v445 = vld [vmem:[#allocation8] sm:$0x1]
        %v447 = vlaneseq
        %v448 = vshrl.u32 %v447, 7
        %v449 = vsub.s32 0, %v448
        %v450 = vrot.slane %v445, %v449
        %v456 = vunpack.c.l.b16 %v441
        %v457 = vunpack.c.l.b16 %v442
        %v458 = vunpack.c.l.b16 %v443
        %v459 = vunpack.c.l.b16 %v444
        %v460 = vpack.c.b16 %v457, %v456
        %v461 = vpack.c.b16 %v459, %v458
        %v465 = vsel %vm402, %v440, 0
        %467 = vmatprep.subr.bf16.mxu0 0
        %468 = vmatpush1.bf16.msra.mxu0 0
        %469 = vmatprep.subr.bf16.mxu0 0
        %470 = vmatpush1.bf16.msra.mxu0 0
        %471 = vmatprep.subr.bf16.mxu0 0
        %472 = vmatpush1.bf16.msra.mxu0 0
        %473 = vmatprep.subr.bf16.mxu0 0
        %474 = vmatpush1.bf16.msra.mxu0 0
        %475 = vmatprep.subr.bf16.mxu0 0
        %476 = vmatpush1.bf16.msra.mxu0 0
        %477 = vmatprep.subr.bf16.mxu0 0
        %478 = vmatpush1.bf16.msra.mxu0 0
        %479 = vmatprep.subr.bf16.mxu0 0
        %480 = vmatpush1.bf16.msra.mxu0 %v461
        %481 = vmatprep.subr.bf16.mxu0 0
        %482 = vmatpush1.bf16.msra.mxu0 %v460
        %483 = vmatprep.subr.bf16.mxu0 0
        %484 = vmatpush2.bf16.msra.mxu0 0
        %485 = vmatprep.subr.bf16.mxu0 0
        %486 = vmatpush2.bf16.msra.mxu0 0
        %487 = vmatprep.subr.bf16.mxu0 0
        %488 = vmatpush2.bf16.msra.mxu0 0
        %489 = vmatprep.subr.bf16.mxu0 0
        %490 = vmatpush2.bf16.msra.mxu0 0
        %491 = vmatprep.subr.bf16.mxu0 0
        %492 = vmatpush2.bf16.msra.mxu0 0
        %493 = vmatprep.subr.bf16.mxu0 0
        %494 = vmatpush2.bf16.msra.mxu0 0
        %495 = vmatprep.subr.bf16.mxu0 0
        %496 = vmatpush2.bf16.msra.mxu0 0
        %497 = vmatprep.subr.bf16.mxu0 0
        %498 = vmatpush2.bf16.msra.mxu0 0
        %499 = vmatprep.mubr.bf16.mxu0 0
        %500 = vmatmul.mubr.bf16.gmra.mxu0 %v465
        %v501 = vpop.f32.mrf.mxu0
        %v502 = vadd.f32 %v450, %v501
        %v503 = vpop.f32.mrf.mxu0
        %v504 = vpop.f32.mrf.mxu0
        %v505 = vpop.f32.mrf.mxu0
        %506 = vdwg.mxu0
        %v507 = vld [vmem:[%s393] sm:$0x3]
        %v508 = vunpack.c.0.s8 %v507
        %v509 = vcvt.s32.f32 %v508
        %vm510 = vcmp.eq.f32.partialorder %v509, 0.0
        %v511 = vsel %vm510, -1e+09, 0.0
        %v512 = vpack.c.bf16 %v502, %v502
        %514 = vrot.lane.b32.xlu0 %v512, 96
        %v515 = vpop.permute.xlu0 %514
        %vm516 = vcmask 64512
        %v518 = vsel %vm516, %v512, 0
        %v521 = vsel %vm516, %v515, 0
        %523 = vmatprep.subr.bf16.mxu0 0
        %524 = vmatpush1.bf16.xpose.msra.mxu0 0
        %525 = vmatprep.subr.bf16.mxu0 0
        %526 = vmatpush1.bf16.xpose.msra.mxu0 0
        %527 = vmatprep.subr.bf16.mxu0 0
        %528 = vmatpush1.bf16.xpose.msra.mxu0 0
        %529 = vmatprep.subr.bf16.mxu0 0
        %530 = vmatpush1.bf16.xpose.msra.mxu0 0
        %531 = vmatprep.subr.bf16.mxu0 0
        %532 = vmatpush1.bf16.xpose.msra.mxu0 0
        %533 = vmatprep.subr.bf16.mxu0 0
        %534 = vmatpush1.bf16.xpose.msra.mxu0 0
        %535 = vmatprep.subr.bf16.mxu0 0
        %536 = vmatpush1.bf16.xpose.msra.mxu0 0
        %537 = vmatprep.subr.bf16.mxu0 0
        %538 = vmatpush1.bf16.xpose.msra.mxu0 %v521
        %539 = vmatprep.subr.bf16.mxu0 0
        %540 = vmatpush2.bf16.xpose.msra.mxu0 0
        %541 = vmatprep.subr.bf16.mxu0 0
        %542 = vmatpush2.bf16.xpose.msra.mxu0 0
        %543 = vmatprep.subr.bf16.mxu0 0
        %544 = vmatpush2.bf16.xpose.msra.mxu0 0
        %545 = vmatprep.subr.bf16.mxu0 0
        %546 = vmatpush2.bf16.xpose.msra.mxu0 0
        %547 = vmatprep.subr.bf16.mxu0 0
        %548 = vmatpush2.bf16.xpose.msra.mxu0 0
        %549 = vmatprep.subr.bf16.mxu0 0
        %550 = vmatpush2.bf16.xpose.msra.mxu0 0
        %551 = vmatprep.subr.bf16.mxu0 0
        %552 = vmatpush2.bf16.xpose.msra.mxu0 0
        %553 = vmatprep.subr.bf16.mxu0 0
        %554 = vmatpush2.bf16.xpose.msra.mxu0 0
        %555 = vmatprep.mubr.bf16.mxu0 0
        %556 = vmatmul.mubr.bf16.gmra.mxu0 %v518
        %v557 = vpop.f32.mrf.mxu0
        %v558 = vadd.f32 %v511, %v557
        %v559 = vpop.f32.mrf.mxu0
        %v560 = vpop.f32.mrf.mxu0
        %v561 = vpop.f32.mrf.mxu0
        %562 = vdwg.mxu0
        %v563 = vsel %vm516, %v558, -inf
        %564 = vmax.xlane.f32.xlu0 %v563
        %v565 = vpop.xlane.xlu0 %564
        %v566 = vsub.f32 %v558, %v565
        %v567 = vmul.f32 %v566, 1.442695
        %v568 = vpow.pop %v567
        %v569 = vsel %vm516, %v568, 0.0
        %570 = vadd.xlane.f32.xlu0 %v569
        %v571 = vpop.xlane.xlu0 %570
        %v572 = vrcp.pop %v571
        %v573 = vmul.f32 %v568, %v572
        %v574 = vpack.c.bf16 %v573, %v573
        %575 = vrot.lane.b32.xlu0 %v512, 64
        %v576 = vpop.permute.xlu0 %575
        %v578 = vsel %vm516, %v574, 0
        %vm580 = vcmask 1043456
        %v582 = vsel %vm580, %v576, 0
        %584 = vmatprep.subr.bf16.mxu0 0
        %585 = vmatpush1.bf16.msra.mxu0 0
        %586 = vmatprep.subr.bf16.mxu0 0
        %587 = vmatpush1.bf16.msra.mxu0 0
        %588 = vmatprep.subr.bf16.mxu0 0
        %589 = vmatpush1.bf16.msra.mxu0 0
        %590 = vmatprep.subr.bf16.mxu0 0
        %591 = vmatpush1.bf16.msra.mxu0 0
        %592 = vmatprep.subr.bf16.mxu0 0
        %593 = vmatpush1.bf16.msra.mxu0 0
        %594 = vmatprep.subr.bf16.mxu0 0
        %595 = vmatpush1.bf16.msra.mxu0 0
        %596 = vmatprep.subr.bf16.mxu0 0
        %597 = vmatpush1.bf16.msra.mxu0 0
        %598 = vmatprep.subr.bf16.mxu0 0
        %599 = vmatpush1.bf16.msra.mxu0 %v582
        %600 = vmatprep.subr.bf16.mxu0 0
        %601 = vmatpush2.bf16.msra.mxu0 0
        %602 = vmatprep.subr.bf16.mxu0 0
        %603 = vmatpush2.bf16.msra.mxu0 0
        %604 = vmatprep.subr.bf16.mxu0 0
        %605 = vmatpush2.bf16.msra.mxu0 0
        %606 = vmatprep.subr.bf16.mxu0 0
        %607 = vmatpush2.bf16.msra.mxu0 0
        %608 = vmatprep.subr.bf16.mxu0 0
        %609 = vmatpush2.bf16.msra.mxu0 0
        %610 = vmatprep.subr.bf16.mxu0 0
        %611 = vmatpush2.bf16.msra.mxu0 0
        %612 = vmatprep.subr.bf16.mxu0 0
        %613 = vmatpush2.bf16.msra.mxu0 0
        %614 = vmatprep.subr.bf16.mxu0 0
        %615 = vmatpush2.bf16.msra.mxu0 0
        %616 = vmatprep.mubr.bf16.mxu0 0
        %617 = vmatmul.mubr.bf16.gmra.mxu0 %v578
        %v618 = vpop.f32.mrf.mxu0
        %v619 = vadd.f32 0.0, %v618
        %v620 = vpop.f32.mrf.mxu0
        %v621 = vpop.f32.mrf.mxu0
        %v622 = vpop.f32.mrf.mxu0
        %623 = vdwg.mxu0
        %624 = vst.msk [vmem:[#allocation2] sm:$0xff] %vm516, %v619
        %625 = vrot.lane.b32.xlu0 %v512, 120
        %v626 = vpop.permute.xlu0 %625
        %627 = vrot.lane.b32.xlu0 %v512, 88
        %v628 = vpop.permute.xlu0 %627
        %v630 = vsel %vm516, %v626, 0
        %v633 = vsel %vm516, %v628, 0
        %635 = vmatprep.subr.bf16.mxu0 0
        %636 = vmatpush1.bf16.xpose.msra.mxu0 0
        %637 = vmatprep.subr.bf16.mxu0 0
        %638 = vmatpush1.bf16.xpose.msra.mxu0 0
        %639 = vmatprep.subr.bf16.mxu0 0
        %640 = vmatpush1.bf16.xpose.msra.mxu0 0
        %641 = vmatprep.subr.bf16.mxu0 0
        %642 = vmatpush1.bf16.xpose.msra.mxu0 0
        %643 = vmatprep.subr.bf16.mxu0 0
        %644 = vmatpush1.bf16.xpose.msra.mxu0 0
        %645 = vmatprep.subr.bf16.mxu0 0
        %646 = vmatpush1.bf16.xpose.msra.mxu0 0
        %647 = vmatprep.subr.bf16.mxu0 0
        %648 = vmatpush1.bf16.xpose.msra.mxu0 0
        %649 = vmatprep.subr.bf16.mxu0 0
        %650 = vmatpush1.bf16.xpose.msra.mxu0 %v633
        %651 = vmatprep.subr.bf16.mxu0 0
        %652 = vmatpush2.bf16.xpose.msra.mxu0 0
        %653 = vmatprep.subr.bf16.mxu0 0
        %654 = vmatpush2.bf16.xpose.msra.mxu0 0
        %655 = vmatprep.subr.bf16.mxu0 0
        %656 = vmatpush2.bf16.xpose.msra.mxu0 0
        %657 = vmatprep.subr.bf16.mxu0 0
        %658 = vmatpush2.bf16.xpose.msra.mxu0 0
        %659 = vmatprep.subr.bf16.mxu0 0
        %660 = vmatpush2.bf16.xpose.msra.mxu0 0
        %661 = vmatprep.subr.bf16.mxu0 0
        %662 = vmatpush2.bf16.xpose.msra.mxu0 0
        %663 = vmatprep.subr.bf16.mxu0 0
        %664 = vmatpush2.bf16.xpose.msra.mxu0 0
        %665 = vmatprep.subr.bf16.mxu0 0
        %666 = vmatpush2.bf16.xpose.msra.mxu0 0
        %667 = vmatprep.mubr.bf16.mxu0 0
        %668 = vmatmul.mubr.bf16.gmra.mxu0 %v630
        %v669 = vpop.f32.mrf.mxu0
        %v670 = vadd.f32 %v511, %v669
        %v671 = vpop.f32.mrf.mxu0
        %v672 = vpop.f32.mrf.mxu0
        %v673 = vpop.f32.mrf.mxu0
        %674 = vdwg.mxu0
        %v675 = vsel %vm516, %v670, -inf
        %676 = vmax.xlane.f32.xlu0 %v675
        %v677 = vpop.xlane.xlu0 %676
        %v678 = vsub.f32 %v670, %v677
        %v679 = vmul.f32 %v678, 1.442695
        %v680 = vpow.pop %v679
        %v681 = vsel %vm516, %v680, 0.0
        %682 = vadd.xlane.f32.xlu0 %v681
        %v683 = vpop.xlane.xlu0 %682
        %v684 = vrcp.pop %v683
        %v685 = vmul.f32 %v680, %v684
        %v686 = vpack.c.bf16 %v685, %v685
        %687 = vrot.lane.b32.xlu0 %v512, 56
        %v688 = vpop.permute.xlu0 %687
        %v690 = vsel %vm516, %v686, 0
        %v693 = vsel %vm580, %v688, 0
        %695 = vmatprep.subr.bf16.mxu0 0
        %696 = vmatpush1.bf16.msra.mxu0 0
        %697 = vmatprep.subr.bf16.mxu0 0
        %698 = vmatpush1.bf16.msra.mxu0 0
        %699 = vmatprep.subr.bf16.mxu0 0
        %700 = vmatpush1.bf16.msra.mxu0 0
        %701 = vmatprep.subr.bf16.mxu0 0
        %702 = vmatpush1.bf16.msra.mxu0 0
        %703 = vmatprep.subr.bf16.mxu0 0
        %704 = vmatpush1.bf16.msra.mxu0 0
        %705 = vmatprep.subr.bf16.mxu0 0
        %706 = vmatpush1.bf16.msra.mxu0 0
        %707 = vmatprep.subr.bf16.mxu0 0
        %708 = vmatpush1.bf16.msra.mxu0 0
        %709 = vmatprep.subr.bf16.mxu0 0
        %710 = vmatpush1.bf16.msra.mxu0 %v693
        %711 = vmatprep.subr.bf16.mxu0 0
        %712 = vmatpush2.bf16.msra.mxu0 0
        %713 = vmatprep.subr.bf16.mxu0 0
        %714 = vmatpush2.bf16.msra.mxu0 0
        %715 = vmatprep.subr.bf16.mxu0 0
        %716 = vmatpush2.bf16.msra.mxu0 0
        %717 = vmatprep.subr.bf16.mxu0 0
        %718 = vmatpush2.bf16.msra.mxu0 0
        %719 = vmatprep.subr.bf16.mxu0 0
        %720 = vmatpush2.bf16.msra.mxu0 0
        %721 = vmatprep.subr.bf16.mxu0 0
        %722 = vmatpush2.bf16.msra.mxu0 0
        %723 = vmatprep.subr.bf16.mxu0 0
        %724 = vmatpush2.bf16.msra.mxu0 0
        %725 = vmatprep.subr.bf16.mxu0 0
        %726 = vmatpush2.bf16.msra.mxu0 0
        %727 = vmatprep.mubr.bf16.mxu0 0
        %728 = vmatmul.mubr.bf16.gmra.mxu0 %v690
        %v729 = vpop.f32.mrf.mxu0
        %v730 = vadd.f32 0.0, %v729
        %v731 = vpop.f32.mrf.mxu0
        %v732 = vpop.f32.mrf.mxu0
        %v733 = vpop.f32.mrf.mxu0
        %734 = vdwg.mxu0
        %736 = vrot.lane.b32.xlu0 %v730, 8
        %v737 = vpop.permute.xlu0 %736
        %vm739 = vcmask 130112
        %740 = vst.msk [vmem:[#allocation2] sm:$0xff] %vm739, %v737
        %741 = vrot.lane.b32.xlu0 %v512, 112
        %v742 = vpop.permute.xlu0 %741
        %743 = vrot.lane.b32.xlu0 %v512, 80
        %v744 = vpop.permute.xlu0 %743
        %v746 = vsel %vm516, %v742, 0
        %v749 = vsel %vm516, %v744, 0
        %751 = vmatprep.subr.bf16.mxu0 0
        %752 = vmatpush1.bf16.xpose.msra.mxu0 0
        %753 = vmatprep.subr.bf16.mxu0 0
        %754 = vmatpush1.bf16.xpose.msra.mxu0 0
        %755 = vmatprep.subr.bf16.mxu0 0
        %756 = vmatpush1.bf16.xpose.msra.mxu0 0
        %757 = vmatprep.subr.bf16.mxu0 0
        %758 = vmatpush1.bf16.xpose.msra.mxu0 0
        %759 = vmatprep.subr.bf16.mxu0 0
        %760 = vmatpush1.bf16.xpose.msra.mxu0 0
        %761 = vmatprep.subr.bf16.mxu0 0
        %762 = vmatpush1.bf16.xpose.msra.mxu0 0
        %763 = vmatprep.subr.bf16.mxu0 0
        %764 = vmatpush1.bf16.xpose.msra.mxu0 0
        %765 = vmatprep.subr.bf16.mxu0 0
        %766 = vmatpush1.bf16.xpose.msra.mxu0 %v749
        %767 = vmatprep.subr.bf16.mxu0 0
        %768 = vmatpush2.bf16.xpose.msra.mxu0 0
        %769 = vmatprep.subr.bf16.mxu0 0
        %770 = vmatpush2.bf16.xpose.msra.mxu0 0
        %771 = vmatprep.subr.bf16.mxu0 0
        %772 = vmatpush2.bf16.xpose.msra.mxu0 0
        %773 = vmatprep.subr.bf16.mxu0 0
        %774 = vmatpush2.bf16.xpose.msra.mxu0 0
        %775 = vmatprep.subr.bf16.mxu0 0
        %776 = vmatpush2.bf16.xpose.msra.mxu0 0
        %777 = vmatprep.subr.bf16.mxu0 0
        %778 = vmatpush2.bf16.xpose.msra.mxu0 0
        %779 = vmatprep.subr.bf16.mxu0 0
        %780 = vmatpush2.bf16.xpose.msra.mxu0 0
        %781 = vmatprep.subr.bf16.mxu0 0
        %782 = vmatpush2.bf16.xpose.msra.mxu0 0
        %783 = vmatprep.mubr.bf16.mxu0 0
        %784 = vmatmul.mubr.bf16.gmra.mxu0 %v746
        %v785 = vpop.f32.mrf.mxu0
        %v786 = vadd.f32 %v511, %v785
        %v787 = vpop.f32.mrf.mxu0
        %v788 = vpop.f32.mrf.mxu0
        %v789 = vpop.f32.mrf.mxu0
        %790 = vdwg.mxu0
        %v791 = vsel %vm516, %v786, -inf
        %792 = vmax.xlane.f32.xlu0 %v791
        %v793 = vpop.xlane.xlu0 %792
        %v794 = vsub.f32 %v786, %v793
        %v795 = vmul.f32 %v794, 1.442695
        %v796 = vpow.pop %v795
        %v797 = vsel %vm516, %v796, 0.0
        %798 = vadd.xlane.f32.xlu0 %v797
        %v799 = vpop.xlane.xlu0 %798
        %v800 = vrcp.pop %v799
        %v801 = vmul.f32 %v796, %v800
        %v802 = vpack.c.bf16 %v801, %v801
        %803 = vrot.lane.b32.xlu0 %v512, 48
        %v804 = vpop.permute.xlu0 %803
        %v806 = vsel %vm516, %v802, 0
        %v809 = vsel %vm580, %v804, 0
        %811 = vmatprep.subr.bf16.mxu0 0
        %812 = vmatpush1.bf16.msra.mxu0 0
        %813 = vmatprep.subr.bf16.mxu0 0
        %814 = vmatpush1.bf16.msra.mxu0 0
        %815 = vmatprep.subr.bf16.mxu0 0
        %816 = vmatpush1.bf16.msra.mxu0 0
        %817 = vmatprep.subr.bf16.mxu0 0
        %818 = vmatpush1.bf16.msra.mxu0 0
        %819 = vmatprep.subr.bf16.mxu0 0
        %820 = vmatpush1.bf16.msra.mxu0 0
        %821 = vmatprep.subr.bf16.mxu0 0
        %822 = vmatpush1.bf16.msra.mxu0 0
        %823 = vmatprep.subr.bf16.mxu0 0
        %824 = vmatpush1.bf16.msra.mxu0 0
        %825 = vmatprep.subr.bf16.mxu0 0
        %826 = vmatpush1.bf16.msra.mxu0 %v809
        %827 = vmatprep.subr.bf16.mxu0 0
        %828 = vmatpush2.bf16.msra.mxu0 0
        %829 = vmatprep.subr.bf16.mxu0 0
        %830 = vmatpush2.bf16.msra.mxu0 0
        %831 = vmatprep.subr.bf16.mxu0 0
        %832 = vmatpush2.bf16.msra.mxu0 0
        %833 = vmatprep.subr.bf16.mxu0 0
        %834 = vmatpush2.bf16.msra.mxu0 0
        %835 = vmatprep.subr.bf16.mxu0 0
        %836 = vmatpush2.bf16.msra.mxu0 0
        %837 = vmatprep.subr.bf16.mxu0 0
        %838 = vmatpush2.bf16.msra.mxu0 0
        %839 = vmatprep.subr.bf16.mxu0 0
        %840 = vmatpush2.bf16.msra.mxu0 0
        %841 = vmatprep.subr.bf16.mxu0 0
        %842 = vmatpush2.bf16.msra.mxu0 0
        %843 = vmatprep.mubr.bf16.mxu0 0
        %844 = vmatmul.mubr.bf16.gmra.mxu0 %v806
        %v845 = vpop.f32.mrf.mxu0
        %v846 = vadd.f32 0.0, %v845
        %v847 = vpop.f32.mrf.mxu0
        %v848 = vpop.f32.mrf.mxu0
        %v849 = vpop.f32.mrf.mxu0
        %850 = vdwg.mxu0
        %852 = vrot.lane.b32.xlu0 %v846, 16
        %v853 = vpop.permute.xlu0 %852
        %vm855 = vcmask 195712
        %856 = vst.msk [vmem:[#allocation2] sm:$0xff] %vm855, %v853
        %857 = vrot.lane.b32.xlu0 %v512, 104
        %v858 = vpop.permute.xlu0 %857
        %859 = vrot.lane.b32.xlu0 %v512, 72
        %v860 = vpop.permute.xlu0 %859
        %v862 = vsel %vm516, %v858, 0
        %v865 = vsel %vm516, %v860, 0
        %867 = vmatprep.subr.bf16.mxu0 0
        %868 = vmatpush1.bf16.xpose.msra.mxu0 0
        %869 = vmatprep.subr.bf16.mxu0 0
        %870 = vmatpush1.bf16.xpose.msra.mxu0 0
        %871 = vmatprep.subr.bf16.mxu0 0
        %872 = vmatpush1.bf16.xpose.msra.mxu0 0
        %873 = vmatprep.subr.bf16.mxu0 0
        %874 = vmatpush1.bf16.xpose.msra.mxu0 0
        %875 = vmatprep.subr.bf16.mxu0 0
        %876 = vmatpush1.bf16.xpose.msra.mxu0 0
        %877 = vmatprep.subr.bf16.mxu0 0
        %878 = vmatpush1.bf16.xpose.msra.mxu0 0
        %879 = vmatprep.subr.bf16.mxu0 0
        %880 = vmatpush1.bf16.xpose.msra.mxu0 0
        %881 = vmatprep.subr.bf16.mxu0 0
        %882 = vmatpush1.bf16.xpose.msra.mxu0 %v865
        %883 = vmatprep.subr.bf16.mxu0 0
        %884 = vmatpush2.bf16.xpose.msra.mxu0 0
        %885 = vmatprep.subr.bf16.mxu0 0
        %886 = vmatpush2.bf16.xpose.msra.mxu0 0
        %887 = vmatprep.subr.bf16.mxu0 0
        %888 = vmatpush2.bf16.xpose.msra.mxu0 0
        %889 = vmatprep.subr.bf16.mxu0 0
        %890 = vmatpush2.bf16.xpose.msra.mxu0 0
        %891 = vmatprep.subr.bf16.mxu0 0
        %892 = vmatpush2.bf16.xpose.msra.mxu0 0
        %893 = vmatprep.subr.bf16.mxu0 0
        %894 = vmatpush2.bf16.xpose.msra.mxu0 0
        %895 = vmatprep.subr.bf16.mxu0 0
        %896 = vmatpush2.bf16.xpose.msra.mxu0 0
        %897 = vmatprep.subr.bf16.mxu0 0
        %898 = vmatpush2.bf16.xpose.msra.mxu0 0
        %899 = vmatprep.mubr.bf16.mxu0 0
        %900 = vmatmul.mubr.bf16.gmra.mxu0 %v862
        %v901 = vpop.f32.mrf.mxu0
        %v902 = vadd.f32 %v511, %v901
        %v903 = vpop.f32.mrf.mxu0
        %v904 = vpop.f32.mrf.mxu0
        %v905 = vpop.f32.mrf.mxu0
        %906 = vdwg.mxu0
        %v907 = vsel %vm516, %v902, -inf
        %908 = vmax.xlane.f32.xlu0 %v907
        %v909 = vpop.xlane.xlu0 %908
        %v910 = vsub.f32 %v902, %v909
        %v911 = vmul.f32 %v910, 1.442695
        %v912 = vpow.pop %v911
        %v913 = vsel %vm516, %v912, 0.0
        %914 = vadd.xlane.f32.xlu0 %v913
        %v915 = vpop.xlane.xlu0 %914
        %v916 = vrcp.pop %v915
        %v917 = vmul.f32 %v912, %v916
        %v918 = vpack.c.bf16 %v917, %v917
        %919 = vrot.lane.b32.xlu0 %v512, 40
        %v920 = vpop.permute.xlu0 %919
        %v922 = vsel %vm516, %v918, 0
        %v925 = vsel %vm580, %v920, 0
        %927 = vmatprep.subr.bf16.mxu0 0
        %928 = vmatpush1.bf16.msra.mxu0 0
        %929 = vmatprep.subr.bf16.mxu0 0
        %930 = vmatpush1.bf16.msra.mxu0 0
        %931 = vmatprep.subr.bf16.mxu0 0
        %932 = vmatpush1.bf16.msra.mxu0 0
        %933 = vmatprep.subr.bf16.mxu0 0
        %934 = vmatpush1.bf16.msra.mxu0 0
        %935 = vmatprep.subr.bf16.mxu0 0
        %936 = vmatpush1.bf16.msra.mxu0 0
        %937 = vmatprep.subr.bf16.mxu0 0
        %938 = vmatpush1.bf16.msra.mxu0 0
        %939 = vmatprep.subr.bf16.mxu0 0
        %940 = vmatpush1.bf16.msra.mxu0 0
        %941 = vmatprep.subr.bf16.mxu0 0
        %942 = vmatpush1.bf16.msra.mxu0 %v925
        %943 = vmatprep.subr.bf16.mxu0 0
        %944 = vmatpush2.bf16.msra.mxu0 0
        %945 = vmatprep.subr.bf16.mxu0 0
        %946 = vmatpush2.bf16.msra.mxu0 0
        %947 = vmatprep.subr.bf16.mxu0 0
        %948 = vmatpush2.bf16.msra.mxu0 0
        %949 = vmatprep.subr.bf16.mxu0 0
        %950 = vmatpush2.bf16.msra.mxu0 0
        %951 = vmatprep.subr.bf16.mxu0 0
        %952 = vmatpush2.bf16.msra.mxu0 0
        %953 = vmatprep.subr.bf16.mxu0 0
        %954 = vmatpush2.bf16.msra.mxu0 0
        %955 = vmatprep.subr.bf16.mxu0 0
        %956 = vmatpush2.bf16.msra.mxu0 0
        %957 = vmatprep.subr.bf16.mxu0 0
        %958 = vmatpush2.bf16.msra.mxu0 0
        %959 = vmatprep.mubr.bf16.mxu0 0
        %960 = vmatmul.mubr.bf16.gmra.mxu0 %v922
        %v961 = vpop.f32.mrf.mxu0
        %v962 = vadd.f32 0.0, %v961
        %v963 = vpop.f32.mrf.mxu0
        %v964 = vpop.f32.mrf.mxu0
        %v965 = vpop.f32.mrf.mxu0
        %966 = vdwg.mxu0
        %968 = vrot.lane.b32.xlu0 %v962, 24
        %v969 = vpop.permute.xlu0 %968
        %vm971 = vcmask 261312
        %972 = vst.msk [vmem:[#allocation2] sm:$0xff] %vm971, %v969
        %v973 = vld [vmem:[#allocation2] sm:$0xff]
        %v974 = vpack.c.bf16 %v973, %v973
        %v975 = vld [vmem:[#allocation10] sm:$0xf]
        %v976 = vld [vmem:[#allocation10 + $0x4] sm:$0xf]
        %v977 = vld [vmem:[#allocation10 + $0x8] sm:$0xf]
        %v978 = vld [vmem:[#allocation10 + $0xc] sm:$0xf]
        %v979 = vld [vmem:[#allocation11] sm:$0x1]
        %v981 = vlaneseq
        %v982 = vshrl.u32 %v981, 7
        %v983 = vsub.s32 0, %v982
        %v984 = vrot.slane %v979, %v983
        %v990 = vunpack.c.l.b16 %v975
        %v991 = vunpack.c.l.b16 %v976
        %v992 = vunpack.c.l.b16 %v977
        %v993 = vunpack.c.l.b16 %v978
        %v994 = vpack.c.b16 %v991, %v990
        %v995 = vpack.c.b16 %v993, %v992
        %v999 = vsel %vm402, %v974, 0
        %1001 = vmatprep.subr.bf16.mxu0 0
        %1002 = vmatpush1.bf16.msra.mxu0 0
        %1003 = vmatprep.subr.bf16.mxu0 0
        %1004 = vmatpush1.bf16.msra.mxu0 0
        %1005 = vmatprep.subr.bf16.mxu0 0
        %1006 = vmatpush1.bf16.msra.mxu0 0
        %1007 = vmatprep.subr.bf16.mxu0 0
        %1008 = vmatpush1.bf16.msra.mxu0 0
        %1009 = vmatprep.subr.bf16.mxu0 0
        %1010 = vmatpush1.bf16.msra.mxu0 0
        %1011 = vmatprep.subr.bf16.mxu0 0
        %1012 = vmatpush1.bf16.msra.mxu0 0
        %1013 = vmatprep.subr.bf16.mxu0 0
        %1014 = vmatpush1.bf16.msra.mxu0 %v995
        %1015 = vmatprep.subr.bf16.mxu0 0
        %1016 = vmatpush1.bf16.msra.mxu0 %v994
        %1017 = vmatprep.subr.bf16.mxu0 0
        %1018 = vmatpush2.bf16.msra.mxu0 0
        %1019 = vmatprep.subr.bf16.mxu0 0
        %1020 = vmatpush2.bf16.msra.mxu0 0
        %1021 = vmatprep.subr.bf16.mxu0 0
        %1022 = vmatpush2.bf16.msra.mxu0 0
        %1023 = vmatprep.subr.bf16.mxu0 0
        %1024 = vmatpush2.bf16.msra.mxu0 0
        %1025 = vmatprep.subr.bf16.mxu0 0
        %1026 = vmatpush2.bf16.msra.mxu0 0
        %1027 = vmatprep.subr.bf16.mxu0 0
        %1028 = vmatpush2.bf16.msra.mxu0 0
        %1029 = vmatprep.subr.bf16.mxu0 0
        %1030 = vmatpush2.bf16.msra.mxu0 0
        %1031 = vmatprep.subr.bf16.mxu0 0
        %1032 = vmatpush2.bf16.msra.mxu0 0
        %1033 = vmatprep.mubr.bf16.mxu0 0
        %1034 = vmatmul.mubr.bf16.gmra.mxu0 %v999
        %v1035 = vpop.f32.mrf.mxu0
        %v1036 = vadd.f32 %v984, %v1035
        %v1037 = vpop.f32.mrf.mxu0
        %v1038 = vpop.f32.mrf.mxu0
        %v1039 = vpop.f32.mrf.mxu0
        %1040 = vdwg.mxu0
        %v1041 = vadd.f32 %v399, %v1036
        %1042 = vst.msk [vmem:[%s397] sm:$0xff] %vm402, %v1041
        %p1043 = scmp.lt.s32.totalorder %s23, 1
        %s1044 = scalar_select %p1043, %s23, 1
        %s1045 = smul.addr %s1044, 8
        %s1046 = scalar_lea.vmem %s8, %s1045
        // Predicated region
        $region77: #{decoder_layer.3} parent=51 // pred_check
          %p1047 = pneg %p219
        $region78: #{decoder_layer.3} parent=51 // pred_check_branch
          %1049 = sbr.rel (%p1047) target = $region80
        $region79: #{decoder_layer.3} parent=51 // pred_region
          _
        $region80: #{decoder_layer.3} parent=51 // pred_fallthru
          _
      $region52: #{decoder_layer.3} parent=5 // pred_fallthru
        _
      %p1050 = scmp.le.s32.totalorder 2, %s18
      // Predicated region
      $region81: #{decoder_layer.3} parent=5 // pred_check
        %p1051 = pneg %p1050
      $region82: #{decoder_layer.3} parent=5 // pred_check_branch
        %1053 = sbr.rel (%p1051) target = $region84
      $region83: #{decoder_layer.3} parent=5 // pred_region
        %s1054 = ssub.s32 %s18, 2
        // Predicated region
        $region85: #{decoder_layer.3} parent=83 // pred_check
          %p1055 = pneg %p225
        $region86: #{decoder_layer.3} parent=83 // pred_check_branch
          %1057 = sbr.rel (%p1055) target = $region88
        $region87: #{decoder_layer.3} parent=83 // pred_region
          %p1058 = scmp.lt.s32.totalorder %s24, 1
          %s1059 = scalar_select %p1058, %s24, 1
          %s1060 = smul.addr %s1059, 8
          %s1061 = scalar_lea.vmem %s8, %s1060
        $region88: #{decoder_layer.3} parent=83 // pred_fallthru
          _
      $region84: #{decoder_layer.3} parent=5 // pred_fallthru
        _
    $region6: #{decoder_layer.3} parent=1 // loop_footer
      %s22 = sadd.s32 1, %s18
    $region7: #{decoder_layer.3} parent=1 // loop_footer_branch
      %17 = sbr.rel target = $region3
    $region8: #{decoder_layer.3} parent=1 // loop_exit
      _
    %1062 = vsyncpa [#allocation4], 1
    %s1063 = scalar_lea.sflag [#allocation4], 1
    %1064 = vsyncpa %s1063, 1
    %1065 = vsyncpa [#allocation6], 1
    %1066 = vsyncpa [#allocation9], 1
    %1067 = vsyncpa [#allocation12], 1

// kernel: decoder_layer.5
$region0: #{decoder_layer.5}
  #allocation0 [shape = 'u32[]', space=smem, size = 0x4, offset = 0x4, fixed_abs, tag = 'smem constant byte address 0x4 - core index']
  #allocation1 [shape = 'u32[144,128]{1,0:T(1,128)}', space=vmem, size = 0x12000, scoped, tag = 'internal scratch']
  #allocation2 [shape = 'f32[8,32]{1,0:T(8,128)}', space=vmem, size = 0x1000, scoped, tag = 'scratch operand']
  #allocation3 [shape = 'bf16[8,32]{1,0:T(8,128)(2,1)}', space=vmem, size = 0x800, scoped, tag = 'scratch operand']
  %s0 = inlined_call_operand.vmem [shape: f32[2,8,32], index: 0, kind: input, shape index: {}]
  %s1 = inlined_call_operand.vmem [shape: f32[1,32], index: 1, kind: input, shape index: {}]
  %s2 = inlined_call_operand.vmem [shape: f32[1,32], index: 2, kind: input, shape index: {}]
  %s3 = inlined_call_operand.vmem [shape: bf16[32,2048], index: 3, kind: input, shape index: {}]
  %s4 = inlined_call_operand.vmem [shape: f32[1,2048], index: 4, kind: input, shape index: {}]
  %s5 = inlined_call_operand.vmem [shape: bf16[2048,32], index: 5, kind: input, shape index: {}]
  %s6 = inlined_call_operand.vmem [shape: f32[1,32], index: 6, kind: input, shape index: {}]
  %s7 = inlined_call_operand.hbm [shape: f32[2,8,32], index: 7, kind: output, shape index: {}]
  %s8 = sld [smem:[#allocation0]]
  $region92: #{decoder_layer.5} parent=0
    _
  %s10 = ssub.s32 1, %s8
  %s11 = scalar_select 0, %s10, %s8
  $region1: #{decoder_layer.5} parent=0
    #allocation4 [shape = 'u8[65536]{0}', space=vmem, size = 0x10000, scoped, tag = 'input window, operand 3']
    #allocation5 [shape = 'u8[8192]{0}', space=vmem, size = 0x2000, scoped, tag = 'output window, operand 0']
    #allocation6 [shape = 's32[2]{0}', space=sflag, size = 0x8, scoped, tag = 'scoped memory for decoder_layer.5']
    %12 = vsyncpa [#allocation6], 0
    %s13 = scalar_lea.sflag [#allocation6], 1
    %14 = vsyncpa %s13, 0
    loop: start=0, step=1, limit=10
    $region2: #{decoder_layer.5} parent=1 // loop_pre_header
      _
    $region3: #{decoder_layer.5} parent=1 // loop_header
      %s16 = sphi 0, %s20
      %p17 = scmp.ge.s32.totalorder %s16, 10
      %s23 = sphi 0, %s42
      %s24 = sphi 0, %s38
      %s25 = sphi 0, %s34
      %s26 = sphi 0, %s23
      %s27 = sphi 0, %s24
      %s28 = sphi 0, %s25
      %s29 = sphi 0, %s26
      %s30 = sphi 0, %s27
      %s31 = sphi 0, %s28
      %s47 = sphi 0, %s49
      %s50 = sphi 0, %s47
      %s51 = sphi 0, %s50
      %s67 = sphi 0, %s51
      %s71 = sphi 0, %s71
      %s73 = sphi 0, %s71
      %s74 = sphi 0, %s73
      %s88 = sphi 0, %s74
      %s92 = sphi 0, %s92
      %s94 = sphi 0, %s92
      %s95 = sphi 0, %s94
      %s109 = sphi 0, %s95
      %s115 = sphi 0, %s117
      %s118 = sphi 0, %s115
      %s119 = sphi 0, %s118
      %s135 = sphi 0, %s119
      %s141 = sphi 0, %s143
      %s144 = sphi 0, %s141
      %s145 = sphi 0, %s144
      %s161 = sphi 0, %s145
      %s167 = sphi 0, %s169
      %s170 = sphi 0, %s167
      %s171 = sphi 0, %s170
      %s187 = sphi 0, %s171
      %s191 = sphi 0, %s191
      %s193 = sphi 0, %s191
      %s194 = sphi 0, %s193
      %s208 = sphi 0, %s194
      %s216 = sphi 0, %s218
      %s219 = sphi 0, %s216
      %s220 = sphi 0, %s219
      %s236 = sphi 0, %s220
    $region4: #{decoder_layer.5} parent=1 // loop_header_branch
      %19 = sbr.rel (%p17) target = $region8
    $region5: #{decoder_layer.5} parent=1 // loop_body
      %s21 = ssub.s32 %s16, 1
      %s22 = ssub.s32 %s16, 2
      %s32 = sadd.s32 1, %s25
      %p33 = scmp.ge.s32.totalorder %s32, 4
      %s34 = scalar_select %p33, 0, %s32
      %s35 = sadd.s32 1, %s24
      %s36 = scalar_select %p33, %s35, %s24
      %p37 = scmp.ge.s32.totalorder %s36, 1
      %s38 = scalar_select %p37, 0, %s36
      %s39 = sadd.s32 1, %s23
      %s40 = scalar_select %p37, %s39, %s23
      %p41 = scmp.ge.s32.totalorder %s40, 2
      %s42 = scalar_select %p41, 0, %s40
      %s43 = ssub.s32 %s23, %s42
      %s44 = ssub.s32 %s24, %s38
      %s45 = sor.u32 %s43, %s44
      %p46 = scmp.eq.s32.totalorder %s45, 0
      %s48 = sadd.s32 %s47, 1
      %s49 = scalar_select %p46, %s47, %s48
      %p52 = pneg %p46
      %p53 = scmp.eq.s32.totalorder %s16, 7
      %p54 = por %p52, %p53
      %p55 = scmp.ne.s32.totalorder %s47, %s50
      %p56 = scmp.eq.s32.totalorder %s16, 0
      %p57 = por %p55, %p56
      %p58 = scmp.ne.s32.totalorder %s47, %s50
      %p59 = scmp.eq.s32.totalorder %s21, 7
      %p60 = por %p58, %p59
      %p61 = scmp.ne.s32.totalorder %s50, %s51
      %p62 = scmp.eq.s32.totalorder %s21, 0
      %p63 = por %p61, %p62
      %p64 = scmp.ne.s32.totalorder %s50, %s51
      %p65 = scmp.eq.s32.totalorder %s22, 7
      %p66 = por %p64, %p65
      %p68 = scmp.ne.s32.totalorder %s51, %s67
      %p69 = scmp.eq.s32.totalorder %s22, 0
      %p70 = por %p68, %p69
      %s72 = sadd.s32 %s71, 1
      %p75 = scmp.eq.s32.totalorder %s16, 7
      %p76 = scmp.ne.s32.totalorder %s71, %s73
      %p77 = scmp.eq.s32.totalorder %s16, 0
      %p78 = por %p76, %p77
      %p79 = scmp.ne.s32.totalorder %s71, %s73
      %p80 = scmp.eq.s32.totalorder %s21, 7
      %p81 = por %p79, %p80
      %p82 = scmp.ne.s32.totalorder %s73, %s74
      %p83 = scmp.eq.s32.totalorder %s21, 0
      %p84 = por %p82, %p83
      %p85 = scmp.ne.s32.totalorder %s73, %s74
      %p86 = scmp.eq.s32.totalorder %s22, 7
      %p87 = por %p85, %p86
      %p89 = scmp.ne.s32.totalorder %s74, %s88
      %p90 = scmp.eq.s32.totalorder %s22, 0
      %p91 = por %p89, %p90
      %s93 = sadd.s32 %s92, 1
      %p96 = scmp.eq.s32.totalorder %s16, 7
      %p97 = scmp.ne.s32.totalorder %s92, %s94
      %p98 = scmp.eq.s32.totalorder %s16, 0
      %p99 = por %p97, %p98
      %p100 = scmp.ne.s32.totalorder %s92, %s94
      %p101 = scmp.eq.s32.totalorder %s21, 7
      %p102 = por %p100, %p101
      %p103 = scmp.ne.s32.totalorder %s94, %s95
      %p104 = scmp.eq.s32.totalorder %s21, 0
      %p105 = por %p103, %p104
      %p106 = scmp.ne.s32.totalorder %s94, %s95
      %p107 = scmp.eq.s32.totalorder %s22, 7
      %p108 = por %p106, %p107
      %p110 = scmp.ne.s32.totalorder %s95, %s109
      %p111 = scmp.eq.s32.totalorder %s22, 0
      %p112 = por %p110, %p111
      %s113 = ssub.s32 %s25, %s34
      %p114 = scmp.eq.s32.totalorder %s113, 0
      %s116 = sadd.s32 %s115, 1
      %s117 = scalar_select %p114, %s115, %s116
      %p120 = pneg %p114
      %p121 = scmp.eq.s32.totalorder %s16, 7
      %p122 = por %p120, %p121
      %p123 = scmp.ne.s32.totalorder %s115, %s118
      %p124 = scmp.eq.s32.totalorder %s16, 0
      %p125 = por %p123, %p124
      %p126 = scmp.ne.s32.totalorder %s115, %s118
      %p127 = scmp.eq.s32.totalorder %s21, 7
      %p128 = por %p126, %p127
      %p129 = scmp.ne.s32.totalorder %s118, %s119
      %p130 = scmp.eq.s32.totalorder %s21, 0
      %p131 = por %p129, %p130
      %p132 = scmp.ne.s32.totalorder %s118, %s119
      %p133 = scmp.eq.s32.totalorder %s22, 7
      %p134 = por %p132, %p133
      %p136 = scmp.ne.s32.totalorder %s119, %s135
      %p137 = scmp.eq.s32.totalorder %s22, 0
      %p138 = por %p136, %p137
      %s139 = ssub.s32 %s25, %s34
      %p140 = scmp.eq.s32.totalorder %s139, 0
      %s142 = sadd.s32 %s141, 1
      %s143 = scalar_select %p140, %s141, %s142
      %p146 = pneg %p140
      %p147 = scmp.eq.s32.totalorder %s16, 7
      %p148 = por %p146, %p147
      %p149 = scmp.ne.s32.totalorder %s141, %s144
      %p150 = scmp.eq.s32.totalorder %s16, 0
      %p151 = por %p149, %p150
      %p152 = scmp.ne.s32.totalorder %s141, %s144
      %p153 = scmp.eq.s32.totalorder %s21, 7
      %p154 = por %p152, %p153
      %p155 = scmp.ne.s32.totalorder %s144, %s145
      %p156 = scmp.eq.s32.totalorder %s21, 0
      %p157 = por %p155, %p156
      %p158 = scmp.ne.s32.totalorder %s144, %s145
      %p159 = scmp.eq.s32.totalorder %s22, 7
      %p160 = por %p158, %p159
      %p162 = scmp.ne.s32.totalorder %s145, %s161
      %p163 = scmp.eq.s32.totalorder %s22, 0
      %p164 = por %p162, %p163
      %s165 = ssub.s32 %s25, %s34
      %p166 = scmp.eq.s32.totalorder %s165, 0
      %s168 = sadd.s32 %s167, 1
      %s169 = scalar_select %p166, %s167, %s168
      %p172 = pneg %p166
      %p173 = scmp.eq.s32.totalorder %s16, 7
      %p174 = por %p172, %p173
      %p175 = scmp.ne.s32.totalorder %s167, %s170
      %p176 = scmp.eq.s32.totalorder %s16, 0
      %p177 = por %p175, %p176
      %p178 = scmp.ne.s32.totalorder %s167, %s170
      %p179 = scmp.eq.s32.totalorder %s21, 7
      %p180 = por %p178, %p179
      %p181 = scmp.ne.s32.totalorder %s170, %s171
      %p182 = scmp.eq.s32.totalorder %s21, 0
      %p183 = por %p181, %p182
      %p184 = scmp.ne.s32.totalorder %s170, %s171
      %p185 = scmp.eq.s32.totalorder %s22, 7
      %p186 = por %p184, %p185
      %p188 = scmp.ne.s32.totalorder %s171, %s187
      %p189 = scmp.eq.s32.totalorder %s22, 0
      %p190 = por %p188, %p189
      %s192 = sadd.s32 %s191, 1
      %p195 = scmp.eq.s32.totalorder %s16, 7
      %p196 = scmp.ne.s32.totalorder %s191, %s193
      %p197 = scmp.eq.s32.totalorder %s16, 0
      %p198 = por %p196, %p197
      %p199 = scmp.ne.s32.totalorder %s191, %s193
      %p200 = scmp.eq.s32.totalorder %s21, 7
      %p201 = por %p199, %p200
      %p202 = scmp.ne.s32.totalorder %s193, %s194
      %p203 = scmp.eq.s32.totalorder %s21, 0
      %p204 = por %p202, %p203
      %p205 = scmp.ne.s32.totalorder %s193, %s194
      %p206 = scmp.eq.s32.totalorder %s22, 7
      %p207 = por %p205, %p206
      %p209 = scmp.ne.s32.totalorder %s194, %s208
      %p210 = scmp.eq.s32.totalorder %s22, 0
      %p211 = por %p209, %p210
      %s212 = ssub.s32 %s23, %s42
      %s213 = ssub.s32 %s24, %s38
      %s214 = sor.u32 %s212, %s213
      %p215 = scmp.eq.s32.totalorder %s214, 0
      %s217 = sadd.s32 %s216, 1
      %s218 = scalar_select %p215, %s216, %s217
      %p221 = pneg %p215
      %p222 = scmp.eq.s32.totalorder %s16, 7
      %p223 = por %p221, %p222
      %p224 = scmp.ne.s32.totalorder %s216, %s219
      %p225 = scmp.eq.s32.totalorder %s16, 0
      %p226 = por %p224, %p225
      %p227 = scmp.ne.s32.totalorder %s216, %s219
      %p228 = scmp.eq.s32.totalorder %s21, 7
      %p229 = por %p227, %p228
      %p230 = scmp.ne.s32.totalorder %s219, %s220
      %p231 = scmp.eq.s32.totalorder %s21, 0
      %p232 = por %p230, %p231
      %p233 = scmp.ne.s32.totalorder %s219, %s220
      %p234 = scmp.eq.s32.totalorder %s22, 7
      %p235 = por %p233, %p234
      %p237 = scmp.ne.s32.totalorder %s220, %s236
      %p238 = scmp.eq.s32.totalorder %s22, 0
      %p239 = por %p237, %p238
      %p240 = scmp.le.s32.totalorder 1, %s16
      %p241 = scmp.lt.s32.totalorder %s16, 9
      %p242 = pnand %p240, %p241
      %p243 = pneg %p242
      // Predicated region
      $region9: #{decoder_layer.5} parent=5 // pred_check
        _
      $region10: #{decoder_layer.5} parent=5 // pred_check_branch
        %245 = sbr.rel (%p242) target = $region12
      $region11: #{decoder_layer.5} parent=5 // pred_region
        %s246 = ssub.s32 %s16, 1
        // Predicated region
        $region13: #{decoder_layer.5} parent=11 // pred_check
          %p247 = pneg %p84
        $region14: #{decoder_layer.5} parent=11 // pred_check_branch
          %249 = sbr.rel (%p247) target = $region16
        $region15: #{decoder_layer.5} parent=11 // pred_region
          _
        $region16: #{decoder_layer.5} parent=11 // pred_fallthru
          _
        // Predicated region
        $region17: #{decoder_layer.5} parent=11 // pred_check
          %p250 = pneg %p105
        $region18: #{decoder_layer.5} parent=11 // pred_check_branch
          %252 = sbr.rel (%p250) target = $region20
        $region19: #{decoder_layer.5} parent=11 // pred_region
          _
        $region20: #{decoder_layer.5} parent=11 // pred_fallthru
          _
        // Predicated region
        $region21: #{decoder_layer.5} parent=11 // pred_check
          %p253 = pneg %p204
        $region22: #{decoder_layer.5} parent=11 // pred_check_branch
          %255 = sbr.rel (%p253) target = $region24
        $region23: #{decoder_layer.5} parent=11 // pred_region
          _
        $region24: #{decoder_layer.5} parent=11 // pred_fallthru
          _
      $region12: #{decoder_layer.5} parent=5 // pred_fallthru
        _
      %p256 = scmp.lt.s32.totalorder %s16, 8
      // Predicated region
      $region25: #{decoder_layer.5} parent=5 // pred_check
        %p257 = pneg %p256
      $region26: #{decoder_layer.5} parent=5 // pred_check_branch
        %259 = sbr.rel (%p257) target = $region28
      $region27: #{decoder_layer.5} parent=5 // pred_region
        // Predicated region
        $region29: #{decoder_layer.5} parent=27 // pred_check
          %p260 = pneg %p57
        $region30: #{decoder_layer.5} parent=27 // pred_check_branch
          %262 = sbr.rel (%p260) target = $region32
        $region31: #{decoder_layer.5} parent=27 // pred_region
          %p263 = scmp.lt.s32.totalorder %s23, 1
          %s264 = scalar_select %p263, %s23, 1
          %p265 = scmp.lt.s32.totalorder %s24, 0
          %s266 = scalar_select %p265, %s24, 0
          %s267 = sadd.s32 %s266, %s264
          %s268 = smul.addr %s267, 8
          %s269 = scalar_lea.vmem %s0, %s268
        $region32: #{decoder_layer.5} parent=27 // pred_fallthru
          _
        // Predicated region
        $region33: #{decoder_layer.5} parent=27 // pred_check
          %p270 = pneg %p125
        $region34: #{decoder_layer.5} parent=27 // pred_check_branch
          %272 = sbr.rel (%p270) target = $region36
        $region35: #{decoder_layer.5} parent=27 // pred_region
          %s273 = sand.u32 %s115, 1
          %s274 = sand.u32 %s115, 1
          %s275 = smul.addr %s274, 64
          %s276 = scalar_lea.vmem [#allocation4], %s275
          %s277 = smul.u32 4, %s25
          %s278 = smul.addr %s277, 4
          %s279 = scalar_lea.vmem %s3, %s278
          // Predicated region
          $region37: #{decoder_layer.5} parent=35 // pred_check
            _
          $region38: #{decoder_layer.5} parent=35 // pred_check_branch
            %281 = sbr.rel (0) target = $region40
          $region39: #{decoder_layer.5} parent=35 // pred_region
            // Predicated region
            $region41: #{decoder_layer.5} parent=39 // pred_check
              _
            $region42: #{decoder_layer.5} parent=39 // pred_check_branch
              %283 = sbr.rel (0) target = $region44
            $region43: #{decoder_layer.5} parent=39 // pred_region
              loop: start=0, step=1, limit=1
              $region45: #{decoder_layer.5} parent=43 // loop_pre_header
                _
              $region46: #{decoder_layer.5} parent=43 // loop_header
                %s285 = sphi 0, %s289
                %p286 = scmp.ge.s32.totalorder %s285, 1
                %s290 = sphi %s279, %s279
                %s291 = sphi %s276, %s276
              $region47: #{decoder_layer.5} parent=43 // loop_header_branch
                %288 = sbr.rel (%p286) target = $region51
              $region48: #{decoder_layer.5} parent=43 // loop_body
                %v292 = vld [vmem:[%s290] sm:$0xff]
                %293 = vst [vmem:[%s291] sm:$0xff] %v292
                %v294 = vld [vmem:[%s290 + $0x8] sm:$0xff]
                %295 = vst [vmem:[%s291 + $0x8] sm:$0xff] %v294
                %v296 = vld [vmem:[%s290 + $0x40] sm:$0xff]
                %297 = vst [vmem:[%s291 + $0x10] sm:$0xff] %v296
                %v298 = vld [vmem:[%s290 + $0x48] sm:$0xff]
                %299 = vst [vmem:[%s291 + $0x18] sm:$0xff] %v298
                %v300 = vld [vmem:[%s290 + $0x80] sm:$0xff]
                %301 = vst [vmem:[%s291 + $0x20] sm:$0xff] %v300
                %v302 = vld [vmem:[%s290 + $0x88] sm:$0xff]
                %303 = vst [vmem:[%s291 + $0x28] sm:$0xff] %v302
                %v304 = vld [vmem:[%s290 + $0xc0] sm:$0xff]
                %305 = vst [vmem:[%s291 + $0x30] sm:$0xff] %v304
                %v306 = vld [vmem:[%s290 + $0xc8] sm:$0xff]
                %307 = vst [vmem:[%s291 + $0x38] sm:$0xff] %v306
              $region49: #{decoder_layer.5} parent=43 // loop_footer
                %s289 = sadd.s32 1, %s285
              $region50: #{decoder_layer.5} parent=43 // loop_footer_branch
                %284 = sbr.rel target = $region46
              $region51: #{decoder_layer.5} parent=43 // loop_exit
                _
            $region44: #{decoder_layer.5} parent=39 // pred_fallthru
              _
            // Predicated region
            $region52: #{decoder_layer.5} parent=39 // pred_check
              _
            $region53: #{decoder_layer.5} parent=39 // pred_check_branch
              %309 = sbr.rel target = $region55
            $region54: #{decoder_layer.5} parent=39 // pred_region
              _
            $region55: #{decoder_layer.5} parent=39 // pred_fallthru
              _
          $region40: #{decoder_layer.5} parent=35 // pred_fallthru
            _
          %310 = vnop
        $region36: #{decoder_layer.5} parent=27 // pred_fallthru
          _
        // Predicated region
        $region56: #{decoder_layer.5} parent=27 // pred_check
          %p311 = pneg %p151
        $region57: #{decoder_layer.5} parent=27 // pred_check_branch
          %313 = sbr.rel (%p311) target = $region59
        $region58: #{decoder_layer.5} parent=27 // pred_region
          %s314 = smul.u32 4, %s25
          %p315 = scmp.lt.s32.totalorder %s314, 15
          %s316 = scalar_select %p315, %s314, 15
          %s317 = scalar_lea.vmem %s4, %s316
          %s318 = smul.u32 4, %s25
        $region59: #{decoder_layer.5} parent=27 // pred_fallthru
          _
        // Predicated region
        $region60: #{decoder_layer.5} parent=27 // pred_check
          %p319 = pneg %p177
        $region61: #{decoder_layer.5} parent=27 // pred_check_branch
          %321 = sbr.rel (%p319) target = $region63
        $region62: #{decoder_layer.5} parent=27 // pred_region
          %s322 = smul.u32 64, %s25
          %p323 = scmp.lt.s32.totalorder %s322, 255
          %s324 = scalar_select %p323, %s322, 255
          %s325 = smul.addr %s324, 4
          %s326 = scalar_lea.vmem %s5, %s325
          %s327 = smul.u32 64, %s25
        $region63: #{decoder_layer.5} parent=27 // pred_fallthru
          _
      $region28: #{decoder_layer.5} parent=5 // pred_fallthru
        _
      %p328 = scmp.le.s32.totalorder 1, %s16
      %p329 = scmp.lt.s32.totalorder %s16, 9
      %p330 = pnand %p328, %p329
      %p331 = pneg %p330
      // Predicated region
      $region64: #{decoder_layer.5} parent=5 // pred_check
        _
      $region65: #{decoder_layer.5} parent=5 // pred_check_branch
        %333 = sbr.rel (%p330) target = $region67
      $region66: #{decoder_layer.5} parent=5 // pred_region
        %s334 = ssub.s32 %s16, 1
        %s335 = sand.u32 %s118, 1
        %s336 = sand.u32 %s118, 1
        %s337 = smul.addr %s336, 64
        %s338 = scalar_lea.vmem [#allocation4], %s337
        // Predicated region
        $region68: #{decoder_layer.5} parent=66 // pred_check
          %p339 = pneg %p131
        $region69: #{decoder_layer.5} parent=66 // pred_check_branch
          %341 = sbr.rel (%p339) target = $region71
        $region70: #{decoder_layer.5} parent=66 // pred_region
          _
        $region71: #{decoder_layer.5} parent=66 // pred_fallthru
          _
        %p342 = scmp.lt.s32.totalorder %s26, 1
        %s343 = scalar_select %p342, %s26, 1
        %p344 = scmp.lt.s32.totalorder %s27, 0
        %s345 = scalar_select %p344, %s27, 0
        %s346 = sadd.s32 %s345, %s343
        %s347 = smul.addr %s346, 8
        %s348 = scalar_lea.vmem %s0, %s347
        %p349 = pneg %p63
        %p350 = pneg %p60
        %p351 = pneg %p84
        %p352 = pneg %p81
        %p353 = pneg %p105
        %p354 = pneg %p102
        %s355 = sand.u32 %s118, 1
        %s356 = sand.u32 %s118, 1
        %s357 = smul.addr %s356, 64
        %s358 = scalar_lea.vmem [#allocation4], %s357
        %p359 = pneg %p131
        %p360 = pneg %p128
        %s361 = smul.u32 4, %s28
        %p362 = scmp.lt.s32.totalorder %s361, 15
        %s363 = scalar_select %p362, %s361, 15
        %s364 = scalar_lea.vmem %s4, %s363
        %p365 = pneg %p157
        %p366 = pneg %p154
        %s367 = smul.u32 64, %s28
        %p368 = scmp.lt.s32.totalorder %s367, 255
        %s369 = scalar_select %p368, %s367, 255
        %s370 = smul.addr %s369, 4
        %s371 = scalar_lea.vmem %s5, %s370
        %p372 = pneg %p183
        %p373 = pneg %p180
        %p374 = pneg %p204
        %p375 = pneg %p201
        %p376 = pneg %p232
        %p377 = pneg %p229
        %s378 = sand.u32 %s219, 1
        %s379 = scalar_lea.sflag [#allocation6], %s378
        %s380 = sand.u32 %s219, 1
        %s381 = smul.addr %s380, 8
        %s382 = scalar_lea.vmem [#allocation5], %s381
        %p383 = scmp.lt.s32.totalorder %s26, 1
        %s384 = scalar_select %p383, %s26, 1
        %p385 = scmp.lt.s32.totalorder %s27, 0
        %s386 = scalar_select %p385, %s27, 0
        %s387 = sadd.s32 %s386, %s384
        %s388 = smul.addr %s387, 8
        %s389 = scalar_lea.vmem %s0, %s388
        %s390 = smul.u32 4, %s28
        %s391 = smul.u32 4, %s28
        %p392 = scmp.lt.s32.totalorder %s391, 15
        %s393 = scalar_select %p392, %s391, 15
        %s394 = scalar_lea.vmem %s4, %s393
        %s395 = smul.u32 4, %s28
        %s396 = smul.u32 64, %s28
        %p397 = scmp.lt.s32.totalorder %s396, 255
        %s398 = scalar_select %p397, %s396, 255
        %s399 = smul.addr %s398, 4
        %s400 = scalar_lea.vmem %s5, %s399
        %s401 = smul.u32 64, %s28
        %p403 = scmp.eq.s32.totalorder %s28, 0
        // Predicated region
        $region72: #{decoder_layer.5} parent=66 // pred_check
          %p404 = pneg %p403
        $region73: #{decoder_layer.5} parent=66 // pred_check_branch
          %406 = sbr.rel (%p404) target = $region75
        $region74: #{decoder_layer.5} parent=66 // pred_region
          %vm407 = vcmask 261120
          %408 = vst.msk [vmem:[#allocation2] sm:$0xff] %vm407, 0.0
          %v409 = vld [vmem:[%s389] sm:$0xff]
          %v410 = vld [vmem:[%s1] sm:$0x1]
          %v411 = vld [vmem:[%s2] sm:$0x1]
          %v412 = vsel %vm407, %v409, 0.0
          %413 = vadd.xlane.f32.xlu0 %v412
          %v414 = vpop.xlane.xlu0 %413
          %v415 = vrcp.pop 32.0
          %v416 = vmul.f32 %v414, %v415
          %v417 = vsub.f32 %v409, %v416
          %v418 = vmul.f32 %v417, %v417
          %v419 = vsel %vm407, %v418, 0.0
          %420 = vadd.xlane.f32.xlu0 %v419
          %v421 = vpop.xlane.xlu0 %420
          %v422 = vrcp.pop 31.0
          %v423 = vmul.f32 %v421, %v422
          %v424 = vrsqrt.pop %v423
          %v425 = vmul.f32 %v423, %v424
          %vm426 = vcmp.eq.f32.partialorder %v423, inf
          %v427 = vsel %vm426, %v423, %v425
          %vm428 = vcmp.eq.f32.partialorder %v423, 0.0
          %v429 = vand.u32 %v423, 2147483648
          %v430 = vsel %vm428, %v429, %v427
          %v431 = vadd.f32 %v430, 1e-06
          %v432 = vrcp.pop %v431
          %v433 = vmul.f32 1.0, %v432
          %v435 = vlaneseq
          %v436 = vshrl.u32 %v435, 7
          %v437 = vsub.s32 0, %v436
          %v438 = vrot.slane %v410, %v437
          %v440 = vmul.f32 %v438, %v417
          %v441 = vmul.f32 %v440, %v433
          %v443 = vlaneseq
          %v444 = vshrl.u32 %v443, 7
          %v445 = vsub.s32 0, %v444
          %v446 = vrot.slane %v411, %v445
          %v448 = vadd.f32 %v441, %v446
          %v449 = vpack.c.bf16 %v448, %v448
          %vm450 = vcmask 257024
          %451 = vst.msk [vmem:[#allocation3] sm:$0xf] %vm450, %v449
        $region75: #{decoder_layer.5} parent=66 // pred_fallthru
          _
        %v452 = vld [vmem:[#allocation3] sm:$0xf]
        %v453 = vld [vmem:[%s338] sm:$0xff]
        %v454 = vld [vmem:[%s338 + $0x8] sm:$0xff]
        %v455 = vld [vmem:[%s338 + $0x10] sm:$0xff]
        %v456 = vld [vmem:[%s338 + $0x18] sm:$0xff]
        %v457 = vld [vmem:[%s338 + $0x20] sm:$0xff]
        %v458 = vld [vmem:[%s338 + $0x28] sm:$0xff]
        %v459 = vld [vmem:[%s338 + $0x30] sm:$0xff]
        %v460 = vld [vmem:[%s338 + $0x38] sm:$0xff]
        %v461 = vld [vmem:[%s394] sm:$0xf]
        %v463 = vlaneseq
        %v464 = vshrl.u32 %v463, 7
        %v465 = vsub.s32 0, %v464
        %v466 = vrot.slane %v461, %v465
        %v467 = vlaneseq
        %v468 = vshrl.u32 %v467, 7
        %v469 = vsub.s32 1, %v468
        %v470 = vrot.slane %v461, %v469
        %v471 = vlaneseq
        %v472 = vshrl.u32 %v471, 7
        %v473 = vsub.s32 2, %v472
        %v474 = vrot.slane %v461, %v473
        %v475 = vlaneseq
        %v476 = vshrl.u32 %v475, 7
        %v477 = vsub.s32 3, %v476
        %v478 = vrot.slane %v461, %v477
        %v491 = vunpack.c.l.b16 %v453
        %v492 = vunpack.c.h.b16 %v453
        %v493 = vunpack.c.l.b16 %v454
        %v494 = vunpack.c.h.b16 %v454
        %v495 = vunpack.c.l.b16 %v455
        %v496 = vunpack.c.h.b16 %v455
        %v497 = vunpack.c.l.b16 %v456
        %v498 = vunpack.c.h.b16 %v456
        %v499 = vunpack.c.l.b16 %v457
        %v500 = vunpack.c.h.b16 %v457
        %v501 = vunpack.c.l.b16 %v458
        %v502 = vunpack.c.h.b16 %v458
        %v503 = vunpack.c.l.b16 %v459
        %v504 = vunpack.c.h.b16 %v459
        %v505 = vunpack.c.l.b16 %v460
        %v506 = vunpack.c.h.b16 %v460
        %v507 = vpack.c.b16 %v495, %v491
        %v508 = vpack.c.b16 %v496, %v492
        %v509 = vpack.c.b16 %v497, %v493
        %v510 = vpack.c.b16 %v498, %v494
        %v511 = vpack.c.b16 %v503, %v499
        %v512 = vpack.c.b16 %v504, %v500
        %v513 = vpack.c.b16 %v505, %v501
        %v514 = vpack.c.b16 %v506, %v502
        %vm523 = vcmask 261120
        %v525 = vsel %vm523, %v452, 0
        %527 = vmatprep.subr.bf16.mxu0 0
        %528 = vmatpush1.bf16.msra.mxu0 0
        %529 = vmatprep.subr.bf16.mxu0 0
        %530 = vmatpush1.bf16.msra.mxu0 0
        %531 = vmatprep.subr.bf16.mxu0 0
        %532 = vmatpush1.bf16.msra.mxu0 0
        %533 = vmatprep.subr.bf16.mxu0 0
        %534 = vmatpush1.bf16.msra.mxu0 0
        %535 = vmatprep.subr.bf16.mxu0 0
        %536 = vmatpush1.bf16.msra.mxu0 0
        %537 = vmatprep.subr.bf16.mxu0 0
        %538 = vmatpush1.bf16.msra.mxu0 0
        %539 = vmatprep.subr.bf16.mxu0 %v512
        %540 = vmatpush1.bf16.msra.mxu0 %v511
        %541 = vmatprep.subr.bf16.mxu0 %v508
        %542 = vmatpush1.bf16.msra.mxu0 %v507
        %543 = vmatprep.subr.bf16.mxu0 0
        %544 = vmatpush2.bf16.msra.mxu0 0
        %545 = vmatprep.subr.bf16.mxu0 0
        %546 = vmatpush2.bf16.msra.mxu0 0
        %547 = vmatprep.subr.bf16.mxu0 0
        %548 = vmatpush2.bf16.msra.mxu0 0
        %549 = vmatprep.subr.bf16.mxu0 0
        %550 = vmatpush2.bf16.msra.mxu0 0
        %551 = vmatprep.subr.bf16.mxu0 0
        %552 = vmatpush2.bf16.msra.mxu0 0
        %553 = vmatprep.subr.bf16.mxu0 0
        %554 = vmatpush2.bf16.msra.mxu0 0
        %555 = vmatprep.subr.bf16.mxu0 0
        %556 = vmatpush2.bf16.msra.mxu0 0
        %557 = vmatprep.subr.bf16.mxu0 0
        %558 = vmatpush2.bf16.msra.mxu0 0
        %559 = vmatprep.mubr.bf16.mxu0 0
        %560 = vmatmul.mubr.bf16.gmra.mxu0 %v525
        %v561 = vpop.f32.mrf.mxu0
        %v562 = vadd.f32 %v466, %v561
        %v563 = vpop.f32.mrf.mxu0
        %v564 = vadd.f32 %v470, %v563
        %v565 = vpop.f32.mrf.mxu0
        %v566 = vpop.f32.mrf.mxu0
        %567 = vdwg.mxu0
        %568 = vmatprep.subr.bf16.mxu0 0
        %569 = vmatpush1.bf16.msra.mxu0 0
        %570 = vmatprep.subr.bf16.mxu0 0
        %571 = vmatpush1.bf16.msra.mxu0 0
        %572 = vmatprep.subr.bf16.mxu0 0
        %573 = vmatpush1.bf16.msra.mxu0 0
        %574 = vmatprep.subr.bf16.mxu0 0
        %575 = vmatpush1.bf16.msra.mxu0 0
        %576 = vmatprep.subr.bf16.mxu0 0
        %577 = vmatpush1.bf16.msra.mxu0 0
        %578 = vmatprep.subr.bf16.mxu0 0
        %579 = vmatpush1.bf16.msra.mxu0 0
        %580 = vmatprep.subr.bf16.mxu0 %v514
        %581 = vmatpush1.bf16.msra.mxu0 %v513
        %582 = vmatprep.subr.bf16.mxu0 %v510
        %583 = vmatpush1.bf16.msra.mxu0 %v509
        %584 = vmatprep.subr.bf16.mxu0 0
        %585 = vmatpush2.bf16.msra.mxu0 0
        %586 = vmatprep.subr.bf16.mxu0 0
        %587 = vmatpush2.bf16.msra.mxu0 0
        %588 = vmatprep.subr.bf16.mxu0 0
        %589 = vmatpush2.bf16.msra.mxu0 0
        %590 = vmatprep.subr.bf16.mxu0 0
        %591 = vmatpush2.bf16.msra.mxu0 0
        %592 = vmatprep.subr.bf16.mxu0 0
        %593 = vmatpush2.bf16.msra.mxu0 0
        %594 = vmatprep.subr.bf16.mxu0 0
        %595 = vmatpush2.bf16.msra.mxu0 0
        %596 = vmatprep.subr.bf16.mxu0 0
        %597 = vmatpush2.bf16.msra.mxu0 0
        %598 = vmatprep.subr.bf16.mxu0 0
        %599 = vmatpush2.bf16.msra.mxu0 0
        %600 = vmatprep.mubr.bf16.mxu0 0
        %601 = vmatmul.mubr.bf16.gmra.mxu0 %v525
        %v602 = vpop.f32.mrf.mxu0
        %v603 = vadd.f32 %v474, %v602
        %v604 = vpop.f32.mrf.mxu0
        %v605 = vadd.f32 %v478, %v604
        %v606 = vpop.f32.mrf.mxu0
        %v607 = vpop.f32.mrf.mxu0
        %608 = vdwg.mxu0
        %v609 = vmax.f32 %v562, 0.0
        %v610 = vmax.f32 %v564, 0.0
        %v611 = vmax.f32 %v603, 0.0
        %v612 = vmax.f32 %v605, 0.0
        %v613 = vpack.c.bf16 %v609, %v609
        %v614 = vpack.c.bf16 %v610, %v610
        %v615 = vpack.c.bf16 %v611, %v611
        %v616 = vpack.c.bf16 %v612, %v612
        %v617 = vld [vmem:[#allocation2] sm:$0xff]
        %v618 = vld [vmem:[%s400] sm:$0xf]
        %v619 = vld [vmem:[%s400 + $0x4] sm:$0xf]
        %v620 = vld [vmem:[%s400 + $0x8] sm:$0xf]
        %v621 = vld [vmem:[%s400 + $0xc] sm:$0xf]
        %v622 = vld [vmem:[%s400 + $0x10] sm:$0xf]
        %v623 = vld [vmem:[%s400 + $0x14] sm:$0xf]
        %v624 = vld [vmem:[%s400 + $0x18] sm:$0xf]
        %v625 = vld [vmem:[%s400 + $0x1c] sm:$0xf]
        %v626 = vld [vmem:[%s400 + $0x20] sm:$0xf]
        %v627 = vld [vmem:[%s400 + $0x24] sm:$0xf]
        %v628 = vld [vmem:[%s400 + $0x28] sm:$0xf]
        %v629 = vld [vmem:[%s400 + $0x2c] sm:$0xf]
        %v630 = vld [vmem:[%s400 + $0x30] sm:$0xf]
        %v631 = vld [vmem:[%s400 + $0x34] sm:$0xf]
        %v632 = vld [vmem:[%s400 + $0x38] sm:$0xf]
        %v633 = vld [vmem:[%s400 + $0x3c] sm:$0xf]
        %v634 = vld [vmem:[%s400 + $0x40] sm:$0xf]
        %v635 = vld [vmem:[%s400 + $0x44] sm:$0xf]
        %v636 = vld [vmem:[%s400 + $0x48] sm:$0xf]
        %v637 = vld [vmem:[%s400 + $0x4c] sm:$0xf]
        %v638 = vld [vmem:[%s400 + $0x50] sm:$0xf]
        %v639 = vld [vmem:[%s400 + $0x54] sm:$0xf]
        %v640 = vld [vmem:[%s400 + $0x58] sm:$0xf]
        %v641 = vld [vmem:[%s400 + $0x5c] sm:$0xf]
        %v642 = vld [vmem:[%s400 + $0x60] sm:$0xf]
        %v643 = vld [vmem:[%s400 + $0x64] sm:$0xf]
        %v644 = vld [vmem:[%s400 + $0x68] sm:$0xf]
        %v645 = vld [vmem:[%s400 + $0x6c] sm:$0xf]
        %v646 = vld [vmem:[%s400 + $0x70] sm:$0xf]
        %v647 = vld [vmem:[%s400 + $0x74] sm:$0xf]
        %v648 = vld [vmem:[%s400 + $0x78] sm:$0xf]
        %v649 = vld [vmem:[%s400 + $0x7c] sm:$0xf]
        %v650 = vld [vmem:[%s400 + $0x80] sm:$0xf]
        %v651 = vld [vmem:[%s400 + $0x84] sm:$0xf]
        %v652 = vld [vmem:[%s400 + $0x88] sm:$0xf]
        %v653 = vld [vmem:[%s400 + $0x8c] sm:$0xf]
        %v654 = vld [vmem:[%s400 + $0x90] sm:$0xf]
        %v655 = vld [vmem:[%s400 + $0x94] sm:$0xf]
        %v656 = vld [vmem:[%s400 + $0x98] sm:$0xf]
        %v657 = vld [vmem:[%s400 + $0x9c] sm:$0xf]
        %v658 = vld [vmem:[%s400 + $0xa0] sm:$0xf]
        %v659 = vld [vmem:[%s400 + $0xa4] sm:$0xf]
        %v660 = vld [vmem:[%s400 + $0xa8] sm:$0xf]
        %v661 = vld [vmem:[%s400 + $0xac] sm:$0xf]
        %v662 = vld [vmem:[%s400 + $0xb0] sm:$0xf]
        %v663 = vld [vmem:[%s400 + $0xb4] sm:$0xf]
        %v664 = vld [vmem:[%s400 + $0xb8] sm:$0xf]
        %v665 = vld [vmem:[%s400 + $0xbc] sm:$0xf]
        %v666 = vld [vmem:[%s400 + $0xc0] sm:$0xf]
        %v667 = vld [vmem:[%s400 + $0xc4] sm:$0xf]
        %v668 = vld [vmem:[%s400 + $0xc8] sm:$0xf]
        %v669 = vld [vmem:[%s400 + $0xcc] sm:$0xf]
        %v670 = vld [vmem:[%s400 + $0xd0] sm:$0xf]
        %v671 = vld [vmem:[%s400 + $0xd4] sm:$0xf]
        %v672 = vld [vmem:[%s400 + $0xd8] sm:$0xf]
        %v673 = vld [vmem:[%s400 + $0xdc] sm:$0xf]
        %v674 = vld [vmem:[%s400 + $0xe0] sm:$0xf]
        %v675 = vld [vmem:[%s400 + $0xe4] sm:$0xf]
        %v676 = vld [vmem:[%s400 + $0xe8] sm:$0xf]
        %v677 = vld [vmem:[%s400 + $0xec] sm:$0xf]
        %v678 = vld [vmem:[%s400 + $0xf0] sm:$0xf]
        %v679 = vld [vmem:[%s400 + $0xf4] sm:$0xf]
        %v680 = vld [vmem:[%s400 + $0xf8] sm:$0xf]
        %v681 = vld [vmem:[%s400 + $0xfc] sm:$0xf]
        %v746 = vunpack.c.l.b16 %v618
        %v747 = vunpack.c.l.b16 %v619
        %v748 = vunpack.c.l.b16 %v620
        %v749 = vunpack.c.l.b16 %v621
        %v750 = vunpack.c.l.b16 %v622
        %v751 = vunpack.c.l.b16 %v623
        %v752 = vunpack.c.l.b16 %v624
        %v753 = vunpack.c.l.b16 %v625
        %v754 = vunpack.c.l.b16 %v626
        %v755 = vunpack.c.l.b16 %v627
        %v756 = vunpack.c.l.b16 %v628
        %v757 = vunpack.c.l.b16 %v629
        %v758 = vunpack.c.l.b16 %v630
        %v759 = vunpack.c.l.b16 %v631
        %v760 = vunpack.c.l.b16 %v632
        %v761 = vunpack.c.l.b16 %v633
        %v762 = vunpack.c.l.b16 %v634
        %v763 = vunpack.c.l.b16 %v635
        %v764 = vunpack.c.l.b16 %v636
        %v765 = vunpack.c.l.b16 %v637
        %v766 = vunpack.c.l.b16 %v638
        %v767 = vunpack.c.l.b16 %v639
        %v768 = vunpack.c.l.b16 %v640
        %v769 = vunpack.c.l.b16 %v641
        %v770 = vunpack.c.l.b16 %v642
        %v771 = vunpack.c.l.b16 %v643
        %v772 = vunpack.c.l.b16 %v644
        %v773 = vunpack.c.l.b16 %v645
        %v774 = vunpack.c.l.b16 %v646
        %v775 = vunpack.c.l.b16 %v647
        %v776 = vunpack.c.l.b16 %v648
        %v777 = vunpack.c.l.b16 %v649
        %v778 = vunpack.c.l.b16 %v650
        %v779 = vunpack.c.l.b16 %v651
        %v780 = vunpack.c.l.b16 %v652
        %v781 = vunpack.c.l.b16 %v653
        %v782 = vunpack.c.l.b16 %v654
        %v783 = vunpack.c.l.b16 %v655
        %v784 = vunpack.c.l.b16 %v656
        %v785 = vunpack.c.l.b16 %v657
        %v786 = vunpack.c.l.b16 %v658
        %v787 = vunpack.c.l.b16 %v659
        %v788 = vunpack.c.l.b16 %v660
        %v789 = vunpack.c.l.b16 %v661
        %v790 = vunpack.c.l.b16 %v662
        %v791 = vunpack.c.l.b16 %v663
        %v792 = vunpack.c.l.b16 %v664
        %v793 = vunpack.c.l.b16 %v665
        %v794 = vunpack.c.l.b16 %v666
        %v795 = vunpack.c.l.b16 %v667
        %v796 = vunpack.c.l.b16 %v668
        %v797 = vunpack.c.l.b16 %v669
        %v798 = vunpack.c.l.b16 %v670
        %v799 = vunpack.c.l.b16 %v671
        %v800 = vunpack.c.l.b16 %v672
        %v801 = vunpack.c.l.b16 %v673
        %v802 = vunpack.c.l.b16 %v674
        %v803 = vunpack.c.l.b16 %v675
        %v804 = vunpack.c.l.b16 %v676
        %v805 = vunpack.c.l.b16 %v677
        %v806 = vunpack.c.l.b16 %v678
        %v807 = vunpack.c.l.b16 %v679
        %v808 = vunpack.c.l.b16 %v680
        %v809 = vunpack.c.l.b16 %v681
        %v810 = vpack.c.b16 %v747, %v746
        %v811 = vpack.c.b16 %v749, %v748
        %v812 = vpack.c.b16 %v751, %v750
        %v813 = vpack.c.b16 %v753, %v752
        %v814 = vpack.c.b16 %v755, %v754
        %v815 = vpack.c.b16 %v757, %v756
        %v816 = vpack.c.b16 %v759, %v758
        %v817 = vpack.c.b16 %v761, %v760
        %v818 = vpack.c.b16 %v763, %v762
        %v819 = vpack.c.b16 %v765, %v764
        %v820 = vpack.c.b16 %v767, %v766
        %v821 = vpack.c.b16 %v769, %v768
        %v822 = vpack.c.b16 %v771, %v770
        %v823 = vpack.c.b16 %v773, %v772
        %v824 = vpack.c.b16 %v775, %v774
        %v825 = vpack.c.b16 %v777, %v776
        %v826 = vpack.c.b16 %v779, %v778
        %v827 = vpack.c.b16 %v781, %v780
        %v828 = vpack.c.b16 %v783, %v782
        %v829 = vpack.c.b16 %v785, %v784
        %v830 = vpack.c.b16 %v787, %v786
        %v831 = vpack.c.b16 %v789, %v788
        %v832 = vpack.c.b16 %v791, %v790
        %v833 = vpack.c.b16 %v793, %v792
        %v834 = vpack.c.b16 %v795, %v794
        %v835 = vpack.c.b16 %v797, %v796
        %v836 = vpack.c.b16 %v799, %v798
        %v837 = vpack.c.b16 %v801, %v800
        %v838 = vpack.c.b16 %v803, %v802
        %v839 = vpack.c.b16 %v805, %v804
        %v840 = vpack.c.b16 %v807, %v806
        %v841 = vpack.c.b16 %v809, %v808
        %874 = vmatprep.subr.bf16.mxu0 0
        %875 = vmatpush1.bf16.msra.mxu0 %v817
        %876 = vmatprep.subr.bf16.mxu0 0
        %877 = vmatpush1.bf16.msra.mxu0 %v816
        %878 = vmatprep.subr.bf16.mxu0 0
        %879 = vmatpush1.bf16.msra.mxu0 %v815
        %880 = vmatprep.subr.bf16.mxu0 0
        %881 = vmatpush1.bf16.msra.mxu0 %v814
        %882 = vmatprep.subr.bf16.mxu0 0
        %883 = vmatpush1.bf16.msra.mxu0 %v813
        %884 = vmatprep.subr.bf16.mxu0 0
        %885 = vmatpush1.bf16.msra.mxu0 %v812
        %886 = vmatprep.subr.bf16.mxu0 0
        %887 = vmatpush1.bf16.msra.mxu0 %v811
        %888 = vmatprep.subr.bf16.mxu0 0
        %889 = vmatpush1.bf16.msra.mxu0 %v810
        %890 = vmatprep.subr.bf16.mxu0 0
        %891 = vmatpush2.bf16.msra.mxu0 %v825
        %892 = vmatprep.subr.bf16.mxu0 0
        %893 = vmatpush2.bf16.msra.mxu0 %v824
        %894 = vmatprep.subr.bf16.mxu0 0
        %895 = vmatpush2.bf16.msra.mxu0 %v823
        %896 = vmatprep.subr.bf16.mxu0 0
        %897 = vmatpush2.bf16.msra.mxu0 %v822
        %898 = vmatprep.subr.bf16.mxu0 0
        %899 = vmatpush2.bf16.msra.mxu0 %v821
        %900 = vmatprep.subr.bf16.mxu0 0
        %901 = vmatpush2.bf16.msra.mxu0 %v820
        %902 = vmatprep.subr.bf16.mxu0 0
        %903 = vmatpush2.bf16.msra.mxu0 %v819
        %904 = vmatprep.subr.bf16.mxu0 0
        %905 = vmatpush2.bf16.msra.mxu0 %v818
        %906 = vmatprep.mubr.bf16.mxu0 %v614
        %907 = vmatmul.mubr.bf16.gmra.mxu0 %v613
        %v908 = vpop.f32.mrf.mxu0
        %v909 = vadd.f32 0.0, %v908
        %v910 = vpop.f32.mrf.mxu0
        %v911 = vpop.f32.mrf.mxu0
        %v912 = vpop.f32.mrf.mxu0
        %913 = vdwg.mxu0
        %914 = vmatprep.subr.bf16.mxu0 0
        %915 = vmatpush1.bf16.msra.mxu0 %v833
        %916 = vmatprep.subr.bf16.mxu0 0
        %917 = vmatpush1.bf16.msra.mxu0 %v832
        %918 = vmatprep.subr.bf16.mxu0 0
        %919 = vmatpush1.bf16.msra.mxu0 %v831
        %920 = vmatprep.subr.bf16.mxu0 0
        %921 = vmatpush1.bf16.msra.mxu0 %v830
        %922 = vmatprep.subr.bf16.mxu0 0
        %923 = vmatpush1.bf16.msra.mxu0 %v829
        %924 = vmatprep.subr.bf16.mxu0 0
        %925 = vmatpush1.bf16.msra.mxu0 %v828
        %926 = vmatprep.subr.bf16.mxu0 0
        %927 = vmatpush1.bf16.msra.mxu0 %v827
        %928 = vmatprep.subr.bf16.mxu0 0
        %929 = vmatpush1.bf16.msra.mxu0 %v826
        %930 = vmatprep.subr.bf16.mxu0 0
        %931 = vmatpush2.bf16.msra.mxu0 %v841
        %932 = vmatprep.subr.bf16.mxu0 0
        %933 = vmatpush2.bf16.msra.mxu0 %v840
        %934 = vmatprep.subr.bf16.mxu0 0
        %935 = vmatpush2.bf16.msra.mxu0 %v839
        %936 = vmatprep.subr.bf16.mxu0 0
        %937 = vmatpush2.bf16.msra.mxu0 %v838
        %938 = vmatprep.subr.bf16.mxu0 0
        %939 = vmatpush2.bf16.msra.mxu0 %v837
        %940 = vmatprep.subr.bf16.mxu0 0
        %941 = vmatpush2.bf16.msra.mxu0 %v836
        %942 = vmatprep.subr.bf16.mxu0 0
        %943 = vmatpush2.bf16.msra.mxu0 %v835
        %944 = vmatprep.subr.bf16.mxu0 0
        %945 = vmatpush2.bf16.msra.mxu0 %v834
        %946 = vmatprep.mubr.bf16.mxu0 %v616
        %947 = vmatmul.mubr.bf16.gmra.mxu0 %v615
        %v948 = vpop.f32.mrf.mxu0
        %v949 = vadd.f32 %v909, %v948
        %v950 = vpop.f32.mrf.mxu0
        %v951 = vpop.f32.mrf.mxu0
        %v952 = vpop.f32.mrf.mxu0
        %953 = vdwg.mxu0
        %v954 = vadd.f32 %v617, %v949
        %955 = vst.msk [vmem:[#allocation2] sm:$0xff] %vm523, %v954
        %p956 = scmp.eq.s32.totalorder %s28, 3
        // Predicated region
        $region76: #{decoder_layer.5} parent=66 // pred_check
          %p957 = pneg %p956
        $region77: #{decoder_layer.5} parent=66 // pred_check_branch
          %959 = sbr.rel (%p957) target = $region79
        $region78: #{decoder_layer.5} parent=66 // pred_region
          %v960 = vld [vmem:[%s389] sm:$0xff]
          %v961 = vld [vmem:[#allocation2] sm:$0xff]
          %v962 = vadd.f32 %v960, %v961
          %v963 = vld [vmem:[%s6] sm:$0x1]
          %v965 = vlaneseq
          %v966 = vshrl.u32 %v965, 7
          %v967 = vsub.s32 0, %v966
          %v968 = vrot.slane %v963, %v967
          %v970 = vadd.f32 %v962, %v968
          %971 = vst.msk [vmem:[%s382] sm:$0xff] %vm523, %v970
        $region79: #{decoder_layer.5} parent=66 // pred_fallthru
          _
        %s972 = sand.u32 %s219, 1
        %s973 = scalar_lea.sflag [#allocation6], %s972
        %s974 = sand.u32 %s219, 1
        %s975 = smul.addr %s974, 8
        %s976 = scalar_lea.vmem [#allocation5], %s975
        // Predicated region
        $region80: #{decoder_layer.5} parent=66 // pred_check
          %p977 = pneg %p229
        $region81: #{decoder_layer.5} parent=66 // pred_check_branch
          %979 = sbr.rel (%p977) target = $region83
        $region82: #{decoder_layer.5} parent=66 // pred_region
          %s981 = ssub.s32 128, 128
          %982 = vsyncadd %s973, %s981
          %s983 = sadd.s32 %s27, %s26
          %s984 = smul.addr %s983, 128
          %s985 = scalar_lea.hbm %s7, %s984
          %s987 = sshll.u32 %s976, 4
          %s988 = int_to_ptr.vmem [resolvable:$true] %s987
          %990 = dma.vmem_to_hbm [thread:$0]  %s988, 128, %s985, %s973
        $region83: #{decoder_layer.5} parent=66 // pred_fallthru
          _
      $region67: #{decoder_layer.5} parent=5 // pred_fallthru
        _
      %p991 = scmp.le.s32.totalorder 2, %s16
      // Predicated region
      $region84: #{decoder_layer.5} parent=5 // pred_check
        %p992 = pneg %p991
      $region85: #{decoder_layer.5} parent=5 // pred_check_branch
        %994 = sbr.rel (%p992) target = $region87
      $region86: #{decoder_layer.5} parent=5 // pred_region
        %s995 = ssub.s32 %s16, 2
        // Predicated region
        $region88: #{decoder_layer.5} parent=86 // pred_check
          %p996 = pneg %p235
        $region89: #{decoder_layer.5} parent=86 // pred_check_branch
          %998 = sbr.rel (%p996) target = $region91
        $region90: #{decoder_layer.5} parent=86 // pred_region
          %s999 = sand.u32 %s220, 1
          %s1000 = scalar_lea.sflag [#allocation6], %s999
          %s1001 = sand.u32 %s220, 1
          %s1002 = smul.addr %s1001, 8
          %s1003 = scalar_lea.vmem [#allocation5], %s1002
          %1004 = dma.done %s1000, 128
        $region91: #{decoder_layer.5} parent=86 // pred_fallthru
          _
      $region87: #{decoder_layer.5} parent=5 // pred_fallthru
        _
    $region6: #{decoder_layer.5} parent=1 // loop_footer
      %s20 = sadd.s32 1, %s16
    $region7: #{decoder_layer.5} parent=1 // loop_footer_branch
      %15 = sbr.rel target = $region3
    $region8: #{decoder_layer.5} parent=1 // loop_exit
      _
    %1005 = vsyncpa [#allocation6], 1
    %s1006 = scalar_lea.sflag [#allocation6], 1
    %1007 = vsyncpa %s1006, 1

</llo_original>
